<compile_context>
chip_gen: v7x
topology: tpu7x:2x2x1
jax: 0.10.0
libtpu: 0.0.40
codegen_flags: <defaults>
</compile_context>

<pallas_src>
import functools

import jax
import jax.numpy as jnp
from jax.experimental import pallas as pl
from jax.experimental.pallas import tpu as pltpu


def _pick_tile(n, prefs):
    for t in prefs:
        if n % t == 0:
            return t
    return n


# ----------------------------------------------------------------------------
# Kernel 1: transposed linear   out = W^T @ xT + b   (channel-major, lane-dense)
#           xT: (K, N) tile-sliced along N;  W^T: (M, K);  out: (M, N)
# ----------------------------------------------------------------------------
def _lin_t_kernel_factory(relu):
    def kernel(x_ref, w_ref, b_ref, o_ref):
        y = jnp.dot(w_ref[...], x_ref[...], preferred_element_type=jnp.float32)
        y = y + b_ref[...]
        if relu:
            y = jnp.maximum(y, 0.0)
        o_ref[...] = y.astype(o_ref.dtype)
    return kernel


def linear_t_pallas(xT, w, b, relu=False):
    """xT: (K, N); w: (K, M); b: (M,)  ->  (M, N) = w.T @ xT + b."""
    K, N = xT.shape
    M = w.shape[1]
    # Large tiles (fewer ~0.35us grid steps) but keep >=2 parallel steps for
    # the two TensorCores on v7x when N allows it.
    tile_n = _pick_tile(N, (512, 256, 128))
    wT = jnp.transpose(w).astype(jnp.float32)            # (M, K), tiny
    return pl.pallas_call(
        _lin_t_kernel_factory(relu),
        out_shape=jax.ShapeDtypeStruct((M, N), jnp.float32),
        grid=(N // tile_n,),
        in_specs=[
            pl.BlockSpec((K, tile_n), lambda i: (0, i)),
            pl.BlockSpec((M, K), lambda i: (0, 0)),
            pl.BlockSpec((M, 1), lambda i: (0, 0)),
        ],
        out_specs=pl.BlockSpec((M, tile_n), lambda i: (0, i)),
        compiler_params=pltpu.CompilerParams(dimension_semantics=("parallel",)),
    )(xT.astype(jnp.float32), wT, b.reshape(M, 1).astype(jnp.float32))


# ----------------------------------------------------------------------------
# Kernel 2: fused per-layer  x2 = W^T@h + b ;  s = x1 + x2 ;  BatchNorm(+ReLU)
#           Single grid step: the whole (C, N) activation is VMEM-resident, so
#           the batch statistics, normalization and activation are computed in
#           one pass with no HBM round-trip of s and no accumulation race.
#           (For much larger N this block would need tiling against VMEM,
#            especially on v7x's 64 MiB.)
# ----------------------------------------------------------------------------
def _fused_layer_kernel_factory(relu, eps):
    def kernel(x1_ref, h_ref, w_ref, b_ref, g_ref, beta_ref, o_ref):
        # x1/h/o: (C, N); w: (C_out, C_in); b/g/beta: (C, 1)
        x2 = jnp.dot(w_ref[...], h_ref[...], preferred_element_type=jnp.float32)
        x2 = x2 + b_ref[...]
        s = x1_ref[...] + x2
        n = s.shape[1]
        inv_n = 1.0 / n
        mean = jnp.sum(s, axis=1, keepdims=True) * inv_n               # (C,1)
        var = jnp.sum(s * s, axis=1, keepdims=True) * inv_n - mean * mean
        var = jnp.maximum(var, 0.0)          # guard against cancellation
        inv_std = jax.lax.rsqrt(var + eps)   # EUP rsqrt
        scale = g_ref[...] * inv_std
        shift = beta_ref[...] - mean * scale
        y = s * scale + shift
        if relu:
            y = jnp.maximum(y, 0.0)
        o_ref[...] = y
    return kernel


def fused_conv_add_bn(x1T, hT, w, bias, gamma, beta, relu, eps=1e-5):
    """x1T, hT: (C, N).  Pointwise Conv1d + add + BatchNorm3d(train stats) + ReLU."""
    C, N = hT.shape
    wT = jnp.transpose(w).astype(jnp.float32)            # (C_out, C_in)
    return pl.pallas_call(
        _fused_layer_kernel_factory(relu, eps),
        out_shape=jax.ShapeDtypeStruct((C, N), jnp.float32),
        grid=(1,),
        in_specs=[
            pl.BlockSpec((C, N), lambda i: (0, 0)),
            pl.BlockSpec((C, N), lambda i: (0, 0)),
            pl.BlockSpec((C, C), lambda i: (0, 0)),
            pl.BlockSpec((C, 1), lambda i: (0, 0)),
            pl.BlockSpec((C, 1), lambda i: (0, 0)),
            pl.BlockSpec((C, 1), lambda i: (0, 0)),
        ],
        out_specs=pl.BlockSpec((C, N), lambda i: (0, 0)),
        compiler_params=pltpu.CompilerParams(dimension_semantics=("arbitrary",)),
    )(x1T.astype(jnp.float32), hT.astype(jnp.float32), wT,
      bias.reshape(C, 1).astype(jnp.float32),
      gamma.reshape(C, 1).astype(jnp.float32),
      beta.reshape(C, 1).astype(jnp.float32))


# ----------------------------------------------------------------------------
# Kernel 3: spectral mode mixing for ALL 4 corners & ALL modes in one call.
#           Lane-dense VPU formulation:  out[b,o,l] = sum_i a[b,i,l]*w[i,o,l]
#           (l = mode index over 4*m1*m2*m3 lanes), done separately for the
#           real/imag parts of the complex product.  Avoids 256 tiny MXU
#           matmuls and 256 grid steps of sub-KB DMAs.
# ----------------------------------------------------------------------------
def _cmul_all_modes_kernel(ar_ref, ai_ref, wr_ref, wi_ref, or_ref, oi_ref):
    ar = ar_ref[...]          # (B, I, L)
    ai = ai_ref[...]
    wr = wr_ref[...]          # (I, O, L)
    wi = wi_ref[...]
    B, I, L = ar.shape
    O = wr.shape[1]
    for b in range(B):
        acc_r = jnp.zeros((O, L), jnp.float32)
        acc_i = jnp.zeros((O, L), jnp.float32)
        for i in range(I):
            a_r = ar[b, i:i + 1, :]          # (1, L) -> sublane broadcast
            a_i = ai[b, i:i + 1, :]
            w_r = wr[i]                      # (O, L)
            w_i = wi[i]
            acc_r = acc_r + a_r * w_r - a_i * w_i
            acc_i = acc_i + a_r * w_i + a_i * w_r
        or_ref[b] = acc_r
        oi_ref[b] = acc_i


def cmul_all_modes_pallas(ar, ai, wr, wi):
    """ar/ai: (B, I, L); wr/wi: (I, O, L) -> (real, imag) each (B, O, L)."""
    B, I, L = ar.shape
    O = wr.shape[1]
    return pl.pallas_call(
        _cmul_all_modes_kernel,
        out_shape=(jax.ShapeDtypeStruct((B, O, L), jnp.float32),
                   jax.ShapeDtypeStruct((B, O, L), jnp.float32)),
        grid=(1,),
        in_specs=[
            pl.BlockSpec((B, I, L), lambda i: (0, 0, 0)),
            pl.BlockSpec((B, I, L), lambda i: (0, 0, 0)),
            pl.BlockSpec((I, O, L), lambda i: (0, 0, 0)),
            pl.BlockSpec((I, O, L), lambda i: (0, 0, 0)),
        ],
        out_specs=(pl.BlockSpec((B, O, L), lambda i: (0, 0, 0)),
                   pl.BlockSpec((B, O, L), lambda i: (0, 0, 0))),
        compiler_params=pltpu.CompilerParams(dimension_semantics=("arbitrary",)),
    )(ar.astype(jnp.float32), ai.astype(jnp.float32),
      wr.astype(jnp.float32), wi.astype(jnp.float32))


# ----------------------------------------------------------------------------
# SpectralConv3d_fast, channel-major (C, b, x, y, z) end-to-end (no transposes
# of the full activation; only tiny mode-corner arrays get reshuffled).
# ----------------------------------------------------------------------------
def spectral_conv3d_cm(hT, w1, w2, w3, w4, b, sx, sy, sz, m1, m2, m3):
    """hT: (C, N) float32 -> (C, N) float32 (N = b*sx*sy*sz)."""
    C = hT.shape[0]
    x5 = hT.reshape(C, b, sx, sy, sz)
    # TODO(synk): FFT/IFFT have no Pallas primitive; done via XLA (norm='ortho'
    # matches old torch.rfft/irfft with normalized=True, onesided=True).
    x_ft = jnp.fft.rfftn(x5, axes=(2, 3, 4), norm="ortho")     # (C,b,sx,sy,zf)
    zf = sz // 2 + 1
    M = m1 * m2 * m3
    L = 4 * M

    corners = [
        x_ft[:, :, :m1, :m2, :m3],
        x_ft[:, :, -m1:, :m2, :m3],
        x_ft[:, :, :m1, -m2:, :m3],
        x_ft[:, :, -m1:, -m2:, :m3],
    ]
    a = jnp.stack(corners, axis=2)                    # (C, b, 4, m1, m2, m3)
    a = a.transpose(1, 0, 2, 3, 4, 5).reshape(b, C, L)          # (B, I, L)

    ws = jnp.stack([w1, w2, w3, w4], axis=2)          # (I, O, 4, m1, m2, m3, 2)
    wr = ws[..., 0].reshape(C, C, L)
    wi = ws[..., 1].reshape(C, C, L)

    out_r, out_i = cmul_all_modes_pallas(jnp.real(a), jnp.imag(a), wr, wi)
    out = (out_r + 1j * out_i).reshape(b, C, 4, m1, m2, m3)

    out_ft = jnp.zeros((C, b, sx, sy, zf), dtype=x_ft.dtype)
    out_ft = out_ft.at[:, :, :m1, :m2, :m3].set(out[:, :, 0].transpose(1, 0, 2, 3, 4))
    out_ft = out_ft.at[:, :, -m1:, :m2, :m3].set(out[:, :, 1].transpose(1, 0, 2, 3, 4))
    out_ft = out_ft.at[:, :, :m1, -m2:, :m3].set(out[:, :, 2].transpose(1, 0, 2, 3, 4))
    out_ft = out_ft.at[:, :, -m1:, -m2:, :m3].set(out[:, :, 3].transpose(1, 0, 2, 3, 4))

    x1 = jnp.fft.irfftn(out_ft, s=(sx, sy, sz), axes=(2, 3, 4), norm="ortho")
    return x1.reshape(C, b * sx * sy * sz)


# ----------------------------------------------------------------------------
# Kernel 4: fused head  fc1(16->128)+ReLU+fc2(128->1), lane-dense (1, N) output.
# ----------------------------------------------------------------------------
def _head_kernel(h_ref, w1_ref, b1_ref, w2_ref, b2_ref, o_ref):
    t = jnp.dot(w1_ref[...], h_ref[...], preferred_element_type=jnp.float32)
    t = jnp.maximum(t + b1_ref[...], 0.0)                       # (128, tile)
    y = jnp.dot(w2_ref[...], t, preferred_element_type=jnp.float32)
    o_ref[...] = y + b2_ref[...]                                # (1, tile)


def head_pallas(hT, w1, b1, w2, b2):
    """hT: (C, N); w1: (C, H); w2: (H, 1) -> (1, N)."""
    C, N = hT.shape
    H = w1.shape[1]
    tile_n = _pick_tile(N, (256, 128))     # >=2 parallel steps for v7x megacore
    return pl.pallas_call(
        _head_kernel,
        out_shape=jax.ShapeDtypeStruct((1, N), jnp.float32),
        grid=(N // tile_n,),
        in_specs=[
            pl.BlockSpec((C, tile_n), lambda i: (0, i)),
            pl.BlockSpec((H, C), lambda i: (0, 0)),
            pl.BlockSpec((H, 1), lambda i: (0, 0)),
            pl.BlockSpec((1, H), lambda i: (0, 0)),
            pl.BlockSpec((1, 1), lambda i: (0, 0)),
        ],
        out_specs=pl.BlockSpec((1, tile_n), lambda i: (0, i)),
        compiler_params=pltpu.CompilerParams(dimension_semantics=("parallel",)),
    )(hT.astype(jnp.float32),
      jnp.transpose(w1).astype(jnp.float32), b1.reshape(H, 1).astype(jnp.float32),
      jnp.transpose(w2).astype(jnp.float32), b2.reshape(1, 1).astype(jnp.float32))


# ----------------------------------------------------------------------------
# SimpleBlock2d forward
# ----------------------------------------------------------------------------
def simple_block2d_forward(x, params, modes1, modes2, modes3, width):
    b, sx, sy, sz, in_ch = x.shape
    N = b * sx * sy * sz
    C = width

    # One tiny transpose to enter the channel-major layout; everything after
    # stays (C, N) / (C, b, x, y, z) until the final (1, N) output.
    xT = x.reshape(N, in_ch).T.astype(jnp.float32)               # (13, N)

    # fc0: Linear(13 -> width), applied per grid point.
    hT = linear_t_pallas(xT, params["fc0_w"], params["fc0_b"])   # (C, N)

    for i in range(4):
        w1, w2, w3, w4 = params[f"spec{i}"]
        x1T = spectral_conv3d_cm(hT, w1, w2, w3, w4, b, sx, sy, sz,
                                 modes1, modes2, modes3)         # (C, N)
        # Pointwise Conv1d + residual add + BatchNorm3d (training-mode batch
        # statistics, biased var) + ReLU (after bn0/bn1/bn2 only), all fused.
        hT = fused_conv_add_bn(x1T, hT,
                               params[f"w{i}_w"], params[f"w{i}_b"],
                               params[f"bn{i}_gamma"], params[f"bn{i}_beta"],
                               relu=(i < 3))

    out = head_pallas(hT, params["fc1_w"], params["fc1_b"],
                      params["fc2_w"], params["fc2_b"])          # (1, N)
    return out[0].reshape(b, sx, sy, sz, 1)


# ----------------------------------------------------------------------------
# Deterministic parameter init (weights stored as (in_features, out_features))
# ----------------------------------------------------------------------------
def init_params(key, width, m1, m2, m3):
    ks = jax.random.split(key, 32)
    p = {}

    def u(k, shape, scale=0.1):
        return scale * jax.random.uniform(k, shape, dtype=jnp.float32,
                                          minval=-1.0, maxval=1.0)

    p["fc0_w"] = u(ks[0], (13, width))
    p["fc0_b"] = u(ks[1], (width,))

    spec_scale = 1.0 / (width * width)
    for i in range(4):
        p[f"spec{i}"] = tuple(
            spec_scale * jax.random.uniform(
                ks[2 + 4 * i + j], (width, width, m1, m2, m3, 2), dtype=jnp.float32)
            for j in range(4)
        )
        p[f"w{i}_w"] = u(ks[18 + 2 * i], (width, width))
        p[f"w{i}_b"] = u(ks[19 + 2 * i], (width,))
        p[f"bn{i}_gamma"] = jnp.ones((width,), jnp.float32)
        p[f"bn{i}_beta"] = jnp.zeros((width,), jnp.float32)

    p["fc1_w"] = u(ks[26], (width, 128))
    p["fc1_b"] = u(ks[27], (128,))
    p["fc2_w"] = u(ks[28], (128, 1))
    p["fc2_b"] = u(ks[29], (1,))
    return p


if __name__ == "__main__":
    MODES1 = MODES2 = MODES3 = 4
    WIDTH = 16
    B, SX, SY, SZ = 2, 8, 8, 8   # N = 2*8*8*8 = 1024

    key = jax.random.PRNGKey(0)
    k_in, k_par = jax.random.split(key)
    x = jax.random.normal(k_in, (B, SX, SY, SZ, 13), dtype=jnp.float32)
    params = init_params(k_par, WIDTH, MODES1, MODES2, MODES3)

    fwd = jax.jit(functools.partial(simple_block2d_forward,
                                    modes1=MODES1, modes2=MODES2, modes3=MODES3,
                                    width=WIDTH))
    out = fwd(x, params)
    out = jax.block_until_ready(out)

    assert out.shape == (B, SX, SY, SZ, 1), out.shape
    assert jnp.all(jnp.isfinite(out))
    print("KERNEL_OK")
</pallas_src>

<mosaic_0001>
module attributes {stable_mosaic.version = 11 : i64} {
  func.func @kernel(%arg0: i32, %arg1: memref<13x512xf32, #tpu.memory_space<vmem>>, %arg2: memref<16x13xf32, #tpu.memory_space<vmem>>, %arg3: memref<16x1xf32, #tpu.memory_space<vmem>>, %arg4: memref<16x512xf32, #tpu.memory_space<vmem>>) attributes {dimension_semantics = [#tpu.dimension_semantics<parallel>], iteration_bounds = array<i64: 2>, scalar_prefetch = 0 : i64, scratch_operands = 0 : i64, tpu.core_type = #tpu.core_type<tc>, window_params = [{transform_indices = @transform_0, window_bounds = array<i64: 13, 512>}, {pipeline_mode = #tpu.pipeline_mode<synchronous>, transform_indices = @transform_1, window_bounds = array<i64: 16, 13>}, {pipeline_mode = #tpu.pipeline_mode<synchronous>, transform_indices = @transform_2, window_bounds = array<i64: 16, 1>}, {transform_indices = @transform_3, window_bounds = array<i64: 16, 512>}]} {
    %c0 = arith.constant 0 : index
    %c0_0 = arith.constant 0 : index
    %0 = vector.load %arg2[%c0, %c0_0] : memref<16x13xf32, #tpu.memory_space<vmem>>, vector<16x13xf32>
    %c0_1 = arith.constant 0 : index
    %c0_2 = arith.constant 0 : index
    %1 = vector.load %arg1[%c0_1, %c0_2] : memref<13x512xf32, #tpu.memory_space<vmem>>, vector<13x512xf32>
    %cst = arith.constant dense<0.000000e+00> : vector<16x512xf32>
    %2 = tpu.matmul %0, %1, %cst {dimension_numbers = #tpu.dot_dimension_numbers<[1], [0], [0], [1], [0, 0, 1, 1], [], []>} : vector<16x13xf32>, vector<13x512xf32>, vector<16x512xf32> -> vector<16x512xf32>
    %c0_3 = arith.constant 0 : index
    %c0_4 = arith.constant 0 : index
    %3 = vector.load %arg3[%c0_3, %c0_4] : memref<16x1xf32, #tpu.memory_space<vmem>>, vector<16x1xf32>
    %4 = vector.broadcast %3 : vector<16x1xf32> to vector<16x512xf32>
    %5 = arith.addf %2, %4 : vector<16x512xf32>
    %c0_5 = arith.constant 0 : index
    %c0_6 = arith.constant 0 : index
    %6 = vector.load %arg4[%c0_5, %c0_6] : memref<16x512xf32, #tpu.memory_space<vmem>>, vector<16x512xf32>
    tpu.vector_store %arg4[%c0_5, %c0_6], %5 {strides = array<i32>} : memref<16x512xf32, #tpu.memory_space<vmem>>, vector<16x512xf32>,
    return
  }
  func.func @transform_0(%arg0: i32) -> (i32, i32) {
    %c0_i32 = arith.constant 0 : i32
    %c0_i32_0 = arith.constant 0 : i32
    return %c0_i32, %arg0 : i32, i32
  }
  func.func @transform_1(%arg0: i32) -> (i32, i32) {
    %c0_i32 = arith.constant 0 : i32
    %c0_i32_0 = arith.constant 0 : i32
    %c0_i32_1 = arith.constant 0 : i32
    return %c0_i32, %c0_i32_0 : i32, i32
  }
  func.func @transform_2(%arg0: i32) -> (i32, i32) {
    %c0_i32 = arith.constant 0 : i32
    %c0_i32_0 = arith.constant 0 : i32
    %c0_i32_1 = arith.constant 0 : i32
    return %c0_i32, %c0_i32_0 : i32, i32
  }
  func.func @transform_3(%arg0: i32) -> (i32, i32) {
    %c0_i32 = arith.constant 0 : i32
    %c0_i32_0 = arith.constant 0 : i32
    return %c0_i32, %arg0 : i32, i32
  }
}

module attributes {stable_mosaic.version = 11 : i64} {
  func.func @_cmul_all_modes_kernel(%arg0: i32, %arg1: memref<2x16x256xf32, #tpu.memory_space<vmem>>, %arg2: memref<2x16x256xf32, #tpu.memory_space<vmem>>, %arg3: memref<16x16x256xf32, #tpu.memory_space<vmem>>, %arg4: memref<16x16x256xf32, #tpu.memory_space<vmem>>, %arg5: memref<2x16x256xf32, #tpu.memory_space<vmem>>, %arg6: memref<2x16x256xf32, #tpu.memory_space<vmem>>) attributes {dimension_semantics = [#tpu.dimension_semantics<arbitrary>], iteration_bounds = array<i64: 1>, scalar_prefetch = 0 : i64, scratch_operands = 0 : i64, tpu.core_type = #tpu.core_type<tc>, window_params = [{pipeline_mode = #tpu.pipeline_mode<synchronous>, transform_indices = @transform_0, window_bounds = array<i64: 2, 16, 256>}, {pipeline_mode = #tpu.pipeline_mode<synchronous>, transform_indices = @transform_1, window_bounds = array<i64: 2, 16, 256>}, {pipeline_mode = #tpu.pipeline_mode<synchronous>, transform_indices = @transform_2, window_bounds = array<i64: 16, 16, 256>}, {pipeline_mode = #tpu.pipeline_mode<synchronous>, transform_indices = @transform_3, window_bounds = array<i64: 16, 16, 256>}, {pipeline_mode = #tpu.pipeline_mode<synchronous>, transform_indices = @transform_4, window_bounds = array<i64: 2, 16, 256>}, {pipeline_mode = #tpu.pipeline_mode<synchronous>, transform_indices = @transform_5, window_bounds = array<i64: 2, 16, 256>}]} {
    %c0 = arith.constant 0 : index
    %c0_0 = arith.constant 0 : index
    %c0_1 = arith.constant 0 : index
    %0 = vector.load %arg1[%c0, %c0_0, %c0_1] : memref<2x16x256xf32, #tpu.memory_space<vmem>>, vector<2x16x256xf32>
    %c0_2 = arith.constant 0 : index
    %c0_3 = arith.constant 0 : index
    %c0_4 = arith.constant 0 : index
    %1 = vector.load %arg2[%c0_2, %c0_3, %c0_4] : memref<2x16x256xf32, #tpu.memory_space<vmem>>, vector<2x16x256xf32>
    %c0_5 = arith.constant 0 : index
    %c0_6 = arith.constant 0 : index
    %c0_7 = arith.constant 0 : index
    %2 = vector.load %arg3[%c0_5, %c0_6, %c0_7] : memref<16x16x256xf32, #tpu.memory_space<vmem>>, vector<16x16x256xf32>
    %c0_8 = arith.constant 0 : index
    %c0_9 = arith.constant 0 : index
    %c0_10 = arith.constant 0 : index
    %3 = vector.load %arg4[%c0_8, %c0_9, %c0_10] : memref<16x16x256xf32, #tpu.memory_space<vmem>>, vector<16x16x256xf32>
    %cst = arith.constant 0.000000e+00 : f32
    %4 = vector.broadcast %cst : f32 to vector<16x256xf32>
    %cst_11 = arith.constant 0.000000e+00 : f32
    %5 = vector.broadcast %cst_11 : f32 to vector<16x256xf32>
    %6 = vector.extract_strided_slice %0 {offsets = [0, 0, 0], sizes = [1, 1, 256], strides = [1, 1, 1]} : vector<2x16x256xf32> to vector<1x1x256xf32>
    %7 = vector.shape_cast %6 : vector<1x1x256xf32> to vector<1x256xf32>
    %8 = vector.extract_strided_slice %1 {offsets = [0, 0, 0], sizes = [1, 1, 256], strides = [1, 1, 1]} : vector<2x16x256xf32> to vector<1x1x256xf32>
    %9 = vector.shape_cast %8 : vector<1x1x256xf32> to vector<1x256xf32>
    %10 = vector.extract_strided_slice %2 {offsets = [0, 0, 0], sizes = [1, 16, 256], strides = [1, 1, 1]} : vector<16x16x256xf32> to vector<1x16x256xf32>
    %11 = vector.shape_cast %10 : vector<1x16x256xf32> to vector<16x256xf32>
    %12 = vector.extract_strided_slice %3 {offsets = [0, 0, 0], sizes = [1, 16, 256], strides = [1, 1, 1]} : vector<16x16x256xf32> to vector<1x16x256xf32>
    %13 = vector.shape_cast %12 : vector<1x16x256xf32> to vector<16x256xf32>
    %14 = vector.broadcast %7 : vector<1x256xf32> to vector<16x256xf32>
    %15 = arith.mulf %14, %11 : vector<16x256xf32>
    %16 = arith.addf %4, %15 : vector<16x256xf32>
    %17 = vector.broadcast %9 : vector<1x256xf32> to vector<16x256xf32>
    %18 = arith.mulf %17, %13 : vector<16x256xf32>
    %19 = arith.subf %16, %18 : vector<16x256xf32>
    %20 = vector.broadcast %7 : vector<1x256xf32> to vector<16x256xf32>
    %21 = arith.mulf %20, %13 : vector<16x256xf32>
    %22 = arith.addf %5, %21 : vector<16x256xf32>
    %23 = vector.broadcast %9 : vector<1x256xf32> to vector<16x256xf32>
    %24 = arith.mulf %23, %11 : vector<16x256xf32>
    %25 = arith.addf %22, %24 : vector<16x256xf32>
    %26 = vector.extract_strided_slice %0 {offsets = [0, 1, 0], sizes = [1, 1, 256], strides = [1, 1, 1]} : vector<2x16x256xf32> to vector<1x1x256xf32>
    %27 = vector.shape_cast %26 : vector<1x1x256xf32> to vector<1x256xf32>
    %28 = vector.extract_strided_slice %1 {offsets = [0, 1, 0], sizes = [1, 1, 256], strides = [1, 1, 1]} : vector<2x16x256xf32> to vector<1x1x256xf32>
    %29 = vector.shape_cast %28 : vector<1x1x256xf32> to vector<1x256xf32>
    %30 = vector.extract_strided_slice %2 {offsets = [1, 0, 0], sizes = [1, 16, 256], strides = [1, 1, 1]} : vector<16x16x256xf32> to vector<1x16x256xf32>
    %31 = vector.shape_cast %30 : vector<1x16x256xf32> to vector<16x256xf32>
    %32 = vector.extract_strided_slice %3 {offsets = [1, 0, 0], sizes = [1, 16, 256], strides = [1, 1, 1]} : vector<16x16x256xf32> to vector<1x16x256xf32>
    %33 = vector.shape_cast %32 : vector<1x16x256xf32> to vector<16x256xf32>
    %34 = vector.broadcast %27 : vector<1x256xf32> to vector<16x256xf32>
    %35 = arith.mulf %34, %31 : vector<16x256xf32>
    %36 = arith.addf %19, %35 : vector<16x256xf32>
    %37 = vector.broadcast %29 : vector<1x256xf32> to vector<16x256xf32>
    %38 = arith.mulf %37, %33 : vector<16x256xf32>
    %39 = arith.subf %36, %38 : vector<16x256xf32>
    %40 = vector.broadcast %27 : vector<1x256xf32> to vector<16x256xf32>
    %41 = arith.mulf %40, %33 : vector<16x256xf32>
    %42 = arith.addf %25, %41 : vector<16x256xf32>
    %43 = vector.broadcast %29 : vector<1x256xf32> to vector<16x256xf32>
    %44 = arith.mulf %43, %31 : vector<16x256xf32>
    %45 = arith.addf %42, %44 : vector<16x256xf32>
    %46 = vector.extract_strided_slice %0 {offsets = [0, 2, 0], sizes = [1, 1, 256], strides = [1, 1, 1]} : vector<2x16x256xf32> to vector<1x1x256xf32>
    %47 = vector.shape_cast %46 : vector<1x1x256xf32> to vector<1x256xf32>
    %48 = vector.extract_strided_slice %1 {offsets = [0, 2, 0], sizes = [1, 1, 256], strides = [1, 1, 1]} : vector<2x16x256xf32> to vector<1x1x256xf32>
    %49 = vector.shape_cast %48 : vector<1x1x256xf32> to vector<1x256xf32>
    %50 = vector.extract_strided_slice %2 {offsets = [2, 0, 0], sizes = [1, 16, 256], strides = [1, 1, 1]} : vector<16x16x256xf32> to vector<1x16x256xf32>
    %51 = vector.shape_cast %50 : vector<1x16x256xf32> to vector<16x256xf32>
    %52 = vector.extract_strided_slice %3 {offsets = [2, 0, 0], sizes = [1, 16, 256], strides = [1, 1, 1]} : vector<16x16x256xf32> to vector<1x16x256xf32>
    %53 = vector.shape_cast %52 : vector<1x16x256xf32> to vector<16x256xf32>
    %54 = vector.broadcast %47 : vector<1x256xf32> to vector<16x256xf32>
    %55 = arith.mulf %54, %51 : vector<16x256xf32>
    %56 = arith.addf %39, %55 : vector<16x256xf32>
    %57 = vector.broadcast %49 : vector<1x256xf32> to vector<16x256xf32>
    %58 = arith.mulf %57, %53 : vector<16x256xf32>
    %59 = arith.subf %56, %58 : vector<16x256xf32>
    %60 = vector.broadcast %47 : vector<1x256xf32> to vector<16x256xf32>
    %61 = arith.mulf %60, %53 : vector<16x256xf32>
    %62 = arith.addf %45, %61 : vector<16x256xf32>
    %63 = vector.broadcast %49 : vector<1x256xf32> to vector<16x256xf32>
    %64 = arith.mulf %63, %51 : vector<16x256xf32>
    %65 = arith.addf %62, %64 : vector<16x256xf32>
    %66 = vector.extract_strided_slice %0 {offsets = [0, 3, 0], sizes = [1, 1, 256], strides = [1, 1, 1]} : vector<2x16x256xf32> to vector<1x1x256xf32>
    %67 = vector.shape_cast %66 : vector<1x1x256xf32> to vector<1x256xf32>
    %68 = vector.extract_strided_slice %1 {offsets = [0, 3, 0], sizes = [1, 1, 256], strides = [1, 1, 1]} : vector<2x16x256xf32> to vector<1x1x256xf32>
    %69 = vector.shape_cast %68 : vector<1x1x256xf32> to vector<1x256xf32>
    %70 = vector.extract_strided_slice %2 {offsets = [3, 0, 0], sizes = [1, 16, 256], strides = [1, 1, 1]} : vector<16x16x256xf32> to vector<1x16x256xf32>
    %71 = vector.shape_cast %70 : vector<1x16x256xf32> to vector<16x256xf32>
    %72 = vector.extract_strided_slice %3 {offsets = [3, 0, 0], sizes = [1, 16, 256], strides = [1, 1, 1]} : vector<16x16x256xf32> to vector<1x16x256xf32>
    %73 = vector.shape_cast %72 : vector<1x16x256xf32> to vector<16x256xf32>
    %74 = vector.broadcast %67 : vector<1x256xf32> to vector<16x256xf32>
    %75 = arith.mulf %74, %71 : vector<16x256xf32>
    %76 = arith.addf %59, %75 : vector<16x256xf32>
    %77 = vector.broadcast %69 : vector<1x256xf32> to vector<16x256xf32>
    %78 = arith.mulf %77, %73 : vector<16x256xf32>
    %79 = arith.subf %76, %78 : vector<16x256xf32>
    %80 = vector.broadcast %67 : vector<1x256xf32> to vector<16x256xf32>
    %81 = arith.mulf %80, %73 : vector<16x256xf32>
    %82 = arith.addf %65, %81 : vector<16x256xf32>
    %83 = vector.broadcast %69 : vector<1x256xf32> to vector<16x256xf32>
    %84 = arith.mulf %83, %71 : vector<16x256xf32>
    %85 = arith.addf %82, %84 : vector<16x256xf32>
    %86 = vector.extract_strided_slice %0 {offsets = [0, 4, 0], sizes = [1, 1, 256], strides = [1, 1, 1]} : vector<2x16x256xf32> to vector<1x1x256xf32>
    %87 = vector.shape_cast %86 : vector<1x1x256xf32> to vector<1x256xf32>
    %88 = vector.extract_strided_slice %1 {offsets = [0, 4, 0], sizes = [1, 1, 256], strides = [1, 1, 1]} : vector<2x16x256xf32> to vector<1x1x256xf32>
    %89 = vector.shape_cast %88 : vector<1x1x256xf32> to vector<1x256xf32>
    %90 = vector.extract_strided_slice %2 {offsets = [4, 0, 0], sizes = [1, 16, 256], strides = [1, 1, 1]} : vector<16x16x256xf32> to vector<1x16x256xf32>
    %91 = vector.shape_cast %90 : vector<1x16x256xf32> to vector<16x256xf32>
    %92 = vector.extract_strided_slice %3 {offsets = [4, 0, 0], sizes = [1, 16, 256], strides = [1, 1, 1]} : vector<16x16x256xf32> to vector<1x16x256xf32>
    %93 = vector.shape_cast %92 : vector<1x16x256xf32> to vector<16x256xf32>
    %94 = vector.broadcast %87 : vector<1x256xf32> to vector<16x256xf32>
    %95 = arith.mulf %94, %91 : vector<16x256xf32>
    %96 = arith.addf %79, %95 : vector<16x256xf32>
    %97 = vector.broadcast %89 : vector<1x256xf32> to vector<16x256xf32>
    %98 = arith.mulf %97, %93 : vector<16x256xf32>
    %99 = arith.subf %96, %98 : vector<16x256xf32>
    %100 = vector.broadcast %87 : vector<1x256xf32> to vector<16x256xf32>
    %101 = arith.mulf %100, %93 : vector<16x256xf32>
    %102 = arith.addf %85, %101 : vector<16x256xf32>
    %103 = vector.broadcast %89 : vector<1x256xf32> to vector<16x256xf32>
    %104 = arith.mulf %103, %91 : vector<16x256xf32>
    %105 = arith.addf %102, %104 : vector<16x256xf32>
    %106 = vector.extract_strided_slice %0 {offsets = [0, 5, 0], sizes = [1, 1, 256], strides = [1, 1, 1]} : vector<2x16x256xf32> to vector<1x1x256xf32>
    %107 = vector.shape_cast %106 : vector<1x1x256xf32> to vector<1x256xf32>
    %108 = vector.extract_strided_slice %1 {offsets = [0, 5, 0], sizes = [1, 1, 256], strides = [1, 1, 1]} : vector<2x16x256xf32> to vector<1x1x256xf32>
    %109 = vector.shape_cast %108 : vector<1x1x256xf32> to vector<1x256xf32>
    %110 = vector.extract_strided_slice %2 {offsets = [5, 0, 0], sizes = [1, 16, 256], strides = [1, 1, 1]} : vector<16x16x256xf32> to vector<1x16x256xf32>
    %111 = vector.shape_cast %110 : vector<1x16x256xf32> to vector<16x256xf32>
    %112 = vector.extract_strided_slice %3 {offsets = [5, 0, 0], sizes = [1, 16, 256], strides = [1, 1, 1]} : vector<16x16x256xf32> to vector<1x16x256xf32>
    %113 = vector.shape_cast %112 : vector<1x16x256xf32> to vector<16x256xf32>
    %114 = vector.broadcast %107 : vector<1x256xf32> to vector<16x256xf32>
    %115 = arith.mulf %114, %111 : vector<16x256xf32>
    %116 = arith.addf %99, %115 : vector<16x256xf32>
    %117 = vector.broadcast %109 : vector<1x256xf32> to vector<16x256xf32>
    %118 = arith.mulf %117, %113 : vector<16x256xf32>
    %119 = arith.subf %116, %118 : vector<16x256xf32>
    %120 = vector.broadcast %107 : vector<1x256xf32> to vector<16x256xf32>
    %121 = arith.mulf %120, %113 : vector<16x256xf32>
    %122 = arith.addf %105, %121 : vector<16x256xf32>
    %123 = vector.broadcast %109 : vector<1x256xf32> to vector<16x256xf32>
    %124 = arith.mulf %123, %111 : vector<16x256xf32>
    %125 = arith.addf %122, %124 : vector<16x256xf32>
    %126 = vector.extract_strided_slice %0 {offsets = [0, 6, 0], sizes = [1, 1, 256], strides = [1, 1, 1]} : vector<2x16x256xf32> to vector<1x1x256xf32>
    %127 = vector.shape_cast %126 : vector<1x1x256xf32> to vector<1x256xf32>
    %128 = vector.extract_strided_slice %1 {offsets = [0, 6, 0], sizes = [1, 1, 256], strides = [1, 1, 1]} : vector<2x16x256xf32> to vector<1x1x256xf32>
    %129 = vector.shape_cast %128 : vector<1x1x256xf32> to vector<1x256xf32>
    %130 = vector.extract_strided_slice %2 {offsets = [6, 0, 0], sizes = [1, 16, 256], strides = [1, 1, 1]} : vector<16x16x256xf32> to vector<1x16x256xf32>
    %131 = vector.shape_cast %130 : vector<1x16x256xf32> to vector<16x256xf32>
    %132 = vector.extract_strided_slice %3 {offsets = [6, 0, 0], sizes = [1, 16, 256], strides = [1, 1, 1]} : vector<16x16x256xf32> to vector<1x16x256xf32>
    %133 = vector.shape_cast %132 : vector<1x16x256xf32> to vector<16x256xf32>
    %134 = vector.broadcast %127 : vector<1x256xf32> to vector<16x256xf32>
    %135 = arith.mulf %134, %131 : vector<16x256xf32>
    %136 = arith.addf %119, %135 : vector<16x256xf32>
    %137 = vector.broadcast %129 : vector<1x256xf32> to vector<16x256xf32>
    %138 = arith.mulf %137, %133 : vector<16x256xf32>
    %139 = arith.subf %136, %138 : vector<16x256xf32>
    %140 = vector.broadcast %127 : vector<1x256xf32> to vector<16x256xf32>
    %141 = arith.mulf %140, %133 : vector<16x256xf32>
    %142 = arith.addf %125, %141 : vector<16x256xf32>
    %143 = vector.broadcast %129 : vector<1x256xf32> to vector<16x256xf32>
    %144 = arith.mulf %143, %131 : vector<16x256xf32>
    %145 = arith.addf %142, %144 : vector<16x256xf32>
    %146 = vector.extract_strided_slice %0 {offsets = [0, 7, 0], sizes = [1, 1, 256], strides = [1, 1, 1]} : vector<2x16x256xf32> to vector<1x1x256xf32>
    %147 = vector.shape_cast %146 : vector<1x1x256xf32> to vector<1x256xf32>
    %148 = vector.extract_strided_slice %1 {offsets = [0, 7, 0], sizes = [1, 1, 256], strides = [1, 1, 1]} : vector<2x16x256xf32> to vector<1x1x256xf32>
    %149 = vector.shape_cast %148 : vector<1x1x256xf32> to vector<1x256xf32>
    %150 = vector.extract_strided_slice %2 {offsets = [7, 0, 0], sizes = [1, 16, 256], strides = [1, 1, 1]} : vector<16x16x256xf32> to vector<1x16x256xf32>
    %151 = vector.shape_cast %150 : vector<1x16x256xf32> to vector<16x256xf32>
    %152 = vector.extract_strided_slice %3 {offsets = [7, 0, 0], sizes = [1, 16, 256], strides = [1, 1, 1]} : vector<16x16x256xf32> to vector<1x16x256xf32>
    %153 = vector.shape_cast %152 : vector<1x16x256xf32> to vector<16x256xf32>
    %154 = vector.broadcast %147 : vector<1x256xf32> to vector<16x256xf32>
    %155 = arith.mulf %154, %151 : vector<16x256xf32>
    %156 = arith.addf %139, %155 : vector<16x256xf32>
    %157 = vector.broadcast %149 : vector<1x256xf32> to vector<16x256xf32>
    %158 = arith.mulf %157, %153 : vector<16x256xf32>
    %159 = arith.subf %156, %158 : vector<16x256xf32>
    %160 = vector.broadcast %147 : vector<1x256xf32> to vector<16x256xf32>
    %161 = arith.mulf %160, %153 : vector<16x256xf32>
    %162 = arith.addf %145, %161 : vector<16x256xf32>
    %163 = vector.broadcast %149 : vector<1x256xf32> to vector<16x256xf32>
    %164 = arith.mulf %163, %151 : vector<16x256xf32>
    %165 = arith.addf %162, %164 : vector<16x256xf32>
    %166 = vector.extract_strided_slice %0 {offsets = [0, 8, 0], sizes = [1, 1, 256], strides = [1, 1, 1]} : vector<2x16x256xf32> to vector<1x1x256xf32>
    %167 = vector.shape_cast %166 : vector<1x1x256xf32> to vector<1x256xf32>
    %168 = vector.extract_strided_slice %1 {offsets = [0, 8, 0], sizes = [1, 1, 256], strides = [1, 1, 1]} : vector<2x16x256xf32> to vector<1x1x256xf32>
    %169 = vector.shape_cast %168 : vector<1x1x256xf32> to vector<1x256xf32>
    %170 = vector.extract_strided_slice %2 {offsets = [8, 0, 0], sizes = [1, 16, 256], strides = [1, 1, 1]} : vector<16x16x256xf32> to vector<1x16x256xf32>
    %171 = vector.shape_cast %170 : vector<1x16x256xf32> to vector<16x256xf32>
    %172 = vector.extract_strided_slice %3 {offsets = [8, 0, 0], sizes = [1, 16, 256], strides = [1, 1, 1]} : vector<16x16x256xf32> to vector<1x16x256xf32>
    %173 = vector.shape_cast %172 : vector<1x16x256xf32> to vector<16x256xf32>
    %174 = vector.broadcast %167 : vector<1x256xf32> to vector<16x256xf32>
    %175 = arith.mulf %174, %171 : vector<16x256xf32>
    %176 = arith.addf %159, %175 : vector<16x256xf32>
    %177 = vector.broadcast %169 : vector<1x256xf32> to vector<16x256xf32>
    %178 = arith.mulf %177, %173 : vector<16x256xf32>
    %179 = arith.subf %176, %178 : vector<16x256xf32>
    %180 = vector.broadcast %167 : vector<1x256xf32> to vector<16x256xf32>
    %181 = arith.mulf %180, %173 : vector<16x256xf32>
    %182 = arith.addf %165, %181 : vector<16x256xf32>
    %183 = vector.broadcast %169 : vector<1x256xf32> to vector<16x256xf32>
    %184 = arith.mulf %183, %171 : vector<16x256xf32>
    %185 = arith.addf %182, %184 : vector<16x256xf32>
    %186 = vector.extract_strided_slice %0 {offsets = [0, 9, 0], sizes = [1, 1, 256], strides = [1, 1, 1]} : vector<2x16x256xf32> to vector<1x1x256xf32>
    %187 = vector.shape_cast %186 : vector<1x1x256xf32> to vector<1x256xf32>
    %188 = vector.extract_strided_slice %1 {offsets = [0, 9, 0], sizes = [1, 1, 256], strides = [1, 1, 1]} : vector<2x16x256xf32> to vector<1x1x256xf32>
    %189 = vector.shape_cast %188 : vector<1x1x256xf32> to vector<1x256xf32>
    %190 = vector.extract_strided_slice %2 {offsets = [9, 0, 0], sizes = [1, 16, 256], strides = [1, 1, 1]} : vector<16x16x256xf32> to vector<1x16x256xf32>
    %191 = vector.shape_cast %190 : vector<1x16x256xf32> to vector<16x256xf32>
    %192 = vector.extract_strided_slice %3 {offsets = [9, 0, 0], sizes = [1, 16, 256], strides = [1, 1, 1]} : vector<16x16x256xf32> to vector<1x16x256xf32>
    %193 = vector.shape_cast %192 : vector<1x16x256xf32> to vector<16x256xf32>
    %194 = vector.broadcast %187 : vector<1x256xf32> to vector<16x256xf32>
    %195 = arith.mulf %194, %191 : vector<16x256xf32>
    %196 = arith.addf %179, %195 : vector<16x256xf32>
    %197 = vector.broadcast %189 : vector<1x256xf32> to vector<16x256xf32>
    %198 = arith.mulf %197, %193 : vector<16x256xf32>
    %199 = arith.subf %196, %198 : vector<16x256xf32>
    %200 = vector.broadcast %187 : vector<1x256xf32> to vector<16x256xf32>
    %201 = arith.mulf %200, %193 : vector<16x256xf32>
    %202 = arith.addf %185, %201 : vector<16x256xf32>
    %203 = vector.broadcast %189 : vector<1x256xf32> to vector<16x256xf32>
    %204 = arith.mulf %203, %191 : vector<16x256xf32>
    %205 = arith.addf %202, %204 : vector<16x256xf32>
    %206 = vector.extract_strided_slice %0 {offsets = [0, 10, 0], sizes = [1, 1, 256], strides = [1, 1, 1]} : vector<2x16x256xf32> to vector<1x1x256xf32>
    %207 = vector.shape_cast %206 : vector<1x1x256xf32> to vector<1x256xf32>
    %208 = vector.extract_strided_slice %1 {offsets = [0, 10, 0], sizes = [1, 1, 256], strides = [1, 1, 1]} : vector<2x16x256xf32> to vector<1x1x256xf32>
    %209 = vector.shape_cast %208 : vector<1x1x256xf32> to vector<1x256xf32>
    %210 = vector.extract_strided_slice %2 {offsets = [10, 0, 0], sizes = [1, 16, 256], strides = [1, 1, 1]} : vector<16x16x256xf32> to vector<1x16x256xf32>
    %211 = vector.shape_cast %210 : vector<1x16x256xf32> to vector<16x256xf32>
    %212 = vector.extract_strided_slice %3 {offsets = [10, 0, 0], sizes = [1, 16, 256], strides = [1, 1, 1]} : vector<16x16x256xf32> to vector<1x16x256xf32>
    %213 = vector.shape_cast %212 : vector<1x16x256xf32> to vector<16x256xf32>
    %214 = vector.broadcast %207 : vector<1x256xf32> to vector<16x256xf32>
    %215 = arith.mulf %214, %211 : vector<16x256xf32>
    %216 = arith.addf %199, %215 : vector<16x256xf32>
    %217 = vector.broadcast %209 : vector<1x256xf32> to vector<16x256xf32>
    %218 = arith.mulf %217, %213 : vector<16x256xf32>
    %219 = arith.subf %216, %218 : vector<16x256xf32>
    %220 = vector.broadcast %207 : vector<1x256xf32> to vector<16x256xf32>
    %221 = arith.mulf %220, %213 : vector<16x256xf32>
    %222 = arith.addf %205, %221 : vector<16x256xf32>
    %223 = vector.broadcast %209 : vector<1x256xf32> to vector<16x256xf32>
    %224 = arith.mulf %223, %211 : vector<16x256xf32>
    %225 = arith.addf %222, %224 : vector<16x256xf32>
    %226 = vector.extract_strided_slice %0 {offsets = [0, 11, 0], sizes = [1, 1, 256], strides = [1, 1, 1]} : vector<2x16x256xf32> to vector<1x1x256xf32>
    %227 = vector.shape_cast %226 : vector<1x1x256xf32> to vector<1x256xf32>
    %228 = vector.extract_strided_slice %1 {offsets = [0, 11, 0], sizes = [1, 1, 256], strides = [1, 1, 1]} : vector<2x16x256xf32> to vector<1x1x256xf32>
    %229 = vector.shape_cast %228 : vector<1x1x256xf32> to vector<1x256xf32>
    %230 = vector.extract_strided_slice %2 {offsets = [11, 0, 0], sizes = [1, 16, 256], strides = [1, 1, 1]} : vector<16x16x256xf32> to vector<1x16x256xf32>
    %231 = vector.shape_cast %230 : vector<1x16x256xf32> to vector<16x256xf32>
    %232 = vector.extract_strided_slice %3 {offsets = [11, 0, 0], sizes = [1, 16, 256], strides = [1, 1, 1]} : vector<16x16x256xf32> to vector<1x16x256xf32>
    %233 = vector.shape_cast %232 : vector<1x16x256xf32> to vector<16x256xf32>
    %234 = vector.broadcast %227 : vector<1x256xf32> to vector<16x256xf32>
    %235 = arith.mulf %234, %231 : vector<16x256xf32>
    %236 = arith.addf %219, %235 : vector<16x256xf32>
    %237 = vector.broadcast %229 : vector<1x256xf32> to vector<16x256xf32>
    %238 = arith.mulf %237, %233 : vector<16x256xf32>
    %239 = arith.subf %236, %238 : vector<16x256xf32>
    %240 = vector.broadcast %227 : vector<1x256xf32> to vector<16x256xf32>
    %241 = arith.mulf %240, %233 : vector<16x256xf32>
    %242 = arith.addf %225, %241 : vector<16x256xf32>
    %243 = vector.broadcast %229 : vector<1x256xf32> to vector<16x256xf32>
    %244 = arith.mulf %243, %231 : vector<16x256xf32>
    %245 = arith.addf %242, %244 : vector<16x256xf32>
    %246 = vector.extract_strided_slice %0 {offsets = [0, 12, 0], sizes = [1, 1, 256], strides = [1, 1, 1]} : vector<2x16x256xf32> to vector<1x1x256xf32>
    %247 = vector.shape_cast %246 : vector<1x1x256xf32> to vector<1x256xf32>
    %248 = vector.extract_strided_slice %1 {offsets = [0, 12, 0], sizes = [1, 1, 256], strides = [1, 1, 1]} : vector<2x16x256xf32> to vector<1x1x256xf32>
    %249 = vector.shape_cast %248 : vector<1x1x256xf32> to vector<1x256xf32>
    %250 = vector.extract_strided_slice %2 {offsets = [12, 0, 0], sizes = [1, 16, 256], strides = [1, 1, 1]} : vector<16x16x256xf32> to vector<1x16x256xf32>
    %251 = vector.shape_cast %250 : vector<1x16x256xf32> to vector<16x256xf32>
    %252 = vector.extract_strided_slice %3 {offsets = [12, 0, 0], sizes = [1, 16, 256], strides = [1, 1, 1]} : vector<16x16x256xf32> to vector<1x16x256xf32>
    %253 = vector.shape_cast %252 : vector<1x16x256xf32> to vector<16x256xf32>
    %254 = vector.broadcast %247 : vector<1x256xf32> to vector<16x256xf32>
    %255 = arith.mulf %254, %251 : vector<16x256xf32>
    %256 = arith.addf %239, %255 : vector<16x256xf32>
    %257 = vector.broadcast %249 : vector<1x256xf32> to vector<16x256xf32>
    %258 = arith.mulf %257, %253 : vector<16x256xf32>
    %259 = arith.subf %256, %258 : vector<16x256xf32>
    %260 = vector.broadcast %247 : vector<1x256xf32> to vector<16x256xf32>
    %261 = arith.mulf %260, %253 : vector<16x256xf32>
    %262 = arith.addf %245, %261 : vector<16x256xf32>
    %263 = vector.broadcast %249 : vector<1x256xf32> to vector<16x256xf32>
    %264 = arith.mulf %263, %251 : vector<16x256xf32>
    %265 = arith.addf %262, %264 : vector<16x256xf32>
    %266 = vector.extract_strided_slice %0 {offsets = [0, 13, 0], sizes = [1, 1, 256], strides = [1, 1, 1]} : vector<2x16x256xf32> to vector<1x1x256xf32>
    %267 = vector.shape_cast %266 : vector<1x1x256xf32> to vector<1x256xf32>
    %268 = vector.extract_strided_slice %1 {offsets = [0, 13, 0], sizes = [1, 1, 256], strides = [1, 1, 1]} : vector<2x16x256xf32> to vector<1x1x256xf32>
    %269 = vector.shape_cast %268 : vector<1x1x256xf32> to vector<1x256xf32>
    %270 = vector.extract_strided_slice %2 {offsets = [13, 0, 0], sizes = [1, 16, 256], strides = [1, 1, 1]} : vector<16x16x256xf32> to vector<1x16x256xf32>
    %271 = vector.shape_cast %270 : vector<1x16x256xf32> to vector<16x256xf32>
    %272 = vector.extract_strided_slice %3 {offsets = [13, 0, 0], sizes = [1, 16, 256], strides = [1, 1, 1]} : vector<16x16x256xf32> to vector<1x16x256xf32>
    %273 = vector.shape_cast %272 : vector<1x16x256xf32> to vector<16x256xf32>
    %274 = vector.broadcast %267 : vector<1x256xf32> to vector<16x256xf32>
    %275 = arith.mulf %274, %271 : vector<16x256xf32>
    %276 = arith.addf %259, %275 : vector<16x256xf32>
    %277 = vector.broadcast %269 : vector<1x256xf32> to vector<16x256xf32>
    %278 = arith.mulf %277, %273 : vector<16x256xf32>
    %279 = arith.subf %276, %278 : vector<16x256xf32>
    %280 = vector.broadcast %267 : vector<1x256xf32> to vector<16x256xf32>
    %281 = arith.mulf %280, %273 : vector<16x256xf32>
    %282 = arith.addf %265, %281 : vector<16x256xf32>
    %283 = vector.broadcast %269 : vector<1x256xf32> to vector<16x256xf32>
    %284 = arith.mulf %283, %271 : vector<16x256xf32>
    %285 = arith.addf %282, %284 : vector<16x256xf32>
    %286 = vector.extract_strided_slice %0 {offsets = [0, 14, 0], sizes = [1, 1, 256], strides = [1, 1, 1]} : vector<2x16x256xf32> to vector<1x1x256xf32>
    %287 = vector.shape_cast %286 : vector<1x1x256xf32> to vector<1x256xf32>
    %288 = vector.extract_strided_slice %1 {offsets = [0, 14, 0], sizes = [1, 1, 256], strides = [1, 1, 1]} : vector<2x16x256xf32> to vector<1x1x256xf32>
    %289 = vector.shape_cast %288 : vector<1x1x256xf32> to vector<1x256xf32>
    %290 = vector.extract_strided_slice %2 {offsets = [14, 0, 0], sizes = [1, 16, 256], strides = [1, 1, 1]} : vector<16x16x256xf32> to vector<1x16x256xf32>
    %291 = vector.shape_cast %290 : vector<1x16x256xf32> to vector<16x256xf32>
    %292 = vector.extract_strided_slice %3 {offsets = [14, 0, 0], sizes = [1, 16, 256], strides = [1, 1, 1]} : vector<16x16x256xf32> to vector<1x16x256xf32>
    %293 = vector.shape_cast %292 : vector<1x16x256xf32> to vector<16x256xf32>
    %294 = vector.broadcast %287 : vector<1x256xf32> to vector<16x256xf32>
    %295 = arith.mulf %294, %291 : vector<16x256xf32>
    %296 = arith.addf %279, %295 : vector<16x256xf32>
    %297 = vector.broadcast %289 : vector<1x256xf32> to vector<16x256xf32>
    %298 = arith.mulf %297, %293 : vector<16x256xf32>
    %299 = arith.subf %296, %298 : vector<16x256xf32>
    %300 = vector.broadcast %287 : vector<1x256xf32> to vector<16x256xf32>
    %301 = arith.mulf %300, %293 : vector<16x256xf32>
    %302 = arith.addf %285, %301 : vector<16x256xf32>
    %303 = vector.broadcast %289 : vector<1x256xf32> to vector<16x256xf32>
    %304 = arith.mulf %303, %291 : vector<16x256xf32>
    %305 = arith.addf %302, %304 : vector<16x256xf32>
    %306 = vector.extract_strided_slice %0 {offsets = [0, 15, 0], sizes = [1, 1, 256], strides = [1, 1, 1]} : vector<2x16x256xf32> to vector<1x1x256xf32>
    %307 = vector.shape_cast %306 : vector<1x1x256xf32> to vector<1x256xf32>
    %308 = vector.extract_strided_slice %1 {offsets = [0, 15, 0], sizes = [1, 1, 256], strides = [1, 1, 1]} : vector<2x16x256xf32> to vector<1x1x256xf32>
    %309 = vector.shape_cast %308 : vector<1x1x256xf32> to vector<1x256xf32>
    %310 = vector.extract_strided_slice %2 {offsets = [15, 0, 0], sizes = [1, 16, 256], strides = [1, 1, 1]} : vector<16x16x256xf32> to vector<1x16x256xf32>
    %311 = vector.shape_cast %310 : vector<1x16x256xf32> to vector<16x256xf32>
    %312 = vector.extract_strided_slice %3 {offsets = [15, 0, 0], sizes = [1, 16, 256], strides = [1, 1, 1]} : vector<16x16x256xf32> to vector<1x16x256xf32>
    %313 = vector.shape_cast %312 : vector<1x16x256xf32> to vector<16x256xf32>
    %314 = vector.broadcast %307 : vector<1x256xf32> to vector<16x256xf32>
    %315 = arith.mulf %314, %311 : vector<16x256xf32>
    %316 = arith.addf %299, %315 : vector<16x256xf32>
    %317 = vector.broadcast %309 : vector<1x256xf32> to vector<16x256xf32>
    %318 = arith.mulf %317, %313 : vector<16x256xf32>
    %319 = arith.subf %316, %318 : vector<16x256xf32>
    %320 = vector.broadcast %307 : vector<1x256xf32> to vector<16x256xf32>
    %321 = arith.mulf %320, %313 : vector<16x256xf32>
    %322 = arith.addf %305, %321 : vector<16x256xf32>
    %323 = vector.broadcast %309 : vector<1x256xf32> to vector<16x256xf32>
    %324 = arith.mulf %323, %311 : vector<16x256xf32>
    %325 = arith.addf %322, %324 : vector<16x256xf32>
    %c0_12 = arith.constant 0 : index
    %c0_13 = arith.constant 0 : index
    %c0_14 = arith.constant 0 : index
    %326 = vector.load %arg5[%c0_12, %c0_13, %c0_14] : memref<2x16x256xf32, #tpu.memory_space<vmem>>, vector<1x16x256xf32>
    %327 = vector.shape_cast %326 : vector<1x16x256xf32> to vector<16x256xf32>
    %328 = vector.shape_cast %319 : vector<16x256xf32> to vector<1x16x256xf32>
    tpu.vector_store %arg5[%c0_12, %c0_13, %c0_14], %328 {strides = array<i32>} : memref<2x16x256xf32, #tpu.memory_space<vmem>>, vector<1x16x256xf32>,
    %c0_15 = arith.constant 0 : index
    %c0_16 = arith.constant 0 : index
    %c0_17 = arith.constant 0 : index
    %329 = vector.load %arg6[%c0_15, %c0_16, %c0_17] : memref<2x16x256xf32, #tpu.memory_space<vmem>>, vector<1x16x256xf32>
    %330 = vector.shape_cast %329 : vector<1x16x256xf32> to vector<16x256xf32>
    %331 = vector.shape_cast %325 : vector<16x256xf32> to vector<1x16x256xf32>
    tpu.vector_store %arg6[%c0_15, %c0_16, %c0_17], %331 {strides = array<i32>} : memref<2x16x256xf32, #tpu.memory_space<vmem>>, vector<1x16x256xf32>,
    %cst_18 = arith.constant 0.000000e+00 : f32
    %332 = vector.broadcast %cst_18 : f32 to vector<16x256xf32>
    %cst_19 = arith.constant 0.000000e+00 : f32
    %333 = vector.broadcast %cst_19 : f32 to vector<16x256xf32>
    %334 = vector.extract_strided_slice %0 {offsets = [1, 0, 0], sizes = [1, 1, 256], strides = [1, 1, 1]} : vector<2x16x256xf32> to vector<1x1x256xf32>
    %335 = vector.shape_cast %334 : vector<1x1x256xf32> to vector<1x256xf32>
    %336 = vector.extract_strided_slice %1 {offsets = [1, 0, 0], sizes = [1, 1, 256], strides = [1, 1, 1]} : vector<2x16x256xf32> to vector<1x1x256xf32>
    %337 = vector.shape_cast %336 : vector<1x1x256xf32> to vector<1x256xf32>
    %338 = vector.extract_strided_slice %2 {offsets = [0, 0, 0], sizes = [1, 16, 256], strides = [1, 1, 1]} : vector<16x16x256xf32> to vector<1x16x256xf32>
    %339 = vector.shape_cast %338 : vector<1x16x256xf32> to vector<16x256xf32>
    %340 = vector.extract_strided_slice %3 {offsets = [0, 0, 0], sizes = [1, 16, 256], strides = [1, 1, 1]} : vector<16x16x256xf32> to vector<1x16x256xf32>
    %341 = vector.shape_cast %340 : vector<1x16x256xf32> to vector<16x256xf32>
    %342 = vector.broadcast %335 : vector<1x256xf32> to vector<16x256xf32>
    %343 = arith.mulf %342, %339 : vector<16x256xf32>
    %344 = arith.addf %332, %343 : vector<16x256xf32>
    %345 = vector.broadcast %337 : vector<1x256xf32> to vector<16x256xf32>
    %346 = arith.mulf %345, %341 : vector<16x256xf32>
    %347 = arith.subf %344, %346 : vector<16x256xf32>
    %348 = vector.broadcast %335 : vector<1x256xf32> to vector<16x256xf32>
    %349 = arith.mulf %348, %341 : vector<16x256xf32>
    %350 = arith.addf %333, %349 : vector<16x256xf32>
    %351 = vector.broadcast %337 : vector<1x256xf32> to vector<16x256xf32>
    %352 = arith.mulf %351, %339 : vector<16x256xf32>
    %353 = arith.addf %350, %352 : vector<16x256xf32>
    %354 = vector.extract_strided_slice %0 {offsets = [1, 1, 0], sizes = [1, 1, 256], strides = [1, 1, 1]} : vector<2x16x256xf32> to vector<1x1x256xf32>
    %355 = vector.shape_cast %354 : vector<1x1x256xf32> to vector<1x256xf32>
    %356 = vector.extract_strided_slice %1 {offsets = [1, 1, 0], sizes = [1, 1, 256], strides = [1, 1, 1]} : vector<2x16x256xf32> to vector<1x1x256xf32>
    %357 = vector.shape_cast %356 : vector<1x1x256xf32> to vector<1x256xf32>
    %358 = vector.extract_strided_slice %2 {offsets = [1, 0, 0], sizes = [1, 16, 256], strides = [1, 1, 1]} : vector<16x16x256xf32> to vector<1x16x256xf32>
    %359 = vector.shape_cast %358 : vector<1x16x256xf32> to vector<16x256xf32>
    %360 = vector.extract_strided_slice %3 {offsets = [1, 0, 0], sizes = [1, 16, 256], strides = [1, 1, 1]} : vector<16x16x256xf32> to vector<1x16x256xf32>
    %361 = vector.shape_cast %360 : vector<1x16x256xf32> to vector<16x256xf32>
    %362 = vector.broadcast %355 : vector<1x256xf32> to vector<16x256xf32>
    %363 = arith.mulf %362, %359 : vector<16x256xf32>
    %364 = arith.addf %347, %363 : vector<16x256xf32>
    %365 = vector.broadcast %357 : vector<1x256xf32> to vector<16x256xf32>
    %366 = arith.mulf %365, %361 : vector<16x256xf32>
    %367 = arith.subf %364, %366 : vector<16x256xf32>
    %368 = vector.broadcast %355 : vector<1x256xf32> to vector<16x256xf32>
    %369 = arith.mulf %368, %361 : vector<16x256xf32>
    %370 = arith.addf %353, %369 : vector<16x256xf32>
    %371 = vector.broadcast %357 : vector<1x256xf32> to vector<16x256xf32>
    %372 = arith.mulf %371, %359 : vector<16x256xf32>
    %373 = arith.addf %370, %372 : vector<16x256xf32>
    %374 = vector.extract_strided_slice %0 {offsets = [1, 2, 0], sizes = [1, 1, 256], strides = [1, 1, 1]} : vector<2x16x256xf32> to vector<1x1x256xf32>
    %375 = vector.shape_cast %374 : vector<1x1x256xf32> to vector<1x256xf32>
    %376 = vector.extract_strided_slice %1 {offsets = [1, 2, 0], sizes = [1, 1, 256], strides = [1, 1, 1]} : vector<2x16x256xf32> to vector<1x1x256xf32>
    %377 = vector.shape_cast %376 : vector<1x1x256xf32> to vector<1x256xf32>
    %378 = vector.extract_strided_slice %2 {offsets = [2, 0, 0], sizes = [1, 16, 256], strides = [1, 1, 1]} : vector<16x16x256xf32> to vector<1x16x256xf32>
    %379 = vector.shape_cast %378 : vector<1x16x256xf32> to vector<16x256xf32>
    %380 = vector.extract_strided_slice %3 {offsets = [2, 0, 0], sizes = [1, 16, 256], strides = [1, 1, 1]} : vector<16x16x256xf32> to vector<1x16x256xf32>
    %381 = vector.shape_cast %380 : vector<1x16x256xf32> to vector<16x256xf32>
    %382 = vector.broadcast %375 : vector<1x256xf32> to vector<16x256xf32>
    %383 = arith.mulf %382, %379 : vector<16x256xf32>
    %384 = arith.addf %367, %383 : vector<16x256xf32>
    %385 = vector.broadcast %377 : vector<1x256xf32> to vector<16x256xf32>
    %386 = arith.mulf %385, %381 : vector<16x256xf32>
    %387 = arith.subf %384, %386 : vector<16x256xf32>
    %388 = vector.broadcast %375 : vector<1x256xf32> to vector<16x256xf32>
    %389 = arith.mulf %388, %381 : vector<16x256xf32>
    %390 = arith.addf %373, %389 : vector<16x256xf32>
    %391 = vector.broadcast %377 : vector<1x256xf32> to vector<16x256xf32>
    %392 = arith.mulf %391, %379 : vector<16x256xf32>
    %393 = arith.addf %390, %392 : vector<16x256xf32>
    %394 = vector.extract_strided_slice %0 {offsets = [1, 3, 0], sizes = [1, 1, 256], strides = [1, 1, 1]} : vector<2x16x256xf32> to vector<1x1x256xf32>
    %395 = vector.shape_cast %394 : vector<1x1x256xf32> to vector<1x256xf32>
    %396 = vector.extract_strided_slice %1 {offsets = [1, 3, 0], sizes = [1, 1, 256], strides = [1, 1, 1]} : vector<2x16x256xf32> to vector<1x1x256xf32>
    %397 = vector.shape_cast %396 : vector<1x1x256xf32> to vector<1x256xf32>
    %398 = vector.extract_strided_slice %2 {offsets = [3, 0, 0], sizes = [1, 16, 256], strides = [1, 1, 1]} : vector<16x16x256xf32> to vector<1x16x256xf32>
    %399 = vector.shape_cast %398 : vector<1x16x256xf32> to vector<16x256xf32>
    %400 = vector.extract_strided_slice %3 {offsets = [3, 0, 0], sizes = [1, 16, 256], strides = [1, 1, 1]} : vector<16x16x256xf32> to vector<1x16x256xf32>
    %401 = vector.shape_cast %400 : vector<1x16x256xf32> to vector<16x256xf32>
    %402 = vector.broadcast %395 : vector<1x256xf32> to vector<16x256xf32>
    %403 = arith.mulf %402, %399 : vector<16x256xf32>
    %404 = arith.addf %387, %403 : vector<16x256xf32>
    %405 = vector.broadcast %397 : vector<1x256xf32> to vector<16x256xf32>
    %406 = arith.mulf %405, %401 : vector<16x256xf32>
    %407 = arith.subf %404, %406 : vector<16x256xf32>
    %408 = vector.broadcast %395 : vector<1x256xf32> to vector<16x256xf32>
    %409 = arith.mulf %408, %401 : vector<16x256xf32>
    %410 = arith.addf %393, %409 : vector<16x256xf32>
    %411 = vector.broadcast %397 : vector<1x256xf32> to vector<16x256xf32>
    %412 = arith.mulf %411, %399 : vector<16x256xf32>
    %413 = arith.addf %410, %412 : vector<16x256xf32>
    %414 = vector.extract_strided_slice %0 {offsets = [1, 4, 0], sizes = [1, 1, 256], strides = [1, 1, 1]} : vector<2x16x256xf32> to vector<1x1x256xf32>
    %415 = vector.shape_cast %414 : vector<1x1x256xf32> to vector<1x256xf32>
    %416 = vector.extract_strided_slice %1 {offsets = [1, 4, 0], sizes = [1, 1, 256], strides = [1, 1, 1]} : vector<2x16x256xf32> to vector<1x1x256xf32>
    %417 = vector.shape_cast %416 : vector<1x1x256xf32> to vector<1x256xf32>
    %418 = vector.extract_strided_slice %2 {offsets = [4, 0, 0], sizes = [1, 16, 256], strides = [1, 1, 1]} : vector<16x16x256xf32> to vector<1x16x256xf32>
    %419 = vector.shape_cast %418 : vector<1x16x256xf32> to vector<16x256xf32>
    %420 = vector.extract_strided_slice %3 {offsets = [4, 0, 0], sizes = [1, 16, 256], strides = [1, 1, 1]} : vector<16x16x256xf32> to vector<1x16x256xf32>
    %421 = vector.shape_cast %420 : vector<1x16x256xf32> to vector<16x256xf32>
    %422 = vector.broadcast %415 : vector<1x256xf32> to vector<16x256xf32>
    %423 = arith.mulf %422, %419 : vector<16x256xf32>
    %424 = arith.addf %407, %423 : vector<16x256xf32>
    %425 = vector.broadcast %417 : vector<1x256xf32> to vector<16x256xf32>
    %426 = arith.mulf %425, %421 : vector<16x256xf32>
    %427 = arith.subf %424, %426 : vector<16x256xf32>
    %428 = vector.broadcast %415 : vector<1x256xf32> to vector<16x256xf32>
    %429 = arith.mulf %428, %421 : vector<16x256xf32>
    %430 = arith.addf %413, %429 : vector<16x256xf32>
    %431 = vector.broadcast %417 : vector<1x256xf32> to vector<16x256xf32>
    %432 = arith.mulf %431, %419 : vector<16x256xf32>
    %433 = arith.addf %430, %432 : vector<16x256xf32>
    %434 = vector.extract_strided_slice %0 {offsets = [1, 5, 0], sizes = [1, 1, 256], strides = [1, 1, 1]} : vector<2x16x256xf32> to vector<1x1x256xf32>
    %435 = vector.shape_cast %434 : vector<1x1x256xf32> to vector<1x256xf32>
    %436 = vector.extract_strided_slice %1 {offsets = [1, 5, 0], sizes = [1, 1, 256], strides = [1, 1, 1]} : vector<2x16x256xf32> to vector<1x1x256xf32>
    %437 = vector.shape_cast %436 : vector<1x1x256xf32> to vector<1x256xf32>
    %438 = vector.extract_strided_slice %2 {offsets = [5, 0, 0], sizes = [1, 16, 256], strides = [1, 1, 1]} : vector<16x16x256xf32> to vector<1x16x256xf32>
    %439 = vector.shape_cast %438 : vector<1x16x256xf32> to vector<16x256xf32>
    %440 = vector.extract_strided_slice %3 {offsets = [5, 0, 0], sizes = [1, 16, 256], strides = [1, 1, 1]} : vector<16x16x256xf32> to vector<1x16x256xf32>
    %441 = vector.shape_cast %440 : vector<1x16x256xf32> to vector<16x256xf32>
    %442 = vector.broadcast %435 : vector<1x256xf32> to vector<16x256xf32>
    %443 = arith.mulf %442, %439 : vector<16x256xf32>
    %444 = arith.addf %427, %443 : vector<16x256xf32>
    %445 = vector.broadcast %437 : vector<1x256xf32> to vector<16x256xf32>
    %446 = arith.mulf %445, %441 : vector<16x256xf32>
    %447 = arith.subf %444, %446 : vector<16x256xf32>
    %448 = vector.broadcast %435 : vector<1x256xf32> to vector<16x256xf32>
    %449 = arith.mulf %448, %441 : vector<16x256xf32>
    %450 = arith.addf %433, %449 : vector<16x256xf32>
    %451 = vector.broadcast %437 : vector<1x256xf32> to vector<16x256xf32>
    %452 = arith.mulf %451, %439 : vector<16x256xf32>
    %453 = arith.addf %450, %452 : vector<16x256xf32>
    %454 = vector.extract_strided_slice %0 {offsets = [1, 6, 0], sizes = [1, 1, 256], strides = [1, 1, 1]} : vector<2x16x256xf32> to vector<1x1x256xf32>
    %455 = vector.shape_cast %454 : vector<1x1x256xf32> to vector<1x256xf32>
    %456 = vector.extract_strided_slice %1 {offsets = [1, 6, 0], sizes = [1, 1, 256], strides = [1, 1, 1]} : vector<2x16x256xf32> to vector<1x1x256xf32>
    %457 = vector.shape_cast %456 : vector<1x1x256xf32> to vector<1x256xf32>
    %458 = vector.extract_strided_slice %2 {offsets = [6, 0, 0], sizes = [1, 16, 256], strides = [1, 1, 1]} : vector<16x16x256xf32> to vector<1x16x256xf32>
    %459 = vector.shape_cast %458 : vector<1x16x256xf32> to vector<16x256xf32>
    %460 = vector.extract_strided_slice %3 {offsets = [6, 0, 0], sizes = [1, 16, 256], strides = [1, 1, 1]} : vector<16x16x256xf32> to vector<1x16x256xf32>
    %461 = vector.shape_cast %460 : vector<1x16x256xf32> to vector<16x256xf32>
    %462 = vector.broadcast %455 : vector<1x256xf32> to vector<16x256xf32>
    %463 = arith.mulf %462, %459 : vector<16x256xf32>
    %464 = arith.addf %447, %463 : vector<16x256xf32>
    %465 = vector.broadcast %457 : vector<1x256xf32> to vector<16x256xf32>
    %466 = arith.mulf %465, %461 : vector<16x256xf32>
    %467 = arith.subf %464, %466 : vector<16x256xf32>
    %468 = vector.broadcast %455 : vector<1x256xf32> to vector<16x256xf32>
    %469 = arith.mulf %468, %461 : vector<16x256xf32>
    %470 = arith.addf %453, %469 : vector<16x256xf32>
    %471 = vector.broadcast %457 : vector<1x256xf32> to vector<16x256xf32>
    %472 = arith.mulf %471, %459 : vector<16x256xf32>
    %473 = arith.addf %470, %472 : vector<16x256xf32>
    %474 = vector.extract_strided_slice %0 {offsets = [1, 7, 0], sizes = [1, 1, 256], strides = [1, 1, 1]} : vector<2x16x256xf32> to vector<1x1x256xf32>
    %475 = vector.shape_cast %474 : vector<1x1x256xf32> to vector<1x256xf32>
    %476 = vector.extract_strided_slice %1 {offsets = [1, 7, 0], sizes = [1, 1, 256], strides = [1, 1, 1]} : vector<2x16x256xf32> to vector<1x1x256xf32>
    %477 = vector.shape_cast %476 : vector<1x1x256xf32> to vector<1x256xf32>
    %478 = vector.extract_strided_slice %2 {offsets = [7, 0, 0], sizes = [1, 16, 256], strides = [1, 1, 1]} : vector<16x16x256xf32> to vector<1x16x256xf32>
    %479 = vector.shape_cast %478 : vector<1x16x256xf32> to vector<16x256xf32>
    %480 = vector.extract_strided_slice %3 {offsets = [7, 0, 0], sizes = [1, 16, 256], strides = [1, 1, 1]} : vector<16x16x256xf32> to vector<1x16x256xf32>
    %481 = vector.shape_cast %480 : vector<1x16x256xf32> to vector<16x256xf32>
    %482 = vector.broadcast %475 : vector<1x256xf32> to vector<16x256xf32>
    %483 = arith.mulf %482, %479 : vector<16x256xf32>
    %484 = arith.addf %467, %483 : vector<16x256xf32>
    %485 = vector.broadcast %477 : vector<1x256xf32> to vector<16x256xf32>
    %486 = arith.mulf %485, %481 : vector<16x256xf32>
    %487 = arith.subf %484, %486 : vector<16x256xf32>
    %488 = vector.broadcast %475 : vector<1x256xf32> to vector<16x256xf32>
    %489 = arith.mulf %488, %481 : vector<16x256xf32>
    %490 = arith.addf %473, %489 : vector<16x256xf32>
    %491 = vector.broadcast %477 : vector<1x256xf32> to vector<16x256xf32>
    %492 = arith.mulf %491, %479 : vector<16x256xf32>
    %493 = arith.addf %490, %492 : vector<16x256xf32>
    %494 = vector.extract_strided_slice %0 {offsets = [1, 8, 0], sizes = [1, 1, 256], strides = [1, 1, 1]} : vector<2x16x256xf32> to vector<1x1x256xf32>
    %495 = vector.shape_cast %494 : vector<1x1x256xf32> to vector<1x256xf32>
    %496 = vector.extract_strided_slice %1 {offsets = [1, 8, 0], sizes = [1, 1, 256], strides = [1, 1, 1]} : vector<2x16x256xf32> to vector<1x1x256xf32>
    %497 = vector.shape_cast %496 : vector<1x1x256xf32> to vector<1x256xf32>
    %498 = vector.extract_strided_slice %2 {offsets = [8, 0, 0], sizes = [1, 16, 256], strides = [1, 1, 1]} : vector<16x16x256xf32> to vector<1x16x256xf32>
    %499 = vector.shape_cast %498 : vector<1x16x256xf32> to vector<16x256xf32>
    %500 = vector.extract_strided_slice %3 {offsets = [8, 0, 0], sizes = [1, 16, 256], strides = [1, 1, 1]} : vector<16x16x256xf32> to vector<1x16x256xf32>
    %501 = vector.shape_cast %500 : vector<1x16x256xf32> to vector<16x256xf32>
    %502 = vector.broadcast %495 : vector<1x256xf32> to vector<16x256xf32>
    %503 = arith.mulf %502, %499 : vector<16x256xf32>
    %504 = arith.addf %487, %503 : vector<16x256xf32>
    %505 = vector.broadcast %497 : vector<1x256xf32> to vector<16x256xf32>
    %506 = arith.mulf %505, %501 : vector<16x256xf32>
    %507 = arith.subf %504, %506 : vector<16x256xf32>
    %508 = vector.broadcast %495 : vector<1x256xf32> to vector<16x256xf32>
    %509 = arith.mulf %508, %501 : vector<16x256xf32>
    %510 = arith.addf %493, %509 : vector<16x256xf32>
    %511 = vector.broadcast %497 : vector<1x256xf32> to vector<16x256xf32>
    %512 = arith.mulf %511, %499 : vector<16x256xf32>
    %513 = arith.addf %510, %512 : vector<16x256xf32>
    %514 = vector.extract_strided_slice %0 {offsets = [1, 9, 0], sizes = [1, 1, 256], strides = [1, 1, 1]} : vector<2x16x256xf32> to vector<1x1x256xf32>
    %515 = vector.shape_cast %514 : vector<1x1x256xf32> to vector<1x256xf32>
    %516 = vector.extract_strided_slice %1 {offsets = [1, 9, 0], sizes = [1, 1, 256], strides = [1, 1, 1]} : vector<2x16x256xf32> to vector<1x1x256xf32>
    %517 = vector.shape_cast %516 : vector<1x1x256xf32> to vector<1x256xf32>
    %518 = vector.extract_strided_slice %2 {offsets = [9, 0, 0], sizes = [1, 16, 256], strides = [1, 1, 1]} : vector<16x16x256xf32> to vector<1x16x256xf32>
    %519 = vector.shape_cast %518 : vector<1x16x256xf32> to vector<16x256xf32>
    %520 = vector.extract_strided_slice %3 {offsets = [9, 0, 0], sizes = [1, 16, 256], strides = [1, 1, 1]} : vector<16x16x256xf32> to vector<1x16x256xf32>
    %521 = vector.shape_cast %520 : vector<1x16x256xf32> to vector<16x256xf32>
    %522 = vector.broadcast %515 : vector<1x256xf32> to vector<16x256xf32>
    %523 = arith.mulf %522, %519 : vector<16x256xf32>
    %524 = arith.addf %507, %523 : vector<16x256xf32>
    %525 = vector.broadcast %517 : vector<1x256xf32> to vector<16x256xf32>
    %526 = arith.mulf %525, %521 : vector<16x256xf32>
    %527 = arith.subf %524, %526 : vector<16x256xf32>
    %528 = vector.broadcast %515 : vector<1x256xf32> to vector<16x256xf32>
    %529 = arith.mulf %528, %521 : vector<16x256xf32>
    %530 = arith.addf %513, %529 : vector<16x256xf32>
    %531 = vector.broadcast %517 : vector<1x256xf32> to vector<16x256xf32>
    %532 = arith.mulf %531, %519 : vector<16x256xf32>
    %533 = arith.addf %530, %532 : vector<16x256xf32>
    %534 = vector.extract_strided_slice %0 {offsets = [1, 10, 0], sizes = [1, 1, 256], strides = [1, 1, 1]} : vector<2x16x256xf32> to vector<1x1x256xf32>
    %535 = vector.shape_cast %534 : vector<1x1x256xf32> to vector<1x256xf32>
    %536 = vector.extract_strided_slice %1 {offsets = [1, 10, 0], sizes = [1, 1, 256], strides = [1, 1, 1]} : vector<2x16x256xf32> to vector<1x1x256xf32>
    %537 = vector.shape_cast %536 : vector<1x1x256xf32> to vector<1x256xf32>
    %538 = vector.extract_strided_slice %2 {offsets = [10, 0, 0], sizes = [1, 16, 256], strides = [1, 1, 1]} : vector<16x16x256xf32> to vector<1x16x256xf32>
    %539 = vector.shape_cast %538 : vector<1x16x256xf32> to vector<16x256xf32>
    %540 = vector.extract_strided_slice %3 {offsets = [10, 0, 0], sizes = [1, 16, 256], strides = [1, 1, 1]} : vector<16x16x256xf32> to vector<1x16x256xf32>
    %541 = vector.shape_cast %540 : vector<1x16x256xf32> to vector<16x256xf32>
    %542 = vector.broadcast %535 : vector<1x256xf32> to vector<16x256xf32>
    %543 = arith.mulf %542, %539 : vector<16x256xf32>
    %544 = arith.addf %527, %543 : vector<16x256xf32>
    %545 = vector.broadcast %537 : vector<1x256xf32> to vector<16x256xf32>
    %546 = arith.mulf %545, %541 : vector<16x256xf32>
    %547 = arith.subf %544, %546 : vector<16x256xf32>
    %548 = vector.broadcast %535 : vector<1x256xf32> to vector<16x256xf32>
    %549 = arith.mulf %548, %541 : vector<16x256xf32>
    %550 = arith.addf %533, %549 : vector<16x256xf32>
    %551 = vector.broadcast %537 : vector<1x256xf32> to vector<16x256xf32>
    %552 = arith.mulf %551, %539 : vector<16x256xf32>
    %553 = arith.addf %550, %552 : vector<16x256xf32>
    %554 = vector.extract_strided_slice %0 {offsets = [1, 11, 0], sizes = [1, 1, 256], strides = [1, 1, 1]} : vector<2x16x256xf32> to vector<1x1x256xf32>
    %555 = vector.shape_cast %554 : vector<1x1x256xf32> to vector<1x256xf32>
    %556 = vector.extract_strided_slice %1 {offsets = [1, 11, 0], sizes = [1, 1, 256], strides = [1, 1, 1]} : vector<2x16x256xf32> to vector<1x1x256xf32>
    %557 = vector.shape_cast %556 : vector<1x1x256xf32> to vector<1x256xf32>
    %558 = vector.extract_strided_slice %2 {offsets = [11, 0, 0], sizes = [1, 16, 256], strides = [1, 1, 1]} : vector<16x16x256xf32> to vector<1x16x256xf32>
    %559 = vector.shape_cast %558 : vector<1x16x256xf32> to vector<16x256xf32>
    %560 = vector.extract_strided_slice %3 {offsets = [11, 0, 0], sizes = [1, 16, 256], strides = [1, 1, 1]} : vector<16x16x256xf32> to vector<1x16x256xf32>
    %561 = vector.shape_cast %560 : vector<1x16x256xf32> to vector<16x256xf32>
    %562 = vector.broadcast %555 : vector<1x256xf32> to vector<16x256xf32>
    %563 = arith.mulf %562, %559 : vector<16x256xf32>
    %564 = arith.addf %547, %563 : vector<16x256xf32>
    %565 = vector.broadcast %557 : vector<1x256xf32> to vector<16x256xf32>
    %566 = arith.mulf %565, %561 : vector<16x256xf32>
    %567 = arith.subf %564, %566 : vector<16x256xf32>
    %568 = vector.broadcast %555 : vector<1x256xf32> to vector<16x256xf32>
    %569 = arith.mulf %568, %561 : vector<16x256xf32>
    %570 = arith.addf %553, %569 : vector<16x256xf32>
    %571 = vector.broadcast %557 : vector<1x256xf32> to vector<16x256xf32>
    %572 = arith.mulf %571, %559 : vector<16x256xf32>
    %573 = arith.addf %570, %572 : vector<16x256xf32>
    %574 = vector.extract_strided_slice %0 {offsets = [1, 12, 0], sizes = [1, 1, 256], strides = [1, 1, 1]} : vector<2x16x256xf32> to vector<1x1x256xf32>
    %575 = vector.shape_cast %574 : vector<1x1x256xf32> to vector<1x256xf32>
    %576 = vector.extract_strided_slice %1 {offsets = [1, 12, 0], sizes = [1, 1, 256], strides = [1, 1, 1]} : vector<2x16x256xf32> to vector<1x1x256xf32>
    %577 = vector.shape_cast %576 : vector<1x1x256xf32> to vector<1x256xf32>
    %578 = vector.extract_strided_slice %2 {offsets = [12, 0, 0], sizes = [1, 16, 256], strides = [1, 1, 1]} : vector<16x16x256xf32> to vector<1x16x256xf32>
    %579 = vector.shape_cast %578 : vector<1x16x256xf32> to vector<16x256xf32>
    %580 = vector.extract_strided_slice %3 {offsets = [12, 0, 0], sizes = [1, 16, 256], strides = [1, 1, 1]} : vector<16x16x256xf32> to vector<1x16x256xf32>
    %581 = vector.shape_cast %580 : vector<1x16x256xf32> to vector<16x256xf32>
    %582 = vector.broadcast %575 : vector<1x256xf32> to vector<16x256xf32>
    %583 = arith.mulf %582, %579 : vector<16x256xf32>
    %584 = arith.addf %567, %583 : vector<16x256xf32>
    %585 = vector.broadcast %577 : vector<1x256xf32> to vector<16x256xf32>
    %586 = arith.mulf %585, %581 : vector<16x256xf32>
    %587 = arith.subf %584, %586 : vector<16x256xf32>
    %588 = vector.broadcast %575 : vector<1x256xf32> to vector<16x256xf32>
    %589 = arith.mulf %588, %581 : vector<16x256xf32>
    %590 = arith.addf %573, %589 : vector<16x256xf32>
    %591 = vector.broadcast %577 : vector<1x256xf32> to vector<16x256xf32>
    %592 = arith.mulf %591, %579 : vector<16x256xf32>
    %593 = arith.addf %590, %592 : vector<16x256xf32>
    %594 = vector.extract_strided_slice %0 {offsets = [1, 13, 0], sizes = [1, 1, 256], strides = [1, 1, 1]} : vector<2x16x256xf32> to vector<1x1x256xf32>
    %595 = vector.shape_cast %594 : vector<1x1x256xf32> to vector<1x256xf32>
    %596 = vector.extract_strided_slice %1 {offsets = [1, 13, 0], sizes = [1, 1, 256], strides = [1, 1, 1]} : vector<2x16x256xf32> to vector<1x1x256xf32>
    %597 = vector.shape_cast %596 : vector<1x1x256xf32> to vector<1x256xf32>
    %598 = vector.extract_strided_slice %2 {offsets = [13, 0, 0], sizes = [1, 16, 256], strides = [1, 1, 1]} : vector<16x16x256xf32> to vector<1x16x256xf32>
    %599 = vector.shape_cast %598 : vector<1x16x256xf32> to vector<16x256xf32>
    %600 = vector.extract_strided_slice %3 {offsets = [13, 0, 0], sizes = [1, 16, 256], strides = [1, 1, 1]} : vector<16x16x256xf32> to vector<1x16x256xf32>
    %601 = vector.shape_cast %600 : vector<1x16x256xf32> to vector<16x256xf32>
    %602 = vector.broadcast %595 : vector<1x256xf32> to vector<16x256xf32>
    %603 = arith.mulf %602, %599 : vector<16x256xf32>
    %604 = arith.addf %587, %603 : vector<16x256xf32>
    %605 = vector.broadcast %597 : vector<1x256xf32> to vector<16x256xf32>
    %606 = arith.mulf %605, %601 : vector<16x256xf32>
    %607 = arith.subf %604, %606 : vector<16x256xf32>
    %608 = vector.broadcast %595 : vector<1x256xf32> to vector<16x256xf32>
    %609 = arith.mulf %608, %601 : vector<16x256xf32>
    %610 = arith.addf %593, %609 : vector<16x256xf32>
    %611 = vector.broadcast %597 : vector<1x256xf32> to vector<16x256xf32>
    %612 = arith.mulf %611, %599 : vector<16x256xf32>
    %613 = arith.addf %610, %612 : vector<16x256xf32>
    %614 = vector.extract_strided_slice %0 {offsets = [1, 14, 0], sizes = [1, 1, 256], strides = [1, 1, 1]} : vector<2x16x256xf32> to vector<1x1x256xf32>
    %615 = vector.shape_cast %614 : vector<1x1x256xf32> to vector<1x256xf32>
    %616 = vector.extract_strided_slice %1 {offsets = [1, 14, 0], sizes = [1, 1, 256], strides = [1, 1, 1]} : vector<2x16x256xf32> to vector<1x1x256xf32>
    %617 = vector.shape_cast %616 : vector<1x1x256xf32> to vector<1x256xf32>
    %618 = vector.extract_strided_slice %2 {offsets = [14, 0, 0], sizes = [1, 16, 256], strides = [1, 1, 1]} : vector<16x16x256xf32> to vector<1x16x256xf32>
    %619 = vector.shape_cast %618 : vector<1x16x256xf32> to vector<16x256xf32>
    %620 = vector.extract_strided_slice %3 {offsets = [14, 0, 0], sizes = [1, 16, 256], strides = [1, 1, 1]} : vector<16x16x256xf32> to vector<1x16x256xf32>
    %621 = vector.shape_cast %620 : vector<1x16x256xf32> to vector<16x256xf32>
    %622 = vector.broadcast %615 : vector<1x256xf32> to vector<16x256xf32>
    %623 = arith.mulf %622, %619 : vector<16x256xf32>
    %624 = arith.addf %607, %623 : vector<16x256xf32>
    %625 = vector.broadcast %617 : vector<1x256xf32> to vector<16x256xf32>
    %626 = arith.mulf %625, %621 : vector<16x256xf32>
    %627 = arith.subf %624, %626 : vector<16x256xf32>
    %628 = vector.broadcast %615 : vector<1x256xf32> to vector<16x256xf32>
    %629 = arith.mulf %628, %621 : vector<16x256xf32>
    %630 = arith.addf %613, %629 : vector<16x256xf32>
    %631 = vector.broadcast %617 : vector<1x256xf32> to vector<16x256xf32>
    %632 = arith.mulf %631, %619 : vector<16x256xf32>
    %633 = arith.addf %630, %632 : vector<16x256xf32>
    %634 = vector.extract_strided_slice %0 {offsets = [1, 15, 0], sizes = [1, 1, 256], strides = [1, 1, 1]} : vector<2x16x256xf32> to vector<1x1x256xf32>
    %635 = vector.shape_cast %634 : vector<1x1x256xf32> to vector<1x256xf32>
    %636 = vector.extract_strided_slice %1 {offsets = [1, 15, 0], sizes = [1, 1, 256], strides = [1, 1, 1]} : vector<2x16x256xf32> to vector<1x1x256xf32>
    %637 = vector.shape_cast %636 : vector<1x1x256xf32> to vector<1x256xf32>
    %638 = vector.extract_strided_slice %2 {offsets = [15, 0, 0], sizes = [1, 16, 256], strides = [1, 1, 1]} : vector<16x16x256xf32> to vector<1x16x256xf32>
    %639 = vector.shape_cast %638 : vector<1x16x256xf32> to vector<16x256xf32>
    %640 = vector.extract_strided_slice %3 {offsets = [15, 0, 0], sizes = [1, 16, 256], strides = [1, 1, 1]} : vector<16x16x256xf32> to vector<1x16x256xf32>
    %641 = vector.shape_cast %640 : vector<1x16x256xf32> to vector<16x256xf32>
    %642 = vector.broadcast %635 : vector<1x256xf32> to vector<16x256xf32>
    %643 = arith.mulf %642, %639 : vector<16x256xf32>
    %644 = arith.addf %627, %643 : vector<16x256xf32>
    %645 = vector.broadcast %637 : vector<1x256xf32> to vector<16x256xf32>
    %646 = arith.mulf %645, %641 : vector<16x256xf32>
    %647 = arith.subf %644, %646 : vector<16x256xf32>
    %648 = vector.broadcast %635 : vector<1x256xf32> to vector<16x256xf32>
    %649 = arith.mulf %648, %641 : vector<16x256xf32>
    %650 = arith.addf %633, %649 : vector<16x256xf32>
    %651 = vector.broadcast %637 : vector<1x256xf32> to vector<16x256xf32>
    %652 = arith.mulf %651, %639 : vector<16x256xf32>
    %653 = arith.addf %650, %652 : vector<16x256xf32>
    %c1 = arith.constant 1 : index
    %c0_20 = arith.constant 0 : index
    %c0_21 = arith.constant 0 : index
    %654 = vector.load %arg5[%c1, %c0_20, %c0_21] : memref<2x16x256xf32, #tpu.memory_space<vmem>>, vector<1x16x256xf32>
    %655 = vector.shape_cast %654 : vector<1x16x256xf32> to vector<16x256xf32>
    %656 = vector.shape_cast %647 : vector<16x256xf32> to vector<1x16x256xf32>
    tpu.vector_store %arg5[%c1, %c0_20, %c0_21], %656 {strides = array<i32>} : memref<2x16x256xf32, #tpu.memory_space<vmem>>, vector<1x16x256xf32>,
    %c1_22 = arith.constant 1 : index
    %c0_23 = arith.constant 0 : index
    %c0_24 = arith.constant 0 : index
    %657 = vector.load %arg6[%c1_22, %c0_23, %c0_24] : memref<2x16x256xf32, #tpu.memory_space<vmem>>, vector<1x16x256xf32>
    %658 = vector.shape_cast %657 : vector<1x16x256xf32> to vector<16x256xf32>
    %659 = vector.shape_cast %653 : vector<16x256xf32> to vector<1x16x256xf32>
    tpu.vector_store %arg6[%c1_22, %c0_23, %c0_24], %659 {strides = array<i32>} : memref<2x16x256xf32, #tpu.memory_space<vmem>>, vector<1x16x256xf32>,
    return
  }
  func.func @transform_0(%arg0: i32) -> (i32, i32, i32) {
    %c0_i32 = arith.constant 0 : i32
    %c0_i32_0 = arith.constant 0 : i32
    %c0_i32_1 = arith.constant 0 : i32
    %c0_i32_2 = arith.constant 0 : i32
    return %c0_i32, %c0_i32_0, %c0_i32_1 : i32, i32, i32
  }
  func.func @transform_1(%arg0: i32) -> (i32, i32, i32) {
    %c0_i32 = arith.constant 0 : i32
    %c0_i32_0 = arith.constant 0 : i32
    %c0_i32_1 = arith.constant 0 : i32
    %c0_i32_2 = arith.constant 0 : i32
    return %c0_i32, %c0_i32_0, %c0_i32_1 : i32, i32, i32
  }
  func.func @transform_2(%arg0: i32) -> (i32, i32, i32) {
    %c0_i32 = arith.constant 0 : i32
    %c0_i32_0 = arith.constant 0 : i32
    %c0_i32_1 = arith.constant 0 : i32
    %c0_i32_2 = arith.constant 0 : i32
    return %c0_i32, %c0_i32_0, %c0_i32_1 : i32, i32, i32
  }
  func.func @transform_3(%arg0: i32) -> (i32, i32, i32) {
    %c0_i32 = arith.constant 0 : i32
    %c0_i32_0 = arith.constant 0 : i32
    %c0_i32_1 = arith.constant 0 : i32
    %c0_i32_2 = arith.constant 0 : i32
    return %c0_i32, %c0_i32_0, %c0_i32_1 : i32, i32, i32
  }
  func.func @transform_4(%arg0: i32) -> (i32, i32, i32) {
    %c0_i32 = arith.constant 0 : i32
    %c0_i32_0 = arith.constant 0 : i32
    %c0_i32_1 = arith.constant 0 : i32
    %c0_i32_2 = arith.constant 0 : i32
    return %c0_i32, %c0_i32_0, %c0_i32_1 : i32, i32, i32
  }
  func.func @transform_5(%arg0: i32) -> (i32, i32, i32) {
    %c0_i32 = arith.constant 0 : i32
    %c0_i32_0 = arith.constant 0 : i32
    %c0_i32_1 = arith.constant 0 : i32
    %c0_i32_2 = arith.constant 0 : i32
    return %c0_i32, %c0_i32_0, %c0_i32_1 : i32, i32, i32
  }
}

module attributes {stable_mosaic.version = 11 : i64} {
  func.func @kernel(%arg0: i32, %arg1: memref<16x1024xf32, #tpu.memory_space<vmem>>, %arg2: memref<16x1024xf32, #tpu.memory_space<vmem>>, %arg3: memref<16x16xf32, #tpu.memory_space<vmem>>, %arg4: memref<16x1xf32, #tpu.memory_space<vmem>>, %arg5: memref<16x1xf32, #tpu.memory_space<vmem>>, %arg6: memref<16x1xf32, #tpu.memory_space<vmem>>, %arg7: memref<16x1024xf32, #tpu.memory_space<vmem>>) attributes {dimension_semantics = [#tpu.dimension_semantics<arbitrary>], iteration_bounds = array<i64: 1>, scalar_prefetch = 0 : i64, scratch_operands = 0 : i64, tpu.core_type = #tpu.core_type<tc>, window_params = [{pipeline_mode = #tpu.pipeline_mode<synchronous>, transform_indices = @transform_0, window_bounds = array<i64: 16, 1024>}, {pipeline_mode = #tpu.pipeline_mode<synchronous>, transform_indices = @transform_1, window_bounds = array<i64: 16, 1024>}, {pipeline_mode = #tpu.pipeline_mode<synchronous>, transform_indices = @transform_2, window_bounds = array<i64: 16, 16>}, {pipeline_mode = #tpu.pipeline_mode<synchronous>, transform_indices = @transform_3, window_bounds = array<i64: 16, 1>}, {pipeline_mode = #tpu.pipeline_mode<synchronous>, transform_indices = @transform_4, window_bounds = array<i64: 16, 1>}, {pipeline_mode = #tpu.pipeline_mode<synchronous>, transform_indices = @transform_5, window_bounds = array<i64: 16, 1>}, {pipeline_mode = #tpu.pipeline_mode<synchronous>, transform_indices = @transform_6, window_bounds = array<i64: 16, 1024>}]} {
    %c0 = arith.constant 0 : index
    %c0_0 = arith.constant 0 : index
    %0 = vector.load %arg3[%c0, %c0_0] : memref<16x16xf32, #tpu.memory_space<vmem>>, vector<16x16xf32>
    %c0_1 = arith.constant 0 : index
    %c0_2 = arith.constant 0 : index
    %1 = vector.load %arg2[%c0_1, %c0_2] : memref<16x1024xf32, #tpu.memory_space<vmem>>, vector<16x1024xf32>
    %cst = arith.constant dense<0.000000e+00> : vector<16x1024xf32>
    %2 = tpu.matmul %0, %1, %cst {dimension_numbers = #tpu.dot_dimension_numbers<[1], [0], [0], [1], [0, 0, 1, 1], [], []>} : vector<16x16xf32>, vector<16x1024xf32>, vector<16x1024xf32> -> vector<16x1024xf32>
    %c0_3 = arith.constant 0 : index
    %c0_4 = arith.constant 0 : index
    %3 = vector.load %arg4[%c0_3, %c0_4] : memref<16x1xf32, #tpu.memory_space<vmem>>, vector<16x1xf32>
    %4 = vector.broadcast %3 : vector<16x1xf32> to vector<16x1024xf32>
    %5 = arith.addf %2, %4 : vector<16x1024xf32>
    %c0_5 = arith.constant 0 : index
    %c0_6 = arith.constant 0 : index
    %6 = vector.load %arg1[%c0_5, %c0_6] : memref<16x1024xf32, #tpu.memory_space<vmem>>, vector<16x1024xf32>
    %7 = arith.addf %6, %5 : vector<16x1024xf32>
    %cst_7 = arith.constant dense<0.000000e+00> : vector<16xf32>
    %8 = vector.multi_reduction <add>, %7, %cst_7 [1] : vector<16x1024xf32> to vector<16xf32>
    %9 = vector.shape_cast %8 : vector<16xf32> to vector<16x1xf32>
    %cst_8 = arith.constant 9.765625E-4 : f32
    %10 = vector.broadcast %cst_8 : f32 to vector<16x1xf32>
    %11 = arith.mulf %9, %10 : vector<16x1xf32>
    %12 = arith.mulf %7, %7 : vector<16x1024xf32>
    %cst_9 = arith.constant dense<0.000000e+00> : vector<16xf32>
    %13 = vector.multi_reduction <add>, %12, %cst_9 [1] : vector<16x1024xf32> to vector<16xf32>
    %14 = vector.shape_cast %13 : vector<16xf32> to vector<16x1xf32>
    %cst_10 = arith.constant 9.765625E-4 : f32
    %15 = vector.broadcast %cst_10 : f32 to vector<16x1xf32>
    %16 = arith.mulf %14, %15 : vector<16x1xf32>
    %17 = arith.mulf %11, %11 : vector<16x1xf32>
    %18 = arith.subf %16, %17 : vector<16x1xf32>
    %cst_11 = arith.constant 0.000000e+00 : f32
    %19 = vector.broadcast %cst_11 : f32 to vector<16x1xf32>
    %20 = arith.maximumf %18, %19 : vector<16x1xf32>
    %cst_12 = arith.constant 9.99999974E-6 : f32
    %21 = vector.broadcast %cst_12 : f32 to vector<16x1xf32>
    %22 = arith.addf %20, %21 : vector<16x1xf32>
    %23 = math.rsqrt %22 : vector<16x1xf32>
    %c0_13 = arith.constant 0 : index
    %c0_14 = arith.constant 0 : index
    %24 = vector.load %arg5[%c0_13, %c0_14] : memref<16x1xf32, #tpu.memory_space<vmem>>, vector<16x1xf32>
    %25 = arith.mulf %24, %23 : vector<16x1xf32>
    %c0_15 = arith.constant 0 : index
    %c0_16 = arith.constant 0 : index
    %26 = vector.load %arg6[%c0_15, %c0_16] : memref<16x1xf32, #tpu.memory_space<vmem>>, vector<16x1xf32>
    %27 = arith.mulf %11, %25 : vector<16x1xf32>
    %28 = arith.subf %26, %27 : vector<16x1xf32>
    %29 = vector.broadcast %25 : vector<16x1xf32> to vector<16x1024xf32>
    %30 = arith.mulf %7, %29 : vector<16x1024xf32>
    %31 = vector.broadcast %28 : vector<16x1xf32> to vector<16x1024xf32>
    %32 = arith.addf %30, %31 : vector<16x1024xf32>
    %cst_17 = arith.constant 0.000000e+00 : f32
    %33 = vector.broadcast %cst_17 : f32 to vector<16x1024xf32>
    %34 = arith.maximumf %32, %33 : vector<16x1024xf32>
    %c0_18 = arith.constant 0 : index
    %c0_19 = arith.constant 0 : index
    %35 = vector.load %arg7[%c0_18, %c0_19] : memref<16x1024xf32, #tpu.memory_space<vmem>>, vector<16x1024xf32>
    tpu.vector_store %arg7[%c0_18, %c0_19], %34 {strides = array<i32>} : memref<16x1024xf32, #tpu.memory_space<vmem>>, vector<16x1024xf32>,
    return
  }
  func.func @transform_0(%arg0: i32) -> (i32, i32) {
    %c0_i32 = arith.constant 0 : i32
    %c0_i32_0 = arith.constant 0 : i32
    %c0_i32_1 = arith.constant 0 : i32
    return %c0_i32, %c0_i32_0 : i32, i32
  }
  func.func @transform_1(%arg0: i32) -> (i32, i32) {
    %c0_i32 = arith.constant 0 : i32
    %c0_i32_0 = arith.constant 0 : i32
    %c0_i32_1 = arith.constant 0 : i32
    return %c0_i32, %c0_i32_0 : i32, i32
  }
  func.func @transform_2(%arg0: i32) -> (i32, i32) {
    %c0_i32 = arith.constant 0 : i32
    %c0_i32_0 = arith.constant 0 : i32
    %c0_i32_1 = arith.constant 0 : i32
    return %c0_i32, %c0_i32_0 : i32, i32
  }
  func.func @transform_3(%arg0: i32) -> (i32, i32) {
    %c0_i32 = arith.constant 0 : i32
    %c0_i32_0 = arith.constant 0 : i32
    %c0_i32_1 = arith.constant 0 : i32
    return %c0_i32, %c0_i32_0 : i32, i32
  }
  func.func @transform_4(%arg0: i32) -> (i32, i32) {
    %c0_i32 = arith.constant 0 : i32
    %c0_i32_0 = arith.constant 0 : i32
    %c0_i32_1 = arith.constant 0 : i32
    return %c0_i32, %c0_i32_0 : i32, i32
  }
  func.func @transform_5(%arg0: i32) -> (i32, i32) {
    %c0_i32 = arith.constant 0 : i32
    %c0_i32_0 = arith.constant 0 : i32
    %c0_i32_1 = arith.constant 0 : i32
    return %c0_i32, %c0_i32_0 : i32, i32
  }
  func.func @transform_6(%arg0: i32) -> (i32, i32) {
    %c0_i32 = arith.constant 0 : i32
    %c0_i32_0 = arith.constant 0 : i32
    %c0_i32_1 = arith.constant 0 : i32
    return %c0_i32, %c0_i32_0 : i32, i32
  }
}

module attributes {stable_mosaic.version = 11 : i64} {
  func.func @kernel(%arg0: i32, %arg1: memref<16x1024xf32, #tpu.memory_space<vmem>>, %arg2: memref<16x1024xf32, #tpu.memory_space<vmem>>, %arg3: memref<16x16xf32, #tpu.memory_space<vmem>>, %arg4: memref<16x1xf32, #tpu.memory_space<vmem>>, %arg5: memref<16x1xf32, #tpu.memory_space<vmem>>, %arg6: memref<16x1xf32, #tpu.memory_space<vmem>>, %arg7: memref<16x1024xf32, #tpu.memory_space<vmem>>) attributes {dimension_semantics = [#tpu.dimension_semantics<arbitrary>], iteration_bounds = array<i64: 1>, scalar_prefetch = 0 : i64, scratch_operands = 0 : i64, tpu.core_type = #tpu.core_type<tc>, window_params = [{pipeline_mode = #tpu.pipeline_mode<synchronous>, transform_indices = @transform_0, window_bounds = array<i64: 16, 1024>}, {pipeline_mode = #tpu.pipeline_mode<synchronous>, transform_indices = @transform_1, window_bounds = array<i64: 16, 1024>}, {pipeline_mode = #tpu.pipeline_mode<synchronous>, transform_indices = @transform_2, window_bounds = array<i64: 16, 16>}, {pipeline_mode = #tpu.pipeline_mode<synchronous>, transform_indices = @transform_3, window_bounds = array<i64: 16, 1>}, {pipeline_mode = #tpu.pipeline_mode<synchronous>, transform_indices = @transform_4, window_bounds = array<i64: 16, 1>}, {pipeline_mode = #tpu.pipeline_mode<synchronous>, transform_indices = @transform_5, window_bounds = array<i64: 16, 1>}, {pipeline_mode = #tpu.pipeline_mode<synchronous>, transform_indices = @transform_6, window_bounds = array<i64: 16, 1024>}]} {
    %c0 = arith.constant 0 : index
    %c0_0 = arith.constant 0 : index
    %0 = vector.load %arg3[%c0, %c0_0] : memref<16x16xf32, #tpu.memory_space<vmem>>, vector<16x16xf32>
    %c0_1 = arith.constant 0 : index
    %c0_2 = arith.constant 0 : index
    %1 = vector.load %arg2[%c0_1, %c0_2] : memref<16x1024xf32, #tpu.memory_space<vmem>>, vector<16x1024xf32>
    %cst = arith.constant dense<0.000000e+00> : vector<16x1024xf32>
    %2 = tpu.matmul %0, %1, %cst {dimension_numbers = #tpu.dot_dimension_numbers<[1], [0], [0], [1], [0, 0, 1, 1], [], []>} : vector<16x16xf32>, vector<16x1024xf32>, vector<16x1024xf32> -> vector<16x1024xf32>
    %c0_3 = arith.constant 0 : index
    %c0_4 = arith.constant 0 : index
    %3 = vector.load %arg4[%c0_3, %c0_4] : memref<16x1xf32, #tpu.memory_space<vmem>>, vector<16x1xf32>
    %4 = vector.broadcast %3 : vector<16x1xf32> to vector<16x1024xf32>
    %5 = arith.addf %2, %4 : vector<16x1024xf32>
    %c0_5 = arith.constant 0 : index
    %c0_6 = arith.constant 0 : index
    %6 = vector.load %arg1[%c0_5, %c0_6] : memref<16x1024xf32, #tpu.memory_space<vmem>>, vector<16x1024xf32>
    %7 = arith.addf %6, %5 : vector<16x1024xf32>
    %cst_7 = arith.constant dense<0.000000e+00> : vector<16xf32>
    %8 = vector.multi_reduction <add>, %7, %cst_7 [1] : vector<16x1024xf32> to vector<16xf32>
    %9 = vector.shape_cast %8 : vector<16xf32> to vector<16x1xf32>
    %cst_8 = arith.constant 9.765625E-4 : f32
    %10 = vector.broadcast %cst_8 : f32 to vector<16x1xf32>
    %11 = arith.mulf %9, %10 : vector<16x1xf32>
    %12 = arith.mulf %7, %7 : vector<16x1024xf32>
    %cst_9 = arith.constant dense<0.000000e+00> : vector<16xf32>
    %13 = vector.multi_reduction <add>, %12, %cst_9 [1] : vector<16x1024xf32> to vector<16xf32>
    %14 = vector.shape_cast %13 : vector<16xf32> to vector<16x1xf32>
    %cst_10 = arith.constant 9.765625E-4 : f32
    %15 = vector.broadcast %cst_10 : f32 to vector<16x1xf32>
    %16 = arith.mulf %14, %15 : vector<16x1xf32>
    %17 = arith.mulf %11, %11 : vector<16x1xf32>
    %18 = arith.subf %16, %17 : vector<16x1xf32>
    %cst_11 = arith.constant 0.000000e+00 : f32
    %19 = vector.broadcast %cst_11 : f32 to vector<16x1xf32>
    %20 = arith.maximumf %18, %19 : vector<16x1xf32>
    %cst_12 = arith.constant 9.99999974E-6 : f32
    %21 = vector.broadcast %cst_12 : f32 to vector<16x1xf32>
    %22 = arith.addf %20, %21 : vector<16x1xf32>
    %23 = math.rsqrt %22 : vector<16x1xf32>
    %c0_13 = arith.constant 0 : index
    %c0_14 = arith.constant 0 : index
    %24 = vector.load %arg5[%c0_13, %c0_14] : memref<16x1xf32, #tpu.memory_space<vmem>>, vector<16x1xf32>
    %25 = arith.mulf %24, %23 : vector<16x1xf32>
    %c0_15 = arith.constant 0 : index
    %c0_16 = arith.constant 0 : index
    %26 = vector.load %arg6[%c0_15, %c0_16] : memref<16x1xf32, #tpu.memory_space<vmem>>, vector<16x1xf32>
    %27 = arith.mulf %11, %25 : vector<16x1xf32>
    %28 = arith.subf %26, %27 : vector<16x1xf32>
    %29 = vector.broadcast %25 : vector<16x1xf32> to vector<16x1024xf32>
    %30 = arith.mulf %7, %29 : vector<16x1024xf32>
    %31 = vector.broadcast %28 : vector<16x1xf32> to vector<16x1024xf32>
    %32 = arith.addf %30, %31 : vector<16x1024xf32>
    %c0_17 = arith.constant 0 : index
    %c0_18 = arith.constant 0 : index
    %33 = vector.load %arg7[%c0_17, %c0_18] : memref<16x1024xf32, #tpu.memory_space<vmem>>, vector<16x1024xf32>
    tpu.vector_store %arg7[%c0_17, %c0_18], %32 {strides = array<i32>} : memref<16x1024xf32, #tpu.memory_space<vmem>>, vector<16x1024xf32>,
    return
  }
  func.func @transform_0(%arg0: i32) -> (i32, i32) {
    %c0_i32 = arith.constant 0 : i32
    %c0_i32_0 = arith.constant 0 : i32
    %c0_i32_1 = arith.constant 0 : i32
    return %c0_i32, %c0_i32_0 : i32, i32
  }
  func.func @transform_1(%arg0: i32) -> (i32, i32) {
    %c0_i32 = arith.constant 0 : i32
    %c0_i32_0 = arith.constant 0 : i32
    %c0_i32_1 = arith.constant 0 : i32
    return %c0_i32, %c0_i32_0 : i32, i32
  }
  func.func @transform_2(%arg0: i32) -> (i32, i32) {
    %c0_i32 = arith.constant 0 : i32
    %c0_i32_0 = arith.constant 0 : i32
    %c0_i32_1 = arith.constant 0 : i32
    return %c0_i32, %c0_i32_0 : i32, i32
  }
  func.func @transform_3(%arg0: i32) -> (i32, i32) {
    %c0_i32 = arith.constant 0 : i32
    %c0_i32_0 = arith.constant 0 : i32
    %c0_i32_1 = arith.constant 0 : i32
    return %c0_i32, %c0_i32_0 : i32, i32
  }
  func.func @transform_4(%arg0: i32) -> (i32, i32) {
    %c0_i32 = arith.constant 0 : i32
    %c0_i32_0 = arith.constant 0 : i32
    %c0_i32_1 = arith.constant 0 : i32
    return %c0_i32, %c0_i32_0 : i32, i32
  }
  func.func @transform_5(%arg0: i32) -> (i32, i32) {
    %c0_i32 = arith.constant 0 : i32
    %c0_i32_0 = arith.constant 0 : i32
    %c0_i32_1 = arith.constant 0 : i32
    return %c0_i32, %c0_i32_0 : i32, i32
  }
  func.func @transform_6(%arg0: i32) -> (i32, i32) {
    %c0_i32 = arith.constant 0 : i32
    %c0_i32_0 = arith.constant 0 : i32
    %c0_i32_1 = arith.constant 0 : i32
    return %c0_i32, %c0_i32_0 : i32, i32
  }
}

module attributes {stable_mosaic.version = 11 : i64} {
  func.func @_head_kernel(%arg0: i32, %arg1: memref<16x256xf32, #tpu.memory_space<vmem>>, %arg2: memref<128x16xf32, #tpu.memory_space<vmem>>, %arg3: memref<128x1xf32, #tpu.memory_space<vmem>>, %arg4: memref<1x128xf32, #tpu.memory_space<vmem>>, %arg5: memref<1x1xf32, #tpu.memory_space<vmem>>, %arg6: memref<1x256xf32, #tpu.memory_space<vmem>>) attributes {dimension_semantics = [#tpu.dimension_semantics<parallel>], iteration_bounds = array<i64: 4>, scalar_prefetch = 0 : i64, scratch_operands = 0 : i64, tpu.core_type = #tpu.core_type<tc>, window_params = [{transform_indices = @transform_0, window_bounds = array<i64: 16, 256>}, {pipeline_mode = #tpu.pipeline_mode<synchronous>, transform_indices = @transform_1, window_bounds = array<i64: 128, 16>}, {pipeline_mode = #tpu.pipeline_mode<synchronous>, transform_indices = @transform_2, window_bounds = array<i64: 128, 1>}, {pipeline_mode = #tpu.pipeline_mode<synchronous>, transform_indices = @transform_3, window_bounds = array<i64: 1, 128>}, {pipeline_mode = #tpu.pipeline_mode<synchronous>, transform_indices = @transform_4, window_bounds = array<i64: 1, 1>}, {transform_indices = @transform_5, window_bounds = array<i64: 1, 256>}]} {
    %c0 = arith.constant 0 : index
    %c0_0 = arith.constant 0 : index
    %0 = vector.load %arg2[%c0, %c0_0] : memref<128x16xf32, #tpu.memory_space<vmem>>, vector<128x16xf32>
    %c0_1 = arith.constant 0 : index
    %c0_2 = arith.constant 0 : index
    %1 = vector.load %arg1[%c0_1, %c0_2] : memref<16x256xf32, #tpu.memory_space<vmem>>, vector<16x256xf32>
    %cst = arith.constant dense<0.000000e+00> : vector<128x256xf32>
    %2 = tpu.matmul %0, %1, %cst {dimension_numbers = #tpu.dot_dimension_numbers<[1], [0], [0], [1], [0, 0, 1, 1], [], []>} : vector<128x16xf32>, vector<16x256xf32>, vector<128x256xf32> -> vector<128x256xf32>
    %c0_3 = arith.constant 0 : index
    %c0_4 = arith.constant 0 : index
    %3 = vector.load %arg3[%c0_3, %c0_4] : memref<128x1xf32, #tpu.memory_space<vmem>>, vector<128x1xf32>
    %4 = vector.broadcast %3 : vector<128x1xf32> to vector<128x256xf32>
    %5 = arith.addf %2, %4 : vector<128x256xf32>
    %cst_5 = arith.constant 0.000000e+00 : f32
    %6 = vector.broadcast %cst_5 : f32 to vector<128x256xf32>
    %7 = arith.maximumf %5, %6 : vector<128x256xf32>
    %c0_6 = arith.constant 0 : index
    %c0_7 = arith.constant 0 : index
    %8 = vector.load %arg4[%c0_6, %c0_7] : memref<1x128xf32, #tpu.memory_space<vmem>>, vector<1x128xf32>
    %cst_8 = arith.constant dense<0.000000e+00> : vector<1x256xf32>
    %9 = tpu.matmul %8, %7, %cst_8 {dimension_numbers = #tpu.dot_dimension_numbers<[1], [0], [0], [1], [0, 0, 1, 1], [], []>} : vector<1x128xf32>, vector<128x256xf32>, vector<1x256xf32> -> vector<1x256xf32>
    %c0_9 = arith.constant 0 : index
    %c0_10 = arith.constant 0 : index
    %10 = vector.load %arg5[%c0_9, %c0_10] : memref<1x1xf32, #tpu.memory_space<vmem>>, vector<1x1xf32>
    %11 = vector.broadcast %10 : vector<1x1xf32> to vector<1x256xf32>
    %12 = arith.addf %9, %11 : vector<1x256xf32>
    %c0_11 = arith.constant 0 : index
    %c0_12 = arith.constant 0 : index
    %13 = vector.load %arg6[%c0_11, %c0_12] : memref<1x256xf32, #tpu.memory_space<vmem>>, vector<1x256xf32>
    tpu.vector_store %arg6[%c0_11, %c0_12], %12 {strides = array<i32>} : memref<1x256xf32, #tpu.memory_space<vmem>>, vector<1x256xf32>,
    return
  }
  func.func @transform_0(%arg0: i32) -> (i32, i32) {
    %c0_i32 = arith.constant 0 : i32
    %c0_i32_0 = arith.constant 0 : i32
    return %c0_i32, %arg0 : i32, i32
  }
  func.func @transform_1(%arg0: i32) -> (i32, i32) {
    %c0_i32 = arith.constant 0 : i32
    %c0_i32_0 = arith.constant 0 : i32
    %c0_i32_1 = arith.constant 0 : i32
    return %c0_i32, %c0_i32_0 : i32, i32
  }
  func.func @transform_2(%arg0: i32) -> (i32, i32) {
    %c0_i32 = arith.constant 0 : i32
    %c0_i32_0 = arith.constant 0 : i32
    %c0_i32_1 = arith.constant 0 : i32
    return %c0_i32, %c0_i32_0 : i32, i32
  }
  func.func @transform_3(%arg0: i32) -> (i32, i32) {
    %c0_i32 = arith.constant 0 : i32
    %c0_i32_0 = arith.constant 0 : i32
    %c0_i32_1 = arith.constant 0 : i32
    return %c0_i32, %c0_i32_0 : i32, i32
  }
  func.func @transform_4(%arg0: i32) -> (i32, i32) {
    %c0_i32 = arith.constant 0 : i32
    %c0_i32_0 = arith.constant 0 : i32
    %c0_i32_1 = arith.constant 0 : i32
    return %c0_i32, %c0_i32_0 : i32, i32
  }
  func.func @transform_5(%arg0: i32) -> (i32, i32) {
    %c0_i32 = arith.constant 0 : i32
    %c0_i32_0 = arith.constant 0 : i32
    return %c0_i32, %arg0 : i32, i32
  }
}

</mosaic_0001>

<llo_original>
// kernel: simple_block2d_forward.10
$region0: #{simple_block2d_forward.10}
  #allocation0 [shape = 'u32[]', space=smem, size = 0x4, offset = 0x4, fixed_abs, tag = 'smem constant byte address 0x4 - core index']
  #allocation1 [shape = 'u32[144,128]{1,0:T(1,128)}', space=vmem, size = 0x12000, scoped, tag = 'internal scratch']
  %s0 = inlined_call_operand.vmem [shape: f32[13,1024], index: 0, kind: input, shape index: {}]
  %s1 = inlined_call_operand.vmem [shape: f32[16,13], index: 1, kind: input, shape index: {}]
  %s2 = inlined_call_operand.vmem [shape: f32[16,1], index: 2, kind: input, shape index: {}]
  %s3 = inlined_call_operand.vmem [shape: f32[16,1024], index: 3, kind: output, shape index: {}]
  %s4 = sld [smem:[#allocation0]]
  $region87: #{simple_block2d_forward.10} parent=0
    _
  %s6 = ssub.s32 1, %s4
  %s7 = scalar_select 0, %s6, %s4
  $region1: #{simple_block2d_forward.10} parent=0
    #allocation2 [shape = 'u8[65536]{0}', space=vmem, size = 0x10000, scoped, tag = 'input window, operand 0']
    #allocation3 [shape = 'u8[65536]{0}', space=vmem, size = 0x10000, scoped, tag = 'output window, operand 0']
    loop: start=0, step=1, limit=4
    $region2: #{simple_block2d_forward.10} parent=1 // loop_pre_header
      _
    $region3: #{simple_block2d_forward.10} parent=1 // loop_header
      %s9 = sphi 0, %s13
      %p10 = scmp.ge.s32.totalorder %s9, 4
      %s19 = sphi 0, %s21
      %s22 = sphi 0, %s19
      %s23 = sphi 0, %s22
      %s39 = sphi 0, %s23
      %s43 = sphi 0, %s43
      %s45 = sphi 0, %s43
      %s46 = sphi 0, %s45
      %s60 = sphi 0, %s46
      %s64 = sphi 0, %s64
      %s66 = sphi 0, %s64
      %s67 = sphi 0, %s66
      %s81 = sphi 0, %s67
      %s87 = sphi 0, %s89
      %s90 = sphi 0, %s87
      %s91 = sphi 0, %s90
      %s107 = sphi 0, %s91
    $region4: #{simple_block2d_forward.10} parent=1 // loop_header_branch
      %12 = sbr.rel (%p10) target = $region8
    $region5: #{simple_block2d_forward.10} parent=1 // loop_body
      %s14 = ssub.s32 %s9, 1
      %s15 = ssub.s32 %s9, 2
      %s16 = sadd.s32 %s9, 1
      %s17 = ssub.s32 %s9, %s16
      %p18 = scmp.eq.s32.totalorder %s17, 0
      %s20 = sadd.s32 %s19, 1
      %s21 = scalar_select %p18, %s19, %s20
      %p24 = pneg %p18
      %p25 = scmp.eq.s32.totalorder %s9, 1
      %p26 = por %p24, %p25
      %p27 = scmp.ne.s32.totalorder %s19, %s22
      %p28 = scmp.eq.s32.totalorder %s9, 0
      %p29 = por %p27, %p28
      %p30 = scmp.ne.s32.totalorder %s19, %s22
      %p31 = scmp.eq.s32.totalorder %s14, 1
      %p32 = por %p30, %p31
      %p33 = scmp.ne.s32.totalorder %s22, %s23
      %p34 = scmp.eq.s32.totalorder %s14, 0
      %p35 = por %p33, %p34
      %p36 = scmp.ne.s32.totalorder %s22, %s23
      %p37 = scmp.eq.s32.totalorder %s15, 1
      %p38 = por %p36, %p37
      %p40 = scmp.ne.s32.totalorder %s23, %s39
      %p41 = scmp.eq.s32.totalorder %s15, 0
      %p42 = por %p40, %p41
      %s44 = sadd.s32 %s43, 1
      %p47 = scmp.eq.s32.totalorder %s9, 1
      %p48 = scmp.ne.s32.totalorder %s43, %s45
      %p49 = scmp.eq.s32.totalorder %s9, 0
      %p50 = por %p48, %p49
      %p51 = scmp.ne.s32.totalorder %s43, %s45
      %p52 = scmp.eq.s32.totalorder %s14, 1
      %p53 = por %p51, %p52
      %p54 = scmp.ne.s32.totalorder %s45, %s46
      %p55 = scmp.eq.s32.totalorder %s14, 0
      %p56 = por %p54, %p55
      %p57 = scmp.ne.s32.totalorder %s45, %s46
      %p58 = scmp.eq.s32.totalorder %s15, 1
      %p59 = por %p57, %p58
      %p61 = scmp.ne.s32.totalorder %s46, %s60
      %p62 = scmp.eq.s32.totalorder %s15, 0
      %p63 = por %p61, %p62
      %s65 = sadd.s32 %s64, 1
      %p68 = scmp.eq.s32.totalorder %s9, 1
      %p69 = scmp.ne.s32.totalorder %s64, %s66
      %p70 = scmp.eq.s32.totalorder %s9, 0
      %p71 = por %p69, %p70
      %p72 = scmp.ne.s32.totalorder %s64, %s66
      %p73 = scmp.eq.s32.totalorder %s14, 1
      %p74 = por %p72, %p73
      %p75 = scmp.ne.s32.totalorder %s66, %s67
      %p76 = scmp.eq.s32.totalorder %s14, 0
      %p77 = por %p75, %p76
      %p78 = scmp.ne.s32.totalorder %s66, %s67
      %p79 = scmp.eq.s32.totalorder %s15, 1
      %p80 = por %p78, %p79
      %p82 = scmp.ne.s32.totalorder %s67, %s81
      %p83 = scmp.eq.s32.totalorder %s15, 0
      %p84 = por %p82, %p83
      %s85 = ssub.s32 %s9, %s16
      %p86 = scmp.eq.s32.totalorder %s85, 0
      %s88 = sadd.s32 %s87, 1
      %s89 = scalar_select %p86, %s87, %s88
      %p92 = pneg %p86
      %p93 = scmp.eq.s32.totalorder %s9, 1
      %p94 = por %p92, %p93
      %p95 = scmp.ne.s32.totalorder %s87, %s90
      %p96 = scmp.eq.s32.totalorder %s9, 0
      %p97 = por %p95, %p96
      %p98 = scmp.ne.s32.totalorder %s87, %s90
      %p99 = scmp.eq.s32.totalorder %s14, 1
      %p100 = por %p98, %p99
      %p101 = scmp.ne.s32.totalorder %s90, %s91
      %p102 = scmp.eq.s32.totalorder %s14, 0
      %p103 = por %p101, %p102
      %p104 = scmp.ne.s32.totalorder %s90, %s91
      %p105 = scmp.eq.s32.totalorder %s15, 1
      %p106 = por %p104, %p105
      %p108 = scmp.ne.s32.totalorder %s91, %s107
      %p109 = scmp.eq.s32.totalorder %s15, 0
      %p110 = por %p108, %p109
      %p111 = scmp.le.s32.totalorder 1, %s9
      %p112 = scmp.lt.s32.totalorder %s9, 3
      %p113 = pnand %p111, %p112
      %p114 = pneg %p113
      // Predicated region
      $region9: #{simple_block2d_forward.10} parent=5 // pred_check
        _
      $region10: #{simple_block2d_forward.10} parent=5 // pred_check_branch
        %116 = sbr.rel (%p113) target = $region12
      $region11: #{simple_block2d_forward.10} parent=5 // pred_region
        %s117 = ssub.s32 %s9, 1
        // Predicated region
        $region13: #{simple_block2d_forward.10} parent=11 // pred_check
          %p118 = pneg %p56
        $region14: #{simple_block2d_forward.10} parent=11 // pred_check_branch
          %120 = sbr.rel (%p118) target = $region16
        $region15: #{simple_block2d_forward.10} parent=11 // pred_region
          _
        $region16: #{simple_block2d_forward.10} parent=11 // pred_fallthru
          _
        // Predicated region
        $region17: #{simple_block2d_forward.10} parent=11 // pred_check
          %p121 = pneg %p77
        $region18: #{simple_block2d_forward.10} parent=11 // pred_check_branch
          %123 = sbr.rel (%p121) target = $region20
        $region19: #{simple_block2d_forward.10} parent=11 // pred_region
          _
        $region20: #{simple_block2d_forward.10} parent=11 // pred_fallthru
          _
      $region12: #{simple_block2d_forward.10} parent=5 // pred_fallthru
        _
      %p124 = scmp.lt.s32.totalorder %s9, 2
      // Predicated region
      $region21: #{simple_block2d_forward.10} parent=5 // pred_check
        %p125 = pneg %p124
      $region22: #{simple_block2d_forward.10} parent=5 // pred_check_branch
        %127 = sbr.rel (%p125) target = $region24
      $region23: #{simple_block2d_forward.10} parent=5 // pred_region
        // Predicated region
        $region25: #{simple_block2d_forward.10} parent=23 // pred_check
          %p128 = pneg %p29
        $region26: #{simple_block2d_forward.10} parent=23 // pred_check_branch
          %130 = sbr.rel (%p128) target = $region28
        $region27: #{simple_block2d_forward.10} parent=23 // pred_region
          %s131 = sand.u32 %s19, 1
          %s132 = sand.u32 %s19, 1
          %s133 = smul.addr %s132, 64
          %s134 = scalar_lea.vmem [#allocation2], %s133
          %s135 = smul.u32 4, %s9
          %s136 = smul.addr %s135, 8
          %s137 = scalar_lea.vmem %s0, %s136
          // Predicated region
          $region29: #{simple_block2d_forward.10} parent=27 // pred_check
            _
          $region30: #{simple_block2d_forward.10} parent=27 // pred_check_branch
            %139 = sbr.rel (0) target = $region32
          $region31: #{simple_block2d_forward.10} parent=27 // pred_region
            // Predicated region
            $region33: #{simple_block2d_forward.10} parent=31 // pred_check
              _
            $region34: #{simple_block2d_forward.10} parent=31 // pred_check_branch
              %141 = sbr.rel (0) target = $region36
            $region35: #{simple_block2d_forward.10} parent=31 // pred_region
              loop: start=0, step=1, limit=1
              $region37: #{simple_block2d_forward.10} parent=35 // loop_pre_header
                _
              $region38: #{simple_block2d_forward.10} parent=35 // loop_header
                %s143 = sphi 0, %s147
                %p144 = scmp.ge.s32.totalorder %s143, 1
                %s148 = sphi %s137, %s137
                %s149 = sphi %s134, %s134
              $region39: #{simple_block2d_forward.10} parent=35 // loop_header_branch
                %146 = sbr.rel (%p144) target = $region43
              $region40: #{simple_block2d_forward.10} parent=35 // loop_body
                %v150 = vld [vmem:[%s148] sm:$0xff]
                %151 = vst [vmem:[%s149] sm:$0xff] %v150
                %v152 = vld [vmem:[%s148 + $0x8] sm:$0xff]
                %153 = vst [vmem:[%s149 + $0x8] sm:$0xff] %v152
                %v154 = vld [vmem:[%s148 + $0x10] sm:$0xff]
                %155 = vst [vmem:[%s149 + $0x10] sm:$0xff] %v154
                %v156 = vld [vmem:[%s148 + $0x18] sm:$0xff]
                %157 = vst [vmem:[%s149 + $0x18] sm:$0xff] %v156
                %v158 = vld [vmem:[%s148 + $0x40] sm:$0xff]
                %159 = vst [vmem:[%s149 + $0x20] sm:$0xff] %v158
                %v160 = vld [vmem:[%s148 + $0x48] sm:$0xff]
                %161 = vst [vmem:[%s149 + $0x28] sm:$0xff] %v160
                %v162 = vld [vmem:[%s148 + $0x50] sm:$0xff]
                %163 = vst [vmem:[%s149 + $0x30] sm:$0xff] %v162
                %v164 = vld [vmem:[%s148 + $0x58] sm:$0xff]
                %165 = vst [vmem:[%s149 + $0x38] sm:$0xff] %v164
              $region41: #{simple_block2d_forward.10} parent=35 // loop_footer
                %s147 = sadd.s32 1, %s143
              $region42: #{simple_block2d_forward.10} parent=35 // loop_footer_branch
                %142 = sbr.rel target = $region38
              $region43: #{simple_block2d_forward.10} parent=35 // loop_exit
                _
            $region36: #{simple_block2d_forward.10} parent=31 // pred_fallthru
              _
            // Predicated region
            $region44: #{simple_block2d_forward.10} parent=31 // pred_check
              _
            $region45: #{simple_block2d_forward.10} parent=31 // pred_check_branch
              %167 = sbr.rel target = $region47
            $region46: #{simple_block2d_forward.10} parent=31 // pred_region
              _
            $region47: #{simple_block2d_forward.10} parent=31 // pred_fallthru
              _
          $region32: #{simple_block2d_forward.10} parent=27 // pred_fallthru
            _
          %168 = vnop
        $region28: #{simple_block2d_forward.10} parent=23 // pred_fallthru
          _
      $region24: #{simple_block2d_forward.10} parent=5 // pred_fallthru
        _
      %p169 = scmp.le.s32.totalorder 1, %s9
      %p170 = scmp.lt.s32.totalorder %s9, 3
      %p171 = pnand %p169, %p170
      %p172 = pneg %p171
      // Predicated region
      $region48: #{simple_block2d_forward.10} parent=5 // pred_check
        _
      $region49: #{simple_block2d_forward.10} parent=5 // pred_check_branch
        %174 = sbr.rel (%p171) target = $region51
      $region50: #{simple_block2d_forward.10} parent=5 // pred_region
        %s175 = ssub.s32 %s9, 1
        %s176 = sand.u32 %s22, 1
        %s177 = sand.u32 %s22, 1
        %s178 = smul.addr %s177, 64
        %s179 = scalar_lea.vmem [#allocation2], %s178
        // Predicated region
        $region52: #{simple_block2d_forward.10} parent=50 // pred_check
          %p180 = pneg %p35
        $region53: #{simple_block2d_forward.10} parent=50 // pred_check_branch
          %182 = sbr.rel (%p180) target = $region55
        $region54: #{simple_block2d_forward.10} parent=50 // pred_region
          _
        $region55: #{simple_block2d_forward.10} parent=50 // pred_fallthru
          _
        %s183 = sand.u32 %s22, 1
        %s184 = sand.u32 %s22, 1
        %s185 = smul.addr %s184, 64
        %s186 = scalar_lea.vmem [#allocation2], %s185
        %p187 = pneg %p35
        %p188 = pneg %p32
        %p189 = pneg %p56
        %p190 = pneg %p53
        %p191 = pneg %p77
        %p192 = pneg %p74
        %p193 = pneg %p103
        %p194 = pneg %p100
        %s195 = sand.u32 %s90, 1
        %s196 = sand.u32 %s90, 1
        %s197 = smul.addr %s196, 64
        %s198 = scalar_lea.vmem [#allocation3], %s197
        %s199 = smul.u32 4, %s14
        %s200 = smul.u32 4, %s14
        %v201 = vld [vmem:[%s1] sm:$0xff]
        %v202 = vld [vmem:[%s1 + $0x8] sm:$0xff]
        %v203 = vld [vmem:[%s179] sm:$0xff]
        %v204 = vld [vmem:[%s179 + $0x8] sm:$0xff]
        %v205 = vld [vmem:[%s179 + $0x10] sm:$0xff]
        %v206 = vld [vmem:[%s179 + $0x18] sm:$0xff]
        %v207 = vld [vmem:[%s179 + $0x20] sm:$0x1f]
        %v208 = vld [vmem:[%s179 + $0x28] sm:$0x1f]
        %v209 = vld [vmem:[%s179 + $0x30] sm:$0x1f]
        %v210 = vld [vmem:[%s179 + $0x38] sm:$0x1f]
        %v211 = vld [vmem:[%s2] sm:$0xff]
        %v212 = vld [vmem:[%s2 + $0x8] sm:$0xff]
        %214 = vset.pattern.permute.xlu0 0
        %215 = vperm.xlu0 %214, %v211
        %v216 = vpop.permute.xlu0 %215
        %219 = vset.pattern.permute.xlu0 0
        %220 = vperm.xlu0 %219, %v212
        %v221 = vpop.permute.xlu0 %220
        %vm223 = vcmask 105472
        %v225 = vsel %vm223, %v201, 0
        %v228 = vsel %vm223, %v202, 0
        %vm230 = vcmask 1044480
        %v232 = vsel %vm230, %v207, 0
        %v235 = vsel %vm230, %v208, 0
        %v238 = vsel %vm230, %v209, 0
        %v241 = vsel %vm230, %v210, 0
        %243 = vmatprep.subr.mxu0 %v204
        %244 = vmatpush1.msra.mxu0 %v203
        %245 = vmatprep.subr.mxu0 %v235
        %246 = vmatpush1.msra.mxu0 %v232
        %247 = vmatprep.subr.mxu0 0.0
        %248 = vmatpush1.msra.mxu0 0.0
        %249 = vmatprep.subr.mxu0 0.0
        %250 = vmatpush1.msra.mxu0 0.0
        %251 = vmatprep.subr.mxu0 0.0
        %252 = vmatpush1.msra.mxu0 0.0
        %253 = vmatprep.subr.mxu0 0.0
        %254 = vmatpush1.msra.mxu0 0.0
        %255 = vmatprep.subr.mxu0 0.0
        %256 = vmatpush1.msra.mxu0 0.0
        %257 = vmatprep.subr.mxu0 0.0
        %258 = vmatpush1.msra.mxu0 0.0
        %259 = vmatprep.subr.mxu0 0.0
        %260 = vmatpush1.msra.mxu0 0.0
        %261 = vmatprep.subr.mxu0 0.0
        %262 = vmatpush1.msra.mxu0 0.0
        %263 = vmatprep.subr.mxu0 0.0
        %264 = vmatpush1.msra.mxu0 0.0
        %265 = vmatprep.subr.mxu0 0.0
        %266 = vmatpush1.msra.mxu0 0.0
        %267 = vmatprep.subr.mxu0 0.0
        %268 = vmatpush1.msra.mxu0 0.0
        %269 = vmatprep.subr.mxu0 0.0
        %270 = vmatpush1.msra.mxu0 0.0
        %271 = vmatprep.subr.mxu0 0.0
        %272 = vmatpush1.msra.mxu0 0.0
        %273 = vmatprep.subr.mxu0 0.0
        %274 = vmatpush1.msra.mxu0 0.0
        %275 = vmatprep.subr.mxu0 0.0
        %276 = vmatpush1.msra.mxu0 0.0
        %277 = vmatprep.subr.mxu0 0.0
        %278 = vmatpush1.msra.mxu0 0.0
        %279 = vmatprep.subr.mxu0 0.0
        %280 = vmatpush1.msra.mxu0 0.0
        %281 = vmatprep.subr.mxu0 0.0
        %282 = vmatpush1.msra.mxu0 0.0
        %283 = vmatprep.subr.mxu0 0.0
        %284 = vmatpush1.msra.mxu0 0.0
        %285 = vmatprep.subr.mxu0 0.0
        %286 = vmatpush1.msra.mxu0 0.0
        %287 = vmatprep.subr.mxu0 0.0
        %288 = vmatpush1.msra.mxu0 0.0
        %289 = vmatprep.subr.mxu0 0.0
        %290 = vmatpush1.msra.mxu0 0.0
        %291 = vmatprep.subr.mxu0 0.0
        %292 = vmatpush1.msra.mxu0 0.0
        %293 = vmatprep.subr.mxu0 0.0
        %294 = vmatpush1.msra.mxu0 0.0
        %295 = vmatprep.subr.mxu0 0.0
        %296 = vmatpush1.msra.mxu0 0.0
        %297 = vmatprep.subr.mxu0 0.0
        %298 = vmatpush1.msra.mxu0 0.0
        %299 = vmatprep.subr.mxu0 0.0
        %300 = vmatpush1.msra.mxu0 0.0
        %301 = vmatprep.subr.mxu0 0.0
        %302 = vmatpush1.msra.mxu0 0.0
        %303 = vmatprep.subr.mxu0 0.0
        %304 = vmatpush1.msra.mxu0 0.0
        %305 = vmatprep.subr.mxu0 0.0
        %306 = vmatpush1.msra.mxu0 0.0
        %307 = vmatprep.mubr.f32.mxu0 0.0
        %308 = vmatmul.mubr.f32.gmra.mrb[0].mxu0 %v225
        %v309 = vpop.f32.mrb[0].mxu0
        %v310 = vadd.f32 %v216, %v309
        %v311 = vpop.f32.mrb[0].mxu0
        %v312 = vadd.f32 %v216, %v311
        %313 = vmatprep.mubr.f32.mxu0 0.0
        %314 = vmatmul.mubr.f32.gmra.mrb[0].mxu0 %v228
        %v315 = vpop.f32.mrb[0].mxu0
        %v316 = vadd.f32 %v221, %v315
        %v317 = vpop.f32.mrb[0].mxu0
        %v318 = vadd.f32 %v221, %v317
        %319 = vdwg.mxu0
        %320 = vmatprep.subr.mxu0 %v206
        %321 = vmatpush1.msra.mxu0 %v205
        %322 = vmatprep.subr.mxu0 %v241
        %323 = vmatpush1.msra.mxu0 %v238
        %324 = vmatprep.subr.mxu0 0.0
        %325 = vmatpush1.msra.mxu0 0.0
        %326 = vmatprep.subr.mxu0 0.0
        %327 = vmatpush1.msra.mxu0 0.0
        %328 = vmatprep.subr.mxu0 0.0
        %329 = vmatpush1.msra.mxu0 0.0
        %330 = vmatprep.subr.mxu0 0.0
        %331 = vmatpush1.msra.mxu0 0.0
        %332 = vmatprep.subr.mxu0 0.0
        %333 = vmatpush1.msra.mxu0 0.0
        %334 = vmatprep.subr.mxu0 0.0
        %335 = vmatpush1.msra.mxu0 0.0
        %336 = vmatprep.subr.mxu0 0.0
        %337 = vmatpush1.msra.mxu0 0.0
        %338 = vmatprep.subr.mxu0 0.0
        %339 = vmatpush1.msra.mxu0 0.0
        %340 = vmatprep.subr.mxu0 0.0
        %341 = vmatpush1.msra.mxu0 0.0
        %342 = vmatprep.subr.mxu0 0.0
        %343 = vmatpush1.msra.mxu0 0.0
        %344 = vmatprep.subr.mxu0 0.0
        %345 = vmatpush1.msra.mxu0 0.0
        %346 = vmatprep.subr.mxu0 0.0
        %347 = vmatpush1.msra.mxu0 0.0
        %348 = vmatprep.subr.mxu0 0.0
        %349 = vmatpush1.msra.mxu0 0.0
        %350 = vmatprep.subr.mxu0 0.0
        %351 = vmatpush1.msra.mxu0 0.0
        %352 = vmatprep.subr.mxu0 0.0
        %353 = vmatpush1.msra.mxu0 0.0
        %354 = vmatprep.subr.mxu0 0.0
        %355 = vmatpush1.msra.mxu0 0.0
        %356 = vmatprep.subr.mxu0 0.0
        %357 = vmatpush1.msra.mxu0 0.0
        %358 = vmatprep.subr.mxu0 0.0
        %359 = vmatpush1.msra.mxu0 0.0
        %360 = vmatprep.subr.mxu0 0.0
        %361 = vmatpush1.msra.mxu0 0.0
        %362 = vmatprep.subr.mxu0 0.0
        %363 = vmatpush1.msra.mxu0 0.0
        %364 = vmatprep.subr.mxu0 0.0
        %365 = vmatpush1.msra.mxu0 0.0
        %366 = vmatprep.subr.mxu0 0.0
        %367 = vmatpush1.msra.mxu0 0.0
        %368 = vmatprep.subr.mxu0 0.0
        %369 = vmatpush1.msra.mxu0 0.0
        %370 = vmatprep.subr.mxu0 0.0
        %371 = vmatpush1.msra.mxu0 0.0
        %372 = vmatprep.subr.mxu0 0.0
        %373 = vmatpush1.msra.mxu0 0.0
        %374 = vmatprep.subr.mxu0 0.0
        %375 = vmatpush1.msra.mxu0 0.0
        %376 = vmatprep.subr.mxu0 0.0
        %377 = vmatpush1.msra.mxu0 0.0
        %378 = vmatprep.subr.mxu0 0.0
        %379 = vmatpush1.msra.mxu0 0.0
        %380 = vmatprep.subr.mxu0 0.0
        %381 = vmatpush1.msra.mxu0 0.0
        %382 = vmatprep.subr.mxu0 0.0
        %383 = vmatpush1.msra.mxu0 0.0
        %384 = vmatprep.mubr.f32.mxu0 0.0
        %385 = vmatmul.mubr.f32.gmra.mrb[0].mxu0 %v225
        %v386 = vpop.f32.mrb[0].mxu0
        %v387 = vadd.f32 %v216, %v386
        %v388 = vpop.f32.mrb[0].mxu0
        %v389 = vadd.f32 %v216, %v388
        %390 = vmatprep.mubr.f32.mxu0 0.0
        %391 = vmatmul.mubr.f32.gmra.mrb[0].mxu0 %v228
        %v392 = vpop.f32.mrb[0].mxu0
        %v393 = vadd.f32 %v221, %v392
        %v394 = vpop.f32.mrb[0].mxu0
        %v395 = vadd.f32 %v221, %v394
        %396 = vdwg.mxu0
        %397 = vst [vmem:[%s198] sm:$0xff] %v310
        %398 = vst [vmem:[%s198 + $0x8] sm:$0xff] %v312
        %399 = vst [vmem:[%s198 + $0x10] sm:$0xff] %v387
        %400 = vst [vmem:[%s198 + $0x18] sm:$0xff] %v389
        %401 = vst [vmem:[%s198 + $0x20] sm:$0xff] %v316
        %402 = vst [vmem:[%s198 + $0x28] sm:$0xff] %v318
        %403 = vst [vmem:[%s198 + $0x30] sm:$0xff] %v393
        %404 = vst [vmem:[%s198 + $0x38] sm:$0xff] %v395
        %s405 = sand.u32 %s90, 1
        %s406 = sand.u32 %s90, 1
        %s407 = smul.addr %s406, 64
        %s408 = scalar_lea.vmem [#allocation3], %s407
        // Predicated region
        $region56: #{simple_block2d_forward.10} parent=50 // pred_check
          %p409 = pneg %p100
        $region57: #{simple_block2d_forward.10} parent=50 // pred_check_branch
          %411 = sbr.rel (%p409) target = $region59
        $region58: #{simple_block2d_forward.10} parent=50 // pred_region
          %s412 = smul.u32 4, %s14
          %s413 = smul.addr %s412, 8
          %s414 = scalar_lea.vmem %s3, %s413
          // Predicated region
          $region60: #{simple_block2d_forward.10} parent=58 // pred_check
            _
          $region61: #{simple_block2d_forward.10} parent=58 // pred_check_branch
            %416 = sbr.rel (0) target = $region63
          $region62: #{simple_block2d_forward.10} parent=58 // pred_region
            // Predicated region
            $region64: #{simple_block2d_forward.10} parent=62 // pred_check
              _
            $region65: #{simple_block2d_forward.10} parent=62 // pred_check_branch
              %418 = sbr.rel (0) target = $region67
            $region66: #{simple_block2d_forward.10} parent=62 // pred_region
              loop: start=0, step=1, limit=1
              $region68: #{simple_block2d_forward.10} parent=66 // loop_pre_header
                _
              $region69: #{simple_block2d_forward.10} parent=66 // loop_header
                %s420 = sphi 0, %s424
                %p421 = scmp.ge.s32.totalorder %s420, 1
                %s425 = sphi %s408, %s408
                %s426 = sphi %s414, %s414
              $region70: #{simple_block2d_forward.10} parent=66 // loop_header_branch
                %423 = sbr.rel (%p421) target = $region74
              $region71: #{simple_block2d_forward.10} parent=66 // loop_body
                %v427 = vld [vmem:[%s425] sm:$0xff]
                %428 = vst [vmem:[%s426] sm:$0xff] %v427
                %v429 = vld [vmem:[%s425 + $0x8] sm:$0xff]
                %430 = vst [vmem:[%s426 + $0x8] sm:$0xff] %v429
                %v431 = vld [vmem:[%s425 + $0x10] sm:$0xff]
                %432 = vst [vmem:[%s426 + $0x10] sm:$0xff] %v431
                %v433 = vld [vmem:[%s425 + $0x18] sm:$0xff]
                %434 = vst [vmem:[%s426 + $0x18] sm:$0xff] %v433
                %v435 = vld [vmem:[%s425 + $0x20] sm:$0xff]
                %436 = vst [vmem:[%s426 + $0x40] sm:$0xff] %v435
                %v437 = vld [vmem:[%s425 + $0x28] sm:$0xff]
                %438 = vst [vmem:[%s426 + $0x48] sm:$0xff] %v437
                %v439 = vld [vmem:[%s425 + $0x30] sm:$0xff]
                %440 = vst [vmem:[%s426 + $0x50] sm:$0xff] %v439
                %v441 = vld [vmem:[%s425 + $0x38] sm:$0xff]
                %442 = vst [vmem:[%s426 + $0x58] sm:$0xff] %v441
              $region72: #{simple_block2d_forward.10} parent=66 // loop_footer
                %s424 = sadd.s32 1, %s420
              $region73: #{simple_block2d_forward.10} parent=66 // loop_footer_branch
                %419 = sbr.rel target = $region69
              $region74: #{simple_block2d_forward.10} parent=66 // loop_exit
                _
            $region67: #{simple_block2d_forward.10} parent=62 // pred_fallthru
              _
            // Predicated region
            $region75: #{simple_block2d_forward.10} parent=62 // pred_check
              _
            $region76: #{simple_block2d_forward.10} parent=62 // pred_check_branch
              %444 = sbr.rel target = $region78
            $region77: #{simple_block2d_forward.10} parent=62 // pred_region
              _
            $region78: #{simple_block2d_forward.10} parent=62 // pred_fallthru
              _
          $region63: #{simple_block2d_forward.10} parent=58 // pred_fallthru
            _
          %445 = vnop
        $region59: #{simple_block2d_forward.10} parent=50 // pred_fallthru
          _
      $region51: #{simple_block2d_forward.10} parent=5 // pred_fallthru
        _
      %p446 = scmp.le.s32.totalorder 2, %s9
      // Predicated region
      $region79: #{simple_block2d_forward.10} parent=5 // pred_check
        %p447 = pneg %p446
      $region80: #{simple_block2d_forward.10} parent=5 // pred_check_branch
        %449 = sbr.rel (%p447) target = $region82
      $region81: #{simple_block2d_forward.10} parent=5 // pred_region
        %s450 = ssub.s32 %s9, 2
        // Predicated region
        $region83: #{simple_block2d_forward.10} parent=81 // pred_check
          %p451 = pneg %p106
        $region84: #{simple_block2d_forward.10} parent=81 // pred_check_branch
          %453 = sbr.rel (%p451) target = $region86
        $region85: #{simple_block2d_forward.10} parent=81 // pred_region
          %s454 = sand.u32 %s91, 1
          %s455 = sand.u32 %s91, 1
          %s456 = smul.addr %s455, 64
          %s457 = scalar_lea.vmem [#allocation3], %s456
        $region86: #{simple_block2d_forward.10} parent=81 // pred_fallthru
          _
      $region82: #{simple_block2d_forward.10} parent=5 // pred_fallthru
        _
    $region6: #{simple_block2d_forward.10} parent=1 // loop_footer
      %s13 = sadd.s32 1, %s9
    $region7: #{simple_block2d_forward.10} parent=1 // loop_footer_branch
      %8 = sbr.rel target = $region3
    $region8: #{simple_block2d_forward.10} parent=1 // loop_exit
      _

// kernel: simple_block2d_forward.11
$region0: #{simple_block2d_forward.11}
  #allocation0 [shape = 'u32[]', space=smem, size = 0x4, offset = 0x4, fixed_abs, tag = 'smem constant byte address 0x4 - core index']
  #allocation1 [shape = 'u32[144,128]{1,0:T(1,128)}', space=vmem, size = 0x12000, scoped, tag = 'internal scratch']
  %s0 = inlined_call_operand.vmem [shape: f32[2,16,256], index: 0, kind: input, shape index: {}]
  %s1 = inlined_call_operand.vmem [shape: f32[2,16,256], index: 1, kind: input, shape index: {}]
  %s2 = inlined_call_operand.vmem [shape: f32[16,16,256], index: 2, kind: input, shape index: {}]
  %s3 = inlined_call_operand.vmem [shape: f32[16,16,256], index: 3, kind: input, shape index: {}]
  %s4 = inlined_call_operand.vmem [shape: f32[2,16,256], index: 4, kind: output, shape index: {0}]
  %s5 = inlined_call_operand.vmem [shape: f32[2,16,256], index: 5, kind: output, shape index: {1}]
  %6 = xla_tuple %s4, %s5
  %s7 = sld [smem:[#allocation0]]
  $region34: #{simple_block2d_forward.11} parent=0
    _
  %s9 = ssub.s32 1, %s7
  %s10 = scalar_select 0, %s9, %s7
  // Predicated region
  $region2: #{simple_block2d_forward.11} parent=0 // pred_check
    _
  $region3: #{simple_block2d_forward.11} parent=0 // pred_check_branch
    %12 = sbr.rel (0) target = $region5
  $region4: #{simple_block2d_forward.11} parent=0 // pred_region
    _
  $region5: #{simple_block2d_forward.11} parent=0 // pred_fallthru
    _
  // Predicated region
  $region6: #{simple_block2d_forward.11} parent=0 // pred_check
    _
  $region7: #{simple_block2d_forward.11} parent=0 // pred_check_branch
    %14 = sbr.rel (0) target = $region9
  $region8: #{simple_block2d_forward.11} parent=0 // pred_region
    _
  $region9: #{simple_block2d_forward.11} parent=0 // pred_fallthru
    _
  // Predicated region
  $region10: #{simple_block2d_forward.11} parent=0 // pred_check
    _
  $region11: #{simple_block2d_forward.11} parent=0 // pred_check_branch
    %16 = sbr.rel (0) target = $region13
  $region12: #{simple_block2d_forward.11} parent=0 // pred_region
    _
  $region13: #{simple_block2d_forward.11} parent=0 // pred_fallthru
    _
  // Predicated region
  $region14: #{simple_block2d_forward.11} parent=0 // pred_check
    _
  $region15: #{simple_block2d_forward.11} parent=0 // pred_check_branch
    %18 = sbr.rel (0) target = $region17
  $region16: #{simple_block2d_forward.11} parent=0 // pred_region
    _
  $region17: #{simple_block2d_forward.11} parent=0 // pred_fallthru
    _
  %v19 = vld [vmem:[%s0] sm:$0xff]
  %v20 = vld [vmem:[%s0 + $0x8] sm:$0xff]
  %v21 = vld [vmem:[%s0 + $0x10] sm:$0xff]
  %v22 = vld [vmem:[%s0 + $0x18] sm:$0xff]
  %v23 = vld [vmem:[%s0 + $0x20] sm:$0xff]
  %v24 = vld [vmem:[%s0 + $0x28] sm:$0xff]
  %v25 = vld [vmem:[%s0 + $0x30] sm:$0xff]
  %v26 = vld [vmem:[%s0 + $0x38] sm:$0xff]
  %v27 = vld [vmem:[%s1] sm:$0xff]
  %v28 = vld [vmem:[%s1 + $0x8] sm:$0xff]
  %v29 = vld [vmem:[%s1 + $0x10] sm:$0xff]
  %v30 = vld [vmem:[%s1 + $0x18] sm:$0xff]
  %v31 = vld [vmem:[%s1 + $0x20] sm:$0xff]
  %v32 = vld [vmem:[%s1 + $0x28] sm:$0xff]
  %v33 = vld [vmem:[%s1 + $0x30] sm:$0xff]
  %v34 = vld [vmem:[%s1 + $0x38] sm:$0xff]
  %v35 = vld [vmem:[%s2] sm:$0xff]
  %v36 = vld [vmem:[%s2 + $0x8] sm:$0xff]
  %v37 = vld [vmem:[%s2 + $0x10] sm:$0xff]
  %v38 = vld [vmem:[%s2 + $0x18] sm:$0xff]
  %v39 = vld [vmem:[%s2 + $0x20] sm:$0xff]
  %v40 = vld [vmem:[%s2 + $0x28] sm:$0xff]
  %v41 = vld [vmem:[%s2 + $0x30] sm:$0xff]
  %v42 = vld [vmem:[%s2 + $0x38] sm:$0xff]
  %v43 = vld [vmem:[%s2 + $0x40] sm:$0xff]
  %v44 = vld [vmem:[%s2 + $0x48] sm:$0xff]
  %v45 = vld [vmem:[%s2 + $0x50] sm:$0xff]
  %v46 = vld [vmem:[%s2 + $0x58] sm:$0xff]
  %v47 = vld [vmem:[%s2 + $0x60] sm:$0xff]
  %v48 = vld [vmem:[%s2 + $0x68] sm:$0xff]
  %v49 = vld [vmem:[%s2 + $0x70] sm:$0xff]
  %v50 = vld [vmem:[%s2 + $0x78] sm:$0xff]
  %v51 = vld [vmem:[%s2 + $0x80] sm:$0xff]
  %v52 = vld [vmem:[%s2 + $0x88] sm:$0xff]
  %v53 = vld [vmem:[%s2 + $0x90] sm:$0xff]
  %v54 = vld [vmem:[%s2 + $0x98] sm:$0xff]
  %v55 = vld [vmem:[%s2 + $0xa0] sm:$0xff]
  %v56 = vld [vmem:[%s2 + $0xa8] sm:$0xff]
  %v57 = vld [vmem:[%s2 + $0xb0] sm:$0xff]
  %v58 = vld [vmem:[%s2 + $0xb8] sm:$0xff]
  %v59 = vld [vmem:[%s2 + $0xc0] sm:$0xff]
  %v60 = vld [vmem:[%s2 + $0xc8] sm:$0xff]
  %v61 = vld [vmem:[%s2 + $0xd0] sm:$0xff]
  %v62 = vld [vmem:[%s2 + $0xd8] sm:$0xff]
  %v63 = vld [vmem:[%s2 + $0xe0] sm:$0xff]
  %v64 = vld [vmem:[%s2 + $0xe8] sm:$0xff]
  %v65 = vld [vmem:[%s2 + $0xf0] sm:$0xff]
  %v66 = vld [vmem:[%s2 + $0xf8] sm:$0xff]
  %v67 = vld [vmem:[%s2 + $0x100] sm:$0xff]
  %v68 = vld [vmem:[%s2 + $0x108] sm:$0xff]
  %v69 = vld [vmem:[%s2 + $0x110] sm:$0xff]
  %v70 = vld [vmem:[%s2 + $0x118] sm:$0xff]
  %v71 = vld [vmem:[%s2 + $0x120] sm:$0xff]
  %v72 = vld [vmem:[%s2 + $0x128] sm:$0xff]
  %v73 = vld [vmem:[%s2 + $0x130] sm:$0xff]
  %v74 = vld [vmem:[%s2 + $0x138] sm:$0xff]
  %v75 = vld [vmem:[%s2 + $0x140] sm:$0xff]
  %v76 = vld [vmem:[%s2 + $0x148] sm:$0xff]
  %v77 = vld [vmem:[%s2 + $0x150] sm:$0xff]
  %v78 = vld [vmem:[%s2 + $0x158] sm:$0xff]
  %v79 = vld [vmem:[%s2 + $0x160] sm:$0xff]
  %v80 = vld [vmem:[%s2 + $0x168] sm:$0xff]
  %v81 = vld [vmem:[%s2 + $0x170] sm:$0xff]
  %v82 = vld [vmem:[%s2 + $0x178] sm:$0xff]
  %v83 = vld [vmem:[%s2 + $0x180] sm:$0xff]
  %v84 = vld [vmem:[%s2 + $0x188] sm:$0xff]
  %v85 = vld [vmem:[%s2 + $0x190] sm:$0xff]
  %v86 = vld [vmem:[%s2 + $0x198] sm:$0xff]
  %v87 = vld [vmem:[%s2 + $0x1a0] sm:$0xff]
  %v88 = vld [vmem:[%s2 + $0x1a8] sm:$0xff]
  %v89 = vld [vmem:[%s2 + $0x1b0] sm:$0xff]
  %v90 = vld [vmem:[%s2 + $0x1b8] sm:$0xff]
  %v91 = vld [vmem:[%s2 + $0x1c0] sm:$0xff]
  %v92 = vld [vmem:[%s2 + $0x1c8] sm:$0xff]
  %v93 = vld [vmem:[%s2 + $0x1d0] sm:$0xff]
  %v94 = vld [vmem:[%s2 + $0x1d8] sm:$0xff]
  %v95 = vld [vmem:[%s2 + $0x1e0] sm:$0xff]
  %v96 = vld [vmem:[%s2 + $0x1e8] sm:$0xff]
  %v97 = vld [vmem:[%s2 + $0x1f0] sm:$0xff]
  %v98 = vld [vmem:[%s2 + $0x1f8] sm:$0xff]
  %v99 = vld [vmem:[%s3] sm:$0xff]
  %v100 = vld [vmem:[%s3 + $0x8] sm:$0xff]
  %v101 = vld [vmem:[%s3 + $0x10] sm:$0xff]
  %v102 = vld [vmem:[%s3 + $0x18] sm:$0xff]
  %v103 = vld [vmem:[%s3 + $0x20] sm:$0xff]
  %v104 = vld [vmem:[%s3 + $0x28] sm:$0xff]
  %v105 = vld [vmem:[%s3 + $0x30] sm:$0xff]
  %v106 = vld [vmem:[%s3 + $0x38] sm:$0xff]
  %v107 = vld [vmem:[%s3 + $0x40] sm:$0xff]
  %v108 = vld [vmem:[%s3 + $0x48] sm:$0xff]
  %v109 = vld [vmem:[%s3 + $0x50] sm:$0xff]
  %v110 = vld [vmem:[%s3 + $0x58] sm:$0xff]
  %v111 = vld [vmem:[%s3 + $0x60] sm:$0xff]
  %v112 = vld [vmem:[%s3 + $0x68] sm:$0xff]
  %v113 = vld [vmem:[%s3 + $0x70] sm:$0xff]
  %v114 = vld [vmem:[%s3 + $0x78] sm:$0xff]
  %v115 = vld [vmem:[%s3 + $0x80] sm:$0xff]
  %v116 = vld [vmem:[%s3 + $0x88] sm:$0xff]
  %v117 = vld [vmem:[%s3 + $0x90] sm:$0xff]
  %v118 = vld [vmem:[%s3 + $0x98] sm:$0xff]
  %v119 = vld [vmem:[%s3 + $0xa0] sm:$0xff]
  %v120 = vld [vmem:[%s3 + $0xa8] sm:$0xff]
  %v121 = vld [vmem:[%s3 + $0xb0] sm:$0xff]
  %v122 = vld [vmem:[%s3 + $0xb8] sm:$0xff]
  %v123 = vld [vmem:[%s3 + $0xc0] sm:$0xff]
  %v124 = vld [vmem:[%s3 + $0xc8] sm:$0xff]
  %v125 = vld [vmem:[%s3 + $0xd0] sm:$0xff]
  %v126 = vld [vmem:[%s3 + $0xd8] sm:$0xff]
  %v127 = vld [vmem:[%s3 + $0xe0] sm:$0xff]
  %v128 = vld [vmem:[%s3 + $0xe8] sm:$0xff]
  %v129 = vld [vmem:[%s3 + $0xf0] sm:$0xff]
  %v130 = vld [vmem:[%s3 + $0xf8] sm:$0xff]
  %v131 = vld [vmem:[%s3 + $0x100] sm:$0xff]
  %v132 = vld [vmem:[%s3 + $0x108] sm:$0xff]
  %v133 = vld [vmem:[%s3 + $0x110] sm:$0xff]
  %v134 = vld [vmem:[%s3 + $0x118] sm:$0xff]
  %v135 = vld [vmem:[%s3 + $0x120] sm:$0xff]
  %v136 = vld [vmem:[%s3 + $0x128] sm:$0xff]
  %v137 = vld [vmem:[%s3 + $0x130] sm:$0xff]
  %v138 = vld [vmem:[%s3 + $0x138] sm:$0xff]
  %v139 = vld [vmem:[%s3 + $0x140] sm:$0xff]
  %v140 = vld [vmem:[%s3 + $0x148] sm:$0xff]
  %v141 = vld [vmem:[%s3 + $0x150] sm:$0xff]
  %v142 = vld [vmem:[%s3 + $0x158] sm:$0xff]
  %v143 = vld [vmem:[%s3 + $0x160] sm:$0xff]
  %v144 = vld [vmem:[%s3 + $0x168] sm:$0xff]
  %v145 = vld [vmem:[%s3 + $0x170] sm:$0xff]
  %v146 = vld [vmem:[%s3 + $0x178] sm:$0xff]
  %v147 = vld [vmem:[%s3 + $0x180] sm:$0xff]
  %v148 = vld [vmem:[%s3 + $0x188] sm:$0xff]
  %v149 = vld [vmem:[%s3 + $0x190] sm:$0xff]
  %v150 = vld [vmem:[%s3 + $0x198] sm:$0xff]
  %v151 = vld [vmem:[%s3 + $0x1a0] sm:$0xff]
  %v152 = vld [vmem:[%s3 + $0x1a8] sm:$0xff]
  %v153 = vld [vmem:[%s3 + $0x1b0] sm:$0xff]
  %v154 = vld [vmem:[%s3 + $0x1b8] sm:$0xff]
  %v155 = vld [vmem:[%s3 + $0x1c0] sm:$0xff]
  %v156 = vld [vmem:[%s3 + $0x1c8] sm:$0xff]
  %v157 = vld [vmem:[%s3 + $0x1d0] sm:$0xff]
  %v158 = vld [vmem:[%s3 + $0x1d8] sm:$0xff]
  %v159 = vld [vmem:[%s3 + $0x1e0] sm:$0xff]
  %v160 = vld [vmem:[%s3 + $0x1e8] sm:$0xff]
  %v161 = vld [vmem:[%s3 + $0x1f0] sm:$0xff]
  %v162 = vld [vmem:[%s3 + $0x1f8] sm:$0xff]
  %v163 = vlaneseq
  %v164 = vshrl.u32 %v163, 7
  %v165 = vsub.s32 0, %v164
  %v166 = vrot.slane %v19, %v165
  %v167 = vlaneseq
  %v168 = vshrl.u32 %v167, 7
  %v169 = vsub.s32 0, %v168
  %v170 = vrot.slane %v20, %v169
  %v171 = vmul.f32 %v166, %v35
  %v172 = vmul.f32 %v170, %v36
  %v173 = vmul.f32 %v166, %v37
  %v174 = vmul.f32 %v170, %v38
  %v175 = vadd.f32 %v171, 0.0
  %v176 = vadd.f32 %v172, 0.0
  %v177 = vadd.f32 %v173, 0.0
  %v178 = vadd.f32 %v174, 0.0
  %v179 = vlaneseq
  %v180 = vshrl.u32 %v179, 7
  %v181 = vsub.s32 0, %v180
  %v182 = vrot.slane %v27, %v181
  %v183 = vlaneseq
  %v184 = vshrl.u32 %v183, 7
  %v185 = vsub.s32 0, %v184
  %v186 = vrot.slane %v28, %v185
  %v187 = vmul.f32 %v182, %v99
  %v188 = vmul.f32 %v186, %v100
  %v189 = vmul.f32 %v182, %v101
  %v190 = vmul.f32 %v186, %v102
  %v191 = vsub.f32 %v175, %v187
  %v192 = vsub.f32 %v176, %v188
  %v193 = vsub.f32 %v177, %v189
  %v194 = vsub.f32 %v178, %v190
  %v195 = vmul.f32 %v166, %v99
  %v196 = vmul.f32 %v170, %v100
  %v197 = vmul.f32 %v166, %v101
  %v198 = vmul.f32 %v170, %v102
  %v199 = vadd.f32 %v195, 0.0
  %v200 = vadd.f32 %v196, 0.0
  %v201 = vadd.f32 %v197, 0.0
  %v202 = vadd.f32 %v198, 0.0
  %v203 = vmul.f32 %v182, %v35
  %v204 = vmul.f32 %v186, %v36
  %v205 = vmul.f32 %v182, %v37
  %v206 = vmul.f32 %v186, %v38
  %v207 = vadd.f32 %v199, %v203
  %v208 = vadd.f32 %v200, %v204
  %v209 = vadd.f32 %v201, %v205
  %v210 = vadd.f32 %v202, %v206
  %v211 = vlaneseq
  %v212 = vshrl.u32 %v211, 7
  %v213 = vsub.s32 1, %v212
  %v214 = vrot.slane %v19, %v213
  %v215 = vlaneseq
  %v216 = vshrl.u32 %v215, 7
  %v217 = vsub.s32 1, %v216
  %v218 = vrot.slane %v20, %v217
  %v219 = vmul.f32 %v214, %v39
  %v220 = vmul.f32 %v218, %v40
  %v221 = vmul.f32 %v214, %v41
  %v222 = vmul.f32 %v218, %v42
  %v223 = vadd.f32 %v191, %v219
  %v224 = vadd.f32 %v192, %v220
  %v225 = vadd.f32 %v193, %v221
  %v226 = vadd.f32 %v194, %v222
  %v227 = vlaneseq
  %v228 = vshrl.u32 %v227, 7
  %v229 = vsub.s32 1, %v228
  %v230 = vrot.slane %v27, %v229
  %v231 = vlaneseq
  %v232 = vshrl.u32 %v231, 7
  %v233 = vsub.s32 1, %v232
  %v234 = vrot.slane %v28, %v233
  %v235 = vmul.f32 %v230, %v103
  %v236 = vmul.f32 %v234, %v104
  %v237 = vmul.f32 %v230, %v105
  %v238 = vmul.f32 %v234, %v106
  %v239 = vsub.f32 %v223, %v235
  %v240 = vsub.f32 %v224, %v236
  %v241 = vsub.f32 %v225, %v237
  %v242 = vsub.f32 %v226, %v238
  %v243 = vmul.f32 %v214, %v103
  %v244 = vmul.f32 %v218, %v104
  %v245 = vmul.f32 %v214, %v105
  %v246 = vmul.f32 %v218, %v106
  %v247 = vadd.f32 %v207, %v243
  %v248 = vadd.f32 %v208, %v244
  %v249 = vadd.f32 %v209, %v245
  %v250 = vadd.f32 %v210, %v246
  %v251 = vmul.f32 %v230, %v39
  %v252 = vmul.f32 %v234, %v40
  %v253 = vmul.f32 %v230, %v41
  %v254 = vmul.f32 %v234, %v42
  %v255 = vadd.f32 %v247, %v251
  %v256 = vadd.f32 %v248, %v252
  %v257 = vadd.f32 %v249, %v253
  %v258 = vadd.f32 %v250, %v254
  %v259 = vlaneseq
  %v260 = vshrl.u32 %v259, 7
  %v261 = vsub.s32 2, %v260
  %v262 = vrot.slane %v19, %v261
  %v263 = vlaneseq
  %v264 = vshrl.u32 %v263, 7
  %v265 = vsub.s32 2, %v264
  %v266 = vrot.slane %v20, %v265
  %v267 = vmul.f32 %v262, %v43
  %v268 = vmul.f32 %v266, %v44
  %v269 = vmul.f32 %v262, %v45
  %v270 = vmul.f32 %v266, %v46
  %v271 = vadd.f32 %v239, %v267
  %v272 = vadd.f32 %v240, %v268
  %v273 = vadd.f32 %v241, %v269
  %v274 = vadd.f32 %v242, %v270
  %v275 = vlaneseq
  %v276 = vshrl.u32 %v275, 7
  %v277 = vsub.s32 2, %v276
  %v278 = vrot.slane %v27, %v277
  %v279 = vlaneseq
  %v280 = vshrl.u32 %v279, 7
  %v281 = vsub.s32 2, %v280
  %v282 = vrot.slane %v28, %v281
  %v283 = vmul.f32 %v278, %v107
  %v284 = vmul.f32 %v282, %v108
  %v285 = vmul.f32 %v278, %v109
  %v286 = vmul.f32 %v282, %v110
  %v287 = vsub.f32 %v271, %v283
  %v288 = vsub.f32 %v272, %v284
  %v289 = vsub.f32 %v273, %v285
  %v290 = vsub.f32 %v274, %v286
  %v291 = vmul.f32 %v262, %v107
  %v292 = vmul.f32 %v266, %v108
  %v293 = vmul.f32 %v262, %v109
  %v294 = vmul.f32 %v266, %v110
  %v295 = vadd.f32 %v255, %v291
  %v296 = vadd.f32 %v256, %v292
  %v297 = vadd.f32 %v257, %v293
  %v298 = vadd.f32 %v258, %v294
  %v299 = vmul.f32 %v278, %v43
  %v300 = vmul.f32 %v282, %v44
  %v301 = vmul.f32 %v278, %v45
  %v302 = vmul.f32 %v282, %v46
  %v303 = vadd.f32 %v295, %v299
  %v304 = vadd.f32 %v296, %v300
  %v305 = vadd.f32 %v297, %v301
  %v306 = vadd.f32 %v298, %v302
  %v307 = vlaneseq
  %v308 = vshrl.u32 %v307, 7
  %v309 = vsub.s32 3, %v308
  %v310 = vrot.slane %v19, %v309
  %v311 = vlaneseq
  %v312 = vshrl.u32 %v311, 7
  %v313 = vsub.s32 3, %v312
  %v314 = vrot.slane %v20, %v313
  %v315 = vmul.f32 %v310, %v47
  %v316 = vmul.f32 %v314, %v48
  %v317 = vmul.f32 %v310, %v49
  %v318 = vmul.f32 %v314, %v50
  %v319 = vadd.f32 %v287, %v315
  %v320 = vadd.f32 %v288, %v316
  %v321 = vadd.f32 %v289, %v317
  %v322 = vadd.f32 %v290, %v318
  %v323 = vlaneseq
  %v324 = vshrl.u32 %v323, 7
  %v325 = vsub.s32 3, %v324
  %v326 = vrot.slane %v27, %v325
  %v327 = vlaneseq
  %v328 = vshrl.u32 %v327, 7
  %v329 = vsub.s32 3, %v328
  %v330 = vrot.slane %v28, %v329
  %v331 = vmul.f32 %v326, %v111
  %v332 = vmul.f32 %v330, %v112
  %v333 = vmul.f32 %v326, %v113
  %v334 = vmul.f32 %v330, %v114
  %v335 = vsub.f32 %v319, %v331
  %v336 = vsub.f32 %v320, %v332
  %v337 = vsub.f32 %v321, %v333
  %v338 = vsub.f32 %v322, %v334
  %v339 = vmul.f32 %v310, %v111
  %v340 = vmul.f32 %v314, %v112
  %v341 = vmul.f32 %v310, %v113
  %v342 = vmul.f32 %v314, %v114
  %v343 = vadd.f32 %v303, %v339
  %v344 = vadd.f32 %v304, %v340
  %v345 = vadd.f32 %v305, %v341
  %v346 = vadd.f32 %v306, %v342
  %v347 = vmul.f32 %v326, %v47
  %v348 = vmul.f32 %v330, %v48
  %v349 = vmul.f32 %v326, %v49
  %v350 = vmul.f32 %v330, %v50
  %v351 = vadd.f32 %v343, %v347
  %v352 = vadd.f32 %v344, %v348
  %v353 = vadd.f32 %v345, %v349
  %v354 = vadd.f32 %v346, %v350
  %v355 = vlaneseq
  %v356 = vshrl.u32 %v355, 7
  %v357 = vsub.s32 4, %v356
  %v358 = vrot.slane %v19, %v357
  %v359 = vlaneseq
  %v360 = vshrl.u32 %v359, 7
  %v361 = vsub.s32 4, %v360
  %v362 = vrot.slane %v20, %v361
  %v363 = vmul.f32 %v358, %v51
  %v364 = vmul.f32 %v362, %v52
  %v365 = vmul.f32 %v358, %v53
  %v366 = vmul.f32 %v362, %v54
  %v367 = vadd.f32 %v335, %v363
  %v368 = vadd.f32 %v336, %v364
  %v369 = vadd.f32 %v337, %v365
  %v370 = vadd.f32 %v338, %v366
  %v371 = vlaneseq
  %v372 = vshrl.u32 %v371, 7
  %v373 = vsub.s32 4, %v372
  %v374 = vrot.slane %v27, %v373
  %v375 = vlaneseq
  %v376 = vshrl.u32 %v375, 7
  %v377 = vsub.s32 4, %v376
  %v378 = vrot.slane %v28, %v377
  %v379 = vmul.f32 %v374, %v115
  %v380 = vmul.f32 %v378, %v116
  %v381 = vmul.f32 %v374, %v117
  %v382 = vmul.f32 %v378, %v118
  %v383 = vsub.f32 %v367, %v379
  %v384 = vsub.f32 %v368, %v380
  %v385 = vsub.f32 %v369, %v381
  %v386 = vsub.f32 %v370, %v382
  %v387 = vmul.f32 %v358, %v115
  %v388 = vmul.f32 %v362, %v116
  %v389 = vmul.f32 %v358, %v117
  %v390 = vmul.f32 %v362, %v118
  %v391 = vadd.f32 %v351, %v387
  %v392 = vadd.f32 %v352, %v388
  %v393 = vadd.f32 %v353, %v389
  %v394 = vadd.f32 %v354, %v390
  %v395 = vmul.f32 %v374, %v51
  %v396 = vmul.f32 %v378, %v52
  %v397 = vmul.f32 %v374, %v53
  %v398 = vmul.f32 %v378, %v54
  %v399 = vadd.f32 %v391, %v395
  %v400 = vadd.f32 %v392, %v396
  %v401 = vadd.f32 %v393, %v397
  %v402 = vadd.f32 %v394, %v398
  %v403 = vlaneseq
  %v404 = vshrl.u32 %v403, 7
  %v405 = vsub.s32 5, %v404
  %v406 = vrot.slane %v19, %v405
  %v407 = vlaneseq
  %v408 = vshrl.u32 %v407, 7
  %v409 = vsub.s32 5, %v408
  %v410 = vrot.slane %v20, %v409
  %v411 = vmul.f32 %v406, %v55
  %v412 = vmul.f32 %v410, %v56
  %v413 = vmul.f32 %v406, %v57
  %v414 = vmul.f32 %v410, %v58
  %v415 = vadd.f32 %v383, %v411
  %v416 = vadd.f32 %v384, %v412
  %v417 = vadd.f32 %v385, %v413
  %v418 = vadd.f32 %v386, %v414
  %v419 = vlaneseq
  %v420 = vshrl.u32 %v419, 7
  %v421 = vsub.s32 5, %v420
  %v422 = vrot.slane %v27, %v421
  %v423 = vlaneseq
  %v424 = vshrl.u32 %v423, 7
  %v425 = vsub.s32 5, %v424
  %v426 = vrot.slane %v28, %v425
  %v427 = vmul.f32 %v422, %v119
  %v428 = vmul.f32 %v426, %v120
  %v429 = vmul.f32 %v422, %v121
  %v430 = vmul.f32 %v426, %v122
  %v431 = vsub.f32 %v415, %v427
  %v432 = vsub.f32 %v416, %v428
  %v433 = vsub.f32 %v417, %v429
  %v434 = vsub.f32 %v418, %v430
  %v435 = vmul.f32 %v406, %v119
  %v436 = vmul.f32 %v410, %v120
  %v437 = vmul.f32 %v406, %v121
  %v438 = vmul.f32 %v410, %v122
  %v439 = vadd.f32 %v399, %v435
  %v440 = vadd.f32 %v400, %v436
  %v441 = vadd.f32 %v401, %v437
  %v442 = vadd.f32 %v402, %v438
  %v443 = vmul.f32 %v422, %v55
  %v444 = vmul.f32 %v426, %v56
  %v445 = vmul.f32 %v422, %v57
  %v446 = vmul.f32 %v426, %v58
  %v447 = vadd.f32 %v439, %v443
  %v448 = vadd.f32 %v440, %v444
  %v449 = vadd.f32 %v441, %v445
  %v450 = vadd.f32 %v442, %v446
  %v451 = vlaneseq
  %v452 = vshrl.u32 %v451, 7
  %v453 = vsub.s32 6, %v452
  %v454 = vrot.slane %v19, %v453
  %v455 = vlaneseq
  %v456 = vshrl.u32 %v455, 7
  %v457 = vsub.s32 6, %v456
  %v458 = vrot.slane %v20, %v457
  %v459 = vmul.f32 %v454, %v59
  %v460 = vmul.f32 %v458, %v60
  %v461 = vmul.f32 %v454, %v61
  %v462 = vmul.f32 %v458, %v62
  %v463 = vadd.f32 %v431, %v459
  %v464 = vadd.f32 %v432, %v460
  %v465 = vadd.f32 %v433, %v461
  %v466 = vadd.f32 %v434, %v462
  %v467 = vlaneseq
  %v468 = vshrl.u32 %v467, 7
  %v469 = vsub.s32 6, %v468
  %v470 = vrot.slane %v27, %v469
  %v471 = vlaneseq
  %v472 = vshrl.u32 %v471, 7
  %v473 = vsub.s32 6, %v472
  %v474 = vrot.slane %v28, %v473
  %v475 = vmul.f32 %v470, %v123
  %v476 = vmul.f32 %v474, %v124
  %v477 = vmul.f32 %v470, %v125
  %v478 = vmul.f32 %v474, %v126
  %v479 = vsub.f32 %v463, %v475
  %v480 = vsub.f32 %v464, %v476
  %v481 = vsub.f32 %v465, %v477
  %v482 = vsub.f32 %v466, %v478
  %v483 = vmul.f32 %v454, %v123
  %v484 = vmul.f32 %v458, %v124
  %v485 = vmul.f32 %v454, %v125
  %v486 = vmul.f32 %v458, %v126
  %v487 = vadd.f32 %v447, %v483
  %v488 = vadd.f32 %v448, %v484
  %v489 = vadd.f32 %v449, %v485
  %v490 = vadd.f32 %v450, %v486
  %v491 = vmul.f32 %v470, %v59
  %v492 = vmul.f32 %v474, %v60
  %v493 = vmul.f32 %v470, %v61
  %v494 = vmul.f32 %v474, %v62
  %v495 = vadd.f32 %v487, %v491
  %v496 = vadd.f32 %v488, %v492
  %v497 = vadd.f32 %v489, %v493
  %v498 = vadd.f32 %v490, %v494
  %v499 = vlaneseq
  %v500 = vshrl.u32 %v499, 7
  %v501 = vsub.s32 7, %v500
  %v502 = vrot.slane %v19, %v501
  %v503 = vlaneseq
  %v504 = vshrl.u32 %v503, 7
  %v505 = vsub.s32 7, %v504
  %v506 = vrot.slane %v20, %v505
  %v507 = vmul.f32 %v502, %v63
  %v508 = vmul.f32 %v506, %v64
  %v509 = vmul.f32 %v502, %v65
  %v510 = vmul.f32 %v506, %v66
  %v511 = vadd.f32 %v479, %v507
  %v512 = vadd.f32 %v480, %v508
  %v513 = vadd.f32 %v481, %v509
  %v514 = vadd.f32 %v482, %v510
  %v515 = vlaneseq
  %v516 = vshrl.u32 %v515, 7
  %v517 = vsub.s32 7, %v516
  %v518 = vrot.slane %v27, %v517
  %v519 = vlaneseq
  %v520 = vshrl.u32 %v519, 7
  %v521 = vsub.s32 7, %v520
  %v522 = vrot.slane %v28, %v521
  %v523 = vmul.f32 %v518, %v127
  %v524 = vmul.f32 %v522, %v128
  %v525 = vmul.f32 %v518, %v129
  %v526 = vmul.f32 %v522, %v130
  %v527 = vsub.f32 %v511, %v523
  %v528 = vsub.f32 %v512, %v524
  %v529 = vsub.f32 %v513, %v525
  %v530 = vsub.f32 %v514, %v526
  %v531 = vmul.f32 %v502, %v127
  %v532 = vmul.f32 %v506, %v128
  %v533 = vmul.f32 %v502, %v129
  %v534 = vmul.f32 %v506, %v130
  %v535 = vadd.f32 %v495, %v531
  %v536 = vadd.f32 %v496, %v532
  %v537 = vadd.f32 %v497, %v533
  %v538 = vadd.f32 %v498, %v534
  %v539 = vmul.f32 %v518, %v63
  %v540 = vmul.f32 %v522, %v64
  %v541 = vmul.f32 %v518, %v65
  %v542 = vmul.f32 %v522, %v66
  %v543 = vadd.f32 %v535, %v539
  %v544 = vadd.f32 %v536, %v540
  %v545 = vadd.f32 %v537, %v541
  %v546 = vadd.f32 %v538, %v542
  %v547 = vlaneseq
  %v548 = vshrl.u32 %v547, 7
  %v549 = vsub.s32 0, %v548
  %v550 = vrot.slane %v21, %v549
  %v551 = vlaneseq
  %v552 = vshrl.u32 %v551, 7
  %v553 = vsub.s32 0, %v552
  %v554 = vrot.slane %v22, %v553
  %v555 = vmul.f32 %v550, %v67
  %v556 = vmul.f32 %v554, %v68
  %v557 = vmul.f32 %v550, %v69
  %v558 = vmul.f32 %v554, %v70
  %v559 = vadd.f32 %v527, %v555
  %v560 = vadd.f32 %v528, %v556
  %v561 = vadd.f32 %v529, %v557
  %v562 = vadd.f32 %v530, %v558
  %v563 = vlaneseq
  %v564 = vshrl.u32 %v563, 7
  %v565 = vsub.s32 0, %v564
  %v566 = vrot.slane %v29, %v565
  %v567 = vlaneseq
  %v568 = vshrl.u32 %v567, 7
  %v569 = vsub.s32 0, %v568
  %v570 = vrot.slane %v30, %v569
  %v571 = vmul.f32 %v566, %v131
  %v572 = vmul.f32 %v570, %v132
  %v573 = vmul.f32 %v566, %v133
  %v574 = vmul.f32 %v570, %v134
  %v575 = vsub.f32 %v559, %v571
  %v576 = vsub.f32 %v560, %v572
  %v577 = vsub.f32 %v561, %v573
  %v578 = vsub.f32 %v562, %v574
  %v579 = vmul.f32 %v550, %v131
  %v580 = vmul.f32 %v554, %v132
  %v581 = vmul.f32 %v550, %v133
  %v582 = vmul.f32 %v554, %v134
  %v583 = vadd.f32 %v543, %v579
  %v584 = vadd.f32 %v544, %v580
  %v585 = vadd.f32 %v545, %v581
  %v586 = vadd.f32 %v546, %v582
  %v587 = vmul.f32 %v566, %v67
  %v588 = vmul.f32 %v570, %v68
  %v589 = vmul.f32 %v566, %v69
  %v590 = vmul.f32 %v570, %v70
  %v591 = vadd.f32 %v583, %v587
  %v592 = vadd.f32 %v584, %v588
  %v593 = vadd.f32 %v585, %v589
  %v594 = vadd.f32 %v586, %v590
  %v595 = vlaneseq
  %v596 = vshrl.u32 %v595, 7
  %v597 = vsub.s32 1, %v596
  %v598 = vrot.slane %v21, %v597
  %v599 = vlaneseq
  %v600 = vshrl.u32 %v599, 7
  %v601 = vsub.s32 1, %v600
  %v602 = vrot.slane %v22, %v601
  %v603 = vmul.f32 %v598, %v71
  %v604 = vmul.f32 %v602, %v72
  %v605 = vmul.f32 %v598, %v73
  %v606 = vmul.f32 %v602, %v74
  %v607 = vadd.f32 %v575, %v603
  %v608 = vadd.f32 %v576, %v604
  %v609 = vadd.f32 %v577, %v605
  %v610 = vadd.f32 %v578, %v606
  %v611 = vlaneseq
  %v612 = vshrl.u32 %v611, 7
  %v613 = vsub.s32 1, %v612
  %v614 = vrot.slane %v29, %v613
  %v615 = vlaneseq
  %v616 = vshrl.u32 %v615, 7
  %v617 = vsub.s32 1, %v616
  %v618 = vrot.slane %v30, %v617
  %v619 = vmul.f32 %v614, %v135
  %v620 = vmul.f32 %v618, %v136
  %v621 = vmul.f32 %v614, %v137
  %v622 = vmul.f32 %v618, %v138
  %v623 = vsub.f32 %v607, %v619
  %v624 = vsub.f32 %v608, %v620
  %v625 = vsub.f32 %v609, %v621
  %v626 = vsub.f32 %v610, %v622
  %v627 = vmul.f32 %v598, %v135
  %v628 = vmul.f32 %v602, %v136
  %v629 = vmul.f32 %v598, %v137
  %v630 = vmul.f32 %v602, %v138
  %v631 = vadd.f32 %v591, %v627
  %v632 = vadd.f32 %v592, %v628
  %v633 = vadd.f32 %v593, %v629
  %v634 = vadd.f32 %v594, %v630
  %v635 = vmul.f32 %v614, %v71
  %v636 = vmul.f32 %v618, %v72
  %v637 = vmul.f32 %v614, %v73
  %v638 = vmul.f32 %v618, %v74
  %v639 = vadd.f32 %v631, %v635
  %v640 = vadd.f32 %v632, %v636
  %v641 = vadd.f32 %v633, %v637
  %v642 = vadd.f32 %v634, %v638
  %v643 = vlaneseq
  %v644 = vshrl.u32 %v643, 7
  %v645 = vsub.s32 2, %v644
  %v646 = vrot.slane %v21, %v645
  %v647 = vlaneseq
  %v648 = vshrl.u32 %v647, 7
  %v649 = vsub.s32 2, %v648
  %v650 = vrot.slane %v22, %v649
  %v651 = vmul.f32 %v646, %v75
  %v652 = vmul.f32 %v650, %v76
  %v653 = vmul.f32 %v646, %v77
  %v654 = vmul.f32 %v650, %v78
  %v655 = vadd.f32 %v623, %v651
  %v656 = vadd.f32 %v624, %v652
  %v657 = vadd.f32 %v625, %v653
  %v658 = vadd.f32 %v626, %v654
  %v659 = vlaneseq
  %v660 = vshrl.u32 %v659, 7
  %v661 = vsub.s32 2, %v660
  %v662 = vrot.slane %v29, %v661
  %v663 = vlaneseq
  %v664 = vshrl.u32 %v663, 7
  %v665 = vsub.s32 2, %v664
  %v666 = vrot.slane %v30, %v665
  %v667 = vmul.f32 %v662, %v139
  %v668 = vmul.f32 %v666, %v140
  %v669 = vmul.f32 %v662, %v141
  %v670 = vmul.f32 %v666, %v142
  %v671 = vsub.f32 %v655, %v667
  %v672 = vsub.f32 %v656, %v668
  %v673 = vsub.f32 %v657, %v669
  %v674 = vsub.f32 %v658, %v670
  %v675 = vmul.f32 %v646, %v139
  %v676 = vmul.f32 %v650, %v140
  %v677 = vmul.f32 %v646, %v141
  %v678 = vmul.f32 %v650, %v142
  %v679 = vadd.f32 %v639, %v675
  %v680 = vadd.f32 %v640, %v676
  %v681 = vadd.f32 %v641, %v677
  %v682 = vadd.f32 %v642, %v678
  %v683 = vmul.f32 %v662, %v75
  %v684 = vmul.f32 %v666, %v76
  %v685 = vmul.f32 %v662, %v77
  %v686 = vmul.f32 %v666, %v78
  %v687 = vadd.f32 %v679, %v683
  %v688 = vadd.f32 %v680, %v684
  %v689 = vadd.f32 %v681, %v685
  %v690 = vadd.f32 %v682, %v686
  %v691 = vlaneseq
  %v692 = vshrl.u32 %v691, 7
  %v693 = vsub.s32 3, %v692
  %v694 = vrot.slane %v21, %v693
  %v695 = vlaneseq
  %v696 = vshrl.u32 %v695, 7
  %v697 = vsub.s32 3, %v696
  %v698 = vrot.slane %v22, %v697
  %v699 = vmul.f32 %v694, %v79
  %v700 = vmul.f32 %v698, %v80
  %v701 = vmul.f32 %v694, %v81
  %v702 = vmul.f32 %v698, %v82
  %v703 = vadd.f32 %v671, %v699
  %v704 = vadd.f32 %v672, %v700
  %v705 = vadd.f32 %v673, %v701
  %v706 = vadd.f32 %v674, %v702
  %v707 = vlaneseq
  %v708 = vshrl.u32 %v707, 7
  %v709 = vsub.s32 3, %v708
  %v710 = vrot.slane %v29, %v709
  %v711 = vlaneseq
  %v712 = vshrl.u32 %v711, 7
  %v713 = vsub.s32 3, %v712
  %v714 = vrot.slane %v30, %v713
  %v715 = vmul.f32 %v710, %v143
  %v716 = vmul.f32 %v714, %v144
  %v717 = vmul.f32 %v710, %v145
  %v718 = vmul.f32 %v714, %v146
  %v719 = vsub.f32 %v703, %v715
  %v720 = vsub.f32 %v704, %v716
  %v721 = vsub.f32 %v705, %v717
  %v722 = vsub.f32 %v706, %v718
  %v723 = vmul.f32 %v694, %v143
  %v724 = vmul.f32 %v698, %v144
  %v725 = vmul.f32 %v694, %v145
  %v726 = vmul.f32 %v698, %v146
  %v727 = vadd.f32 %v687, %v723
  %v728 = vadd.f32 %v688, %v724
  %v729 = vadd.f32 %v689, %v725
  %v730 = vadd.f32 %v690, %v726
  %v731 = vmul.f32 %v710, %v79
  %v732 = vmul.f32 %v714, %v80
  %v733 = vmul.f32 %v710, %v81
  %v734 = vmul.f32 %v714, %v82
  %v735 = vadd.f32 %v727, %v731
  %v736 = vadd.f32 %v728, %v732
  %v737 = vadd.f32 %v729, %v733
  %v738 = vadd.f32 %v730, %v734
  %v739 = vlaneseq
  %v740 = vshrl.u32 %v739, 7
  %v741 = vsub.s32 4, %v740
  %v742 = vrot.slane %v21, %v741
  %v743 = vlaneseq
  %v744 = vshrl.u32 %v743, 7
  %v745 = vsub.s32 4, %v744
  %v746 = vrot.slane %v22, %v745
  %v747 = vmul.f32 %v742, %v83
  %v748 = vmul.f32 %v746, %v84
  %v749 = vmul.f32 %v742, %v85
  %v750 = vmul.f32 %v746, %v86
  %v751 = vadd.f32 %v719, %v747
  %v752 = vadd.f32 %v720, %v748
  %v753 = vadd.f32 %v721, %v749
  %v754 = vadd.f32 %v722, %v750
  %v755 = vlaneseq
  %v756 = vshrl.u32 %v755, 7
  %v757 = vsub.s32 4, %v756
  %v758 = vrot.slane %v29, %v757
  %v759 = vlaneseq
  %v760 = vshrl.u32 %v759, 7
  %v761 = vsub.s32 4, %v760
  %v762 = vrot.slane %v30, %v761
  %v763 = vmul.f32 %v758, %v147
  %v764 = vmul.f32 %v762, %v148
  %v765 = vmul.f32 %v758, %v149
  %v766 = vmul.f32 %v762, %v150
  %v767 = vsub.f32 %v751, %v763
  %v768 = vsub.f32 %v752, %v764
  %v769 = vsub.f32 %v753, %v765
  %v770 = vsub.f32 %v754, %v766
  %v771 = vmul.f32 %v742, %v147
  %v772 = vmul.f32 %v746, %v148
  %v773 = vmul.f32 %v742, %v149
  %v774 = vmul.f32 %v746, %v150
  %v775 = vadd.f32 %v735, %v771
  %v776 = vadd.f32 %v736, %v772
  %v777 = vadd.f32 %v737, %v773
  %v778 = vadd.f32 %v738, %v774
  %v779 = vmul.f32 %v758, %v83
  %v780 = vmul.f32 %v762, %v84
  %v781 = vmul.f32 %v758, %v85
  %v782 = vmul.f32 %v762, %v86
  %v783 = vadd.f32 %v775, %v779
  %v784 = vadd.f32 %v776, %v780
  %v785 = vadd.f32 %v777, %v781
  %v786 = vadd.f32 %v778, %v782
  %v787 = vlaneseq
  %v788 = vshrl.u32 %v787, 7
  %v789 = vsub.s32 5, %v788
  %v790 = vrot.slane %v21, %v789
  %v791 = vlaneseq
  %v792 = vshrl.u32 %v791, 7
  %v793 = vsub.s32 5, %v792
  %v794 = vrot.slane %v22, %v793
  %v795 = vmul.f32 %v790, %v87
  %v796 = vmul.f32 %v794, %v88
  %v797 = vmul.f32 %v790, %v89
  %v798 = vmul.f32 %v794, %v90
  %v799 = vadd.f32 %v767, %v795
  %v800 = vadd.f32 %v768, %v796
  %v801 = vadd.f32 %v769, %v797
  %v802 = vadd.f32 %v770, %v798
  %v803 = vlaneseq
  %v804 = vshrl.u32 %v803, 7
  %v805 = vsub.s32 5, %v804
  %v806 = vrot.slane %v29, %v805
  %v807 = vlaneseq
  %v808 = vshrl.u32 %v807, 7
  %v809 = vsub.s32 5, %v808
  %v810 = vrot.slane %v30, %v809
  %v811 = vmul.f32 %v806, %v151
  %v812 = vmul.f32 %v810, %v152
  %v813 = vmul.f32 %v806, %v153
  %v814 = vmul.f32 %v810, %v154
  %v815 = vsub.f32 %v799, %v811
  %v816 = vsub.f32 %v800, %v812
  %v817 = vsub.f32 %v801, %v813
  %v818 = vsub.f32 %v802, %v814
  %v819 = vmul.f32 %v790, %v151
  %v820 = vmul.f32 %v794, %v152
  %v821 = vmul.f32 %v790, %v153
  %v822 = vmul.f32 %v794, %v154
  %v823 = vadd.f32 %v783, %v819
  %v824 = vadd.f32 %v784, %v820
  %v825 = vadd.f32 %v785, %v821
  %v826 = vadd.f32 %v786, %v822
  %v827 = vmul.f32 %v806, %v87
  %v828 = vmul.f32 %v810, %v88
  %v829 = vmul.f32 %v806, %v89
  %v830 = vmul.f32 %v810, %v90
  %v831 = vadd.f32 %v823, %v827
  %v832 = vadd.f32 %v824, %v828
  %v833 = vadd.f32 %v825, %v829
  %v834 = vadd.f32 %v826, %v830
  %v835 = vlaneseq
  %v836 = vshrl.u32 %v835, 7
  %v837 = vsub.s32 6, %v836
  %v838 = vrot.slane %v21, %v837
  %v839 = vlaneseq
  %v840 = vshrl.u32 %v839, 7
  %v841 = vsub.s32 6, %v840
  %v842 = vrot.slane %v22, %v841
  %v843 = vmul.f32 %v838, %v91
  %v844 = vmul.f32 %v842, %v92
  %v845 = vmul.f32 %v838, %v93
  %v846 = vmul.f32 %v842, %v94
  %v847 = vadd.f32 %v815, %v843
  %v848 = vadd.f32 %v816, %v844
  %v849 = vadd.f32 %v817, %v845
  %v850 = vadd.f32 %v818, %v846
  %v851 = vlaneseq
  %v852 = vshrl.u32 %v851, 7
  %v853 = vsub.s32 6, %v852
  %v854 = vrot.slane %v29, %v853
  %v855 = vlaneseq
  %v856 = vshrl.u32 %v855, 7
  %v857 = vsub.s32 6, %v856
  %v858 = vrot.slane %v30, %v857
  %v859 = vmul.f32 %v854, %v155
  %v860 = vmul.f32 %v858, %v156
  %v861 = vmul.f32 %v854, %v157
  %v862 = vmul.f32 %v858, %v158
  %v863 = vsub.f32 %v847, %v859
  %v864 = vsub.f32 %v848, %v860
  %v865 = vsub.f32 %v849, %v861
  %v866 = vsub.f32 %v850, %v862
  %v867 = vmul.f32 %v838, %v155
  %v868 = vmul.f32 %v842, %v156
  %v869 = vmul.f32 %v838, %v157
  %v870 = vmul.f32 %v842, %v158
  %v871 = vadd.f32 %v831, %v867
  %v872 = vadd.f32 %v832, %v868
  %v873 = vadd.f32 %v833, %v869
  %v874 = vadd.f32 %v834, %v870
  %v875 = vmul.f32 %v854, %v91
  %v876 = vmul.f32 %v858, %v92
  %v877 = vmul.f32 %v854, %v93
  %v878 = vmul.f32 %v858, %v94
  %v879 = vadd.f32 %v871, %v875
  %v880 = vadd.f32 %v872, %v876
  %v881 = vadd.f32 %v873, %v877
  %v882 = vadd.f32 %v874, %v878
  %v883 = vlaneseq
  %v884 = vshrl.u32 %v883, 7
  %v885 = vsub.s32 7, %v884
  %v886 = vrot.slane %v21, %v885
  %v887 = vlaneseq
  %v888 = vshrl.u32 %v887, 7
  %v889 = vsub.s32 7, %v888
  %v890 = vrot.slane %v22, %v889
  %v891 = vmul.f32 %v886, %v95
  %v892 = vmul.f32 %v890, %v96
  %v893 = vmul.f32 %v886, %v97
  %v894 = vmul.f32 %v890, %v98
  %v895 = vadd.f32 %v863, %v891
  %v896 = vadd.f32 %v864, %v892
  %v897 = vadd.f32 %v865, %v893
  %v898 = vadd.f32 %v866, %v894
  %v899 = vlaneseq
  %v900 = vshrl.u32 %v899, 7
  %v901 = vsub.s32 7, %v900
  %v902 = vrot.slane %v29, %v901
  %v903 = vlaneseq
  %v904 = vshrl.u32 %v903, 7
  %v905 = vsub.s32 7, %v904
  %v906 = vrot.slane %v30, %v905
  %v907 = vmul.f32 %v902, %v159
  %v908 = vmul.f32 %v906, %v160
  %v909 = vmul.f32 %v902, %v161
  %v910 = vmul.f32 %v906, %v162
  %v911 = vsub.f32 %v895, %v907
  %v912 = vsub.f32 %v896, %v908
  %v913 = vsub.f32 %v897, %v909
  %v914 = vsub.f32 %v898, %v910
  %v915 = vmul.f32 %v886, %v159
  %v916 = vmul.f32 %v890, %v160
  %v917 = vmul.f32 %v886, %v161
  %v918 = vmul.f32 %v890, %v162
  %v919 = vadd.f32 %v879, %v915
  %v920 = vadd.f32 %v880, %v916
  %v921 = vadd.f32 %v881, %v917
  %v922 = vadd.f32 %v882, %v918
  %v923 = vmul.f32 %v902, %v95
  %v924 = vmul.f32 %v906, %v96
  %v925 = vmul.f32 %v902, %v97
  %v926 = vmul.f32 %v906, %v98
  %v927 = vadd.f32 %v919, %v923
  %v928 = vadd.f32 %v920, %v924
  %v929 = vadd.f32 %v921, %v925
  %v930 = vadd.f32 %v922, %v926
  %931 = vst [vmem:[%s4] sm:$0xff] %v911
  %932 = vst [vmem:[%s4 + $0x8] sm:$0xff] %v912
  %933 = vst [vmem:[%s4 + $0x10] sm:$0xff] %v913
  %934 = vst [vmem:[%s4 + $0x18] sm:$0xff] %v914
  %935 = vst [vmem:[%s5] sm:$0xff] %v927
  %936 = vst [vmem:[%s5 + $0x8] sm:$0xff] %v928
  %937 = vst [vmem:[%s5 + $0x10] sm:$0xff] %v929
  %938 = vst [vmem:[%s5 + $0x18] sm:$0xff] %v930
  %v939 = vlaneseq
  %v940 = vshrl.u32 %v939, 7
  %v941 = vsub.s32 0, %v940
  %v942 = vrot.slane %v23, %v941
  %v943 = vlaneseq
  %v944 = vshrl.u32 %v943, 7
  %v945 = vsub.s32 0, %v944
  %v946 = vrot.slane %v24, %v945
  %v947 = vmul.f32 %v942, %v35
  %v948 = vmul.f32 %v946, %v36
  %v949 = vmul.f32 %v942, %v37
  %v950 = vmul.f32 %v946, %v38
  %v951 = vadd.f32 %v947, 0.0
  %v952 = vadd.f32 %v948, 0.0
  %v953 = vadd.f32 %v949, 0.0
  %v954 = vadd.f32 %v950, 0.0
  %v955 = vlaneseq
  %v956 = vshrl.u32 %v955, 7
  %v957 = vsub.s32 0, %v956
  %v958 = vrot.slane %v31, %v957
  %v959 = vlaneseq
  %v960 = vshrl.u32 %v959, 7
  %v961 = vsub.s32 0, %v960
  %v962 = vrot.slane %v32, %v961
  %v963 = vmul.f32 %v958, %v99
  %v964 = vmul.f32 %v962, %v100
  %v965 = vmul.f32 %v958, %v101
  %v966 = vmul.f32 %v962, %v102
  %v967 = vsub.f32 %v951, %v963
  %v968 = vsub.f32 %v952, %v964
  %v969 = vsub.f32 %v953, %v965
  %v970 = vsub.f32 %v954, %v966
  %v971 = vmul.f32 %v942, %v99
  %v972 = vmul.f32 %v946, %v100
  %v973 = vmul.f32 %v942, %v101
  %v974 = vmul.f32 %v946, %v102
  %v975 = vadd.f32 %v971, 0.0
  %v976 = vadd.f32 %v972, 0.0
  %v977 = vadd.f32 %v973, 0.0
  %v978 = vadd.f32 %v974, 0.0
  %v979 = vmul.f32 %v958, %v35
  %v980 = vmul.f32 %v962, %v36
  %v981 = vmul.f32 %v958, %v37
  %v982 = vmul.f32 %v962, %v38
  %v983 = vadd.f32 %v975, %v979
  %v984 = vadd.f32 %v976, %v980
  %v985 = vadd.f32 %v977, %v981
  %v986 = vadd.f32 %v978, %v982
  %v987 = vlaneseq
  %v988 = vshrl.u32 %v987, 7
  %v989 = vsub.s32 1, %v988
  %v990 = vrot.slane %v23, %v989
  %v991 = vlaneseq
  %v992 = vshrl.u32 %v991, 7
  %v993 = vsub.s32 1, %v992
  %v994 = vrot.slane %v24, %v993
  %v995 = vmul.f32 %v990, %v39
  %v996 = vmul.f32 %v994, %v40
  %v997 = vmul.f32 %v990, %v41
  %v998 = vmul.f32 %v994, %v42
  %v999 = vadd.f32 %v967, %v995
  %v1000 = vadd.f32 %v968, %v996
  %v1001 = vadd.f32 %v969, %v997
  %v1002 = vadd.f32 %v970, %v998
  %v1003 = vlaneseq
  %v1004 = vshrl.u32 %v1003, 7
  %v1005 = vsub.s32 1, %v1004
  %v1006 = vrot.slane %v31, %v1005
  %v1007 = vlaneseq
  %v1008 = vshrl.u32 %v1007, 7
  %v1009 = vsub.s32 1, %v1008
  %v1010 = vrot.slane %v32, %v1009
  %v1011 = vmul.f32 %v1006, %v103
  %v1012 = vmul.f32 %v1010, %v104
  %v1013 = vmul.f32 %v1006, %v105
  %v1014 = vmul.f32 %v1010, %v106
  %v1015 = vsub.f32 %v999, %v1011
  %v1016 = vsub.f32 %v1000, %v1012
  %v1017 = vsub.f32 %v1001, %v1013
  %v1018 = vsub.f32 %v1002, %v1014
  %v1019 = vmul.f32 %v990, %v103
  %v1020 = vmul.f32 %v994, %v104
  %v1021 = vmul.f32 %v990, %v105
  %v1022 = vmul.f32 %v994, %v106
  %v1023 = vadd.f32 %v983, %v1019
  %v1024 = vadd.f32 %v984, %v1020
  %v1025 = vadd.f32 %v985, %v1021
  %v1026 = vadd.f32 %v986, %v1022
  %v1027 = vmul.f32 %v1006, %v39
  %v1028 = vmul.f32 %v1010, %v40
  %v1029 = vmul.f32 %v1006, %v41
  %v1030 = vmul.f32 %v1010, %v42
  %v1031 = vadd.f32 %v1023, %v1027
  %v1032 = vadd.f32 %v1024, %v1028
  %v1033 = vadd.f32 %v1025, %v1029
  %v1034 = vadd.f32 %v1026, %v1030
  %v1035 = vlaneseq
  %v1036 = vshrl.u32 %v1035, 7
  %v1037 = vsub.s32 2, %v1036
  %v1038 = vrot.slane %v23, %v1037
  %v1039 = vlaneseq
  %v1040 = vshrl.u32 %v1039, 7
  %v1041 = vsub.s32 2, %v1040
  %v1042 = vrot.slane %v24, %v1041
  %v1043 = vmul.f32 %v1038, %v43
  %v1044 = vmul.f32 %v1042, %v44
  %v1045 = vmul.f32 %v1038, %v45
  %v1046 = vmul.f32 %v1042, %v46
  %v1047 = vadd.f32 %v1015, %v1043
  %v1048 = vadd.f32 %v1016, %v1044
  %v1049 = vadd.f32 %v1017, %v1045
  %v1050 = vadd.f32 %v1018, %v1046
  %v1051 = vlaneseq
  %v1052 = vshrl.u32 %v1051, 7
  %v1053 = vsub.s32 2, %v1052
  %v1054 = vrot.slane %v31, %v1053
  %v1055 = vlaneseq
  %v1056 = vshrl.u32 %v1055, 7
  %v1057 = vsub.s32 2, %v1056
  %v1058 = vrot.slane %v32, %v1057
  %v1059 = vmul.f32 %v1054, %v107
  %v1060 = vmul.f32 %v1058, %v108
  %v1061 = vmul.f32 %v1054, %v109
  %v1062 = vmul.f32 %v1058, %v110
  %v1063 = vsub.f32 %v1047, %v1059
  %v1064 = vsub.f32 %v1048, %v1060
  %v1065 = vsub.f32 %v1049, %v1061
  %v1066 = vsub.f32 %v1050, %v1062
  %v1067 = vmul.f32 %v1038, %v107
  %v1068 = vmul.f32 %v1042, %v108
  %v1069 = vmul.f32 %v1038, %v109
  %v1070 = vmul.f32 %v1042, %v110
  %v1071 = vadd.f32 %v1031, %v1067
  %v1072 = vadd.f32 %v1032, %v1068
  %v1073 = vadd.f32 %v1033, %v1069
  %v1074 = vadd.f32 %v1034, %v1070
  %v1075 = vmul.f32 %v1054, %v43
  %v1076 = vmul.f32 %v1058, %v44
  %v1077 = vmul.f32 %v1054, %v45
  %v1078 = vmul.f32 %v1058, %v46
  %v1079 = vadd.f32 %v1071, %v1075
  %v1080 = vadd.f32 %v1072, %v1076
  %v1081 = vadd.f32 %v1073, %v1077
  %v1082 = vadd.f32 %v1074, %v1078
  %v1083 = vlaneseq
  %v1084 = vshrl.u32 %v1083, 7
  %v1085 = vsub.s32 3, %v1084
  %v1086 = vrot.slane %v23, %v1085
  %v1087 = vlaneseq
  %v1088 = vshrl.u32 %v1087, 7
  %v1089 = vsub.s32 3, %v1088
  %v1090 = vrot.slane %v24, %v1089
  %v1091 = vmul.f32 %v1086, %v47
  %v1092 = vmul.f32 %v1090, %v48
  %v1093 = vmul.f32 %v1086, %v49
  %v1094 = vmul.f32 %v1090, %v50
  %v1095 = vadd.f32 %v1063, %v1091
  %v1096 = vadd.f32 %v1064, %v1092
  %v1097 = vadd.f32 %v1065, %v1093
  %v1098 = vadd.f32 %v1066, %v1094
  %v1099 = vlaneseq
  %v1100 = vshrl.u32 %v1099, 7
  %v1101 = vsub.s32 3, %v1100
  %v1102 = vrot.slane %v31, %v1101
  %v1103 = vlaneseq
  %v1104 = vshrl.u32 %v1103, 7
  %v1105 = vsub.s32 3, %v1104
  %v1106 = vrot.slane %v32, %v1105
  %v1107 = vmul.f32 %v1102, %v111
  %v1108 = vmul.f32 %v1106, %v112
  %v1109 = vmul.f32 %v1102, %v113
  %v1110 = vmul.f32 %v1106, %v114
  %v1111 = vsub.f32 %v1095, %v1107
  %v1112 = vsub.f32 %v1096, %v1108
  %v1113 = vsub.f32 %v1097, %v1109
  %v1114 = vsub.f32 %v1098, %v1110
  %v1115 = vmul.f32 %v1086, %v111
  %v1116 = vmul.f32 %v1090, %v112
  %v1117 = vmul.f32 %v1086, %v113
  %v1118 = vmul.f32 %v1090, %v114
  %v1119 = vadd.f32 %v1079, %v1115
  %v1120 = vadd.f32 %v1080, %v1116
  %v1121 = vadd.f32 %v1081, %v1117
  %v1122 = vadd.f32 %v1082, %v1118
  %v1123 = vmul.f32 %v1102, %v47
  %v1124 = vmul.f32 %v1106, %v48
  %v1125 = vmul.f32 %v1102, %v49
  %v1126 = vmul.f32 %v1106, %v50
  %v1127 = vadd.f32 %v1119, %v1123
  %v1128 = vadd.f32 %v1120, %v1124
  %v1129 = vadd.f32 %v1121, %v1125
  %v1130 = vadd.f32 %v1122, %v1126
  %v1131 = vlaneseq
  %v1132 = vshrl.u32 %v1131, 7
  %v1133 = vsub.s32 4, %v1132
  %v1134 = vrot.slane %v23, %v1133
  %v1135 = vlaneseq
  %v1136 = vshrl.u32 %v1135, 7
  %v1137 = vsub.s32 4, %v1136
  %v1138 = vrot.slane %v24, %v1137
  %v1139 = vmul.f32 %v1134, %v51
  %v1140 = vmul.f32 %v1138, %v52
  %v1141 = vmul.f32 %v1134, %v53
  %v1142 = vmul.f32 %v1138, %v54
  %v1143 = vadd.f32 %v1111, %v1139
  %v1144 = vadd.f32 %v1112, %v1140
  %v1145 = vadd.f32 %v1113, %v1141
  %v1146 = vadd.f32 %v1114, %v1142
  %v1147 = vlaneseq
  %v1148 = vshrl.u32 %v1147, 7
  %v1149 = vsub.s32 4, %v1148
  %v1150 = vrot.slane %v31, %v1149
  %v1151 = vlaneseq
  %v1152 = vshrl.u32 %v1151, 7
  %v1153 = vsub.s32 4, %v1152
  %v1154 = vrot.slane %v32, %v1153
  %v1155 = vmul.f32 %v1150, %v115
  %v1156 = vmul.f32 %v1154, %v116
  %v1157 = vmul.f32 %v1150, %v117
  %v1158 = vmul.f32 %v1154, %v118
  %v1159 = vsub.f32 %v1143, %v1155
  %v1160 = vsub.f32 %v1144, %v1156
  %v1161 = vsub.f32 %v1145, %v1157
  %v1162 = vsub.f32 %v1146, %v1158
  %v1163 = vmul.f32 %v1134, %v115
  %v1164 = vmul.f32 %v1138, %v116
  %v1165 = vmul.f32 %v1134, %v117
  %v1166 = vmul.f32 %v1138, %v118
  %v1167 = vadd.f32 %v1127, %v1163
  %v1168 = vadd.f32 %v1128, %v1164
  %v1169 = vadd.f32 %v1129, %v1165
  %v1170 = vadd.f32 %v1130, %v1166
  %v1171 = vmul.f32 %v1150, %v51
  %v1172 = vmul.f32 %v1154, %v52
  %v1173 = vmul.f32 %v1150, %v53
  %v1174 = vmul.f32 %v1154, %v54
  %v1175 = vadd.f32 %v1167, %v1171
  %v1176 = vadd.f32 %v1168, %v1172
  %v1177 = vadd.f32 %v1169, %v1173
  %v1178 = vadd.f32 %v1170, %v1174
  %v1179 = vlaneseq
  %v1180 = vshrl.u32 %v1179, 7
  %v1181 = vsub.s32 5, %v1180
  %v1182 = vrot.slane %v23, %v1181
  %v1183 = vlaneseq
  %v1184 = vshrl.u32 %v1183, 7
  %v1185 = vsub.s32 5, %v1184
  %v1186 = vrot.slane %v24, %v1185
  %v1187 = vmul.f32 %v1182, %v55
  %v1188 = vmul.f32 %v1186, %v56
  %v1189 = vmul.f32 %v1182, %v57
  %v1190 = vmul.f32 %v1186, %v58
  %v1191 = vadd.f32 %v1159, %v1187
  %v1192 = vadd.f32 %v1160, %v1188
  %v1193 = vadd.f32 %v1161, %v1189
  %v1194 = vadd.f32 %v1162, %v1190
  %v1195 = vlaneseq
  %v1196 = vshrl.u32 %v1195, 7
  %v1197 = vsub.s32 5, %v1196
  %v1198 = vrot.slane %v31, %v1197
  %v1199 = vlaneseq
  %v1200 = vshrl.u32 %v1199, 7
  %v1201 = vsub.s32 5, %v1200
  %v1202 = vrot.slane %v32, %v1201
  %v1203 = vmul.f32 %v1198, %v119
  %v1204 = vmul.f32 %v1202, %v120
  %v1205 = vmul.f32 %v1198, %v121
  %v1206 = vmul.f32 %v1202, %v122
  %v1207 = vsub.f32 %v1191, %v1203
  %v1208 = vsub.f32 %v1192, %v1204
  %v1209 = vsub.f32 %v1193, %v1205
  %v1210 = vsub.f32 %v1194, %v1206
  %v1211 = vmul.f32 %v1182, %v119
  %v1212 = vmul.f32 %v1186, %v120
  %v1213 = vmul.f32 %v1182, %v121
  %v1214 = vmul.f32 %v1186, %v122
  %v1215 = vadd.f32 %v1175, %v1211
  %v1216 = vadd.f32 %v1176, %v1212
  %v1217 = vadd.f32 %v1177, %v1213
  %v1218 = vadd.f32 %v1178, %v1214
  %v1219 = vmul.f32 %v1198, %v55
  %v1220 = vmul.f32 %v1202, %v56
  %v1221 = vmul.f32 %v1198, %v57
  %v1222 = vmul.f32 %v1202, %v58
  %v1223 = vadd.f32 %v1215, %v1219
  %v1224 = vadd.f32 %v1216, %v1220
  %v1225 = vadd.f32 %v1217, %v1221
  %v1226 = vadd.f32 %v1218, %v1222
  %v1227 = vlaneseq
  %v1228 = vshrl.u32 %v1227, 7
  %v1229 = vsub.s32 6, %v1228
  %v1230 = vrot.slane %v23, %v1229
  %v1231 = vlaneseq
  %v1232 = vshrl.u32 %v1231, 7
  %v1233 = vsub.s32 6, %v1232
  %v1234 = vrot.slane %v24, %v1233
  %v1235 = vmul.f32 %v1230, %v59
  %v1236 = vmul.f32 %v1234, %v60
  %v1237 = vmul.f32 %v1230, %v61
  %v1238 = vmul.f32 %v1234, %v62
  %v1239 = vadd.f32 %v1207, %v1235
  %v1240 = vadd.f32 %v1208, %v1236
  %v1241 = vadd.f32 %v1209, %v1237
  %v1242 = vadd.f32 %v1210, %v1238
  %v1243 = vlaneseq
  %v1244 = vshrl.u32 %v1243, 7
  %v1245 = vsub.s32 6, %v1244
  %v1246 = vrot.slane %v31, %v1245
  %v1247 = vlaneseq
  %v1248 = vshrl.u32 %v1247, 7
  %v1249 = vsub.s32 6, %v1248
  %v1250 = vrot.slane %v32, %v1249
  %v1251 = vmul.f32 %v1246, %v123
  %v1252 = vmul.f32 %v1250, %v124
  %v1253 = vmul.f32 %v1246, %v125
  %v1254 = vmul.f32 %v1250, %v126
  %v1255 = vsub.f32 %v1239, %v1251
  %v1256 = vsub.f32 %v1240, %v1252
  %v1257 = vsub.f32 %v1241, %v1253
  %v1258 = vsub.f32 %v1242, %v1254
  %v1259 = vmul.f32 %v1230, %v123
  %v1260 = vmul.f32 %v1234, %v124
  %v1261 = vmul.f32 %v1230, %v125
  %v1262 = vmul.f32 %v1234, %v126
  %v1263 = vadd.f32 %v1223, %v1259
  %v1264 = vadd.f32 %v1224, %v1260
  %v1265 = vadd.f32 %v1225, %v1261
  %v1266 = vadd.f32 %v1226, %v1262
  %v1267 = vmul.f32 %v1246, %v59
  %v1268 = vmul.f32 %v1250, %v60
  %v1269 = vmul.f32 %v1246, %v61
  %v1270 = vmul.f32 %v1250, %v62
  %v1271 = vadd.f32 %v1263, %v1267
  %v1272 = vadd.f32 %v1264, %v1268
  %v1273 = vadd.f32 %v1265, %v1269
  %v1274 = vadd.f32 %v1266, %v1270
  %v1275 = vlaneseq
  %v1276 = vshrl.u32 %v1275, 7
  %v1277 = vsub.s32 7, %v1276
  %v1278 = vrot.slane %v23, %v1277
  %v1279 = vlaneseq
  %v1280 = vshrl.u32 %v1279, 7
  %v1281 = vsub.s32 7, %v1280
  %v1282 = vrot.slane %v24, %v1281
  %v1283 = vmul.f32 %v1278, %v63
  %v1284 = vmul.f32 %v1282, %v64
  %v1285 = vmul.f32 %v1278, %v65
  %v1286 = vmul.f32 %v1282, %v66
  %v1287 = vadd.f32 %v1255, %v1283
  %v1288 = vadd.f32 %v1256, %v1284
  %v1289 = vadd.f32 %v1257, %v1285
  %v1290 = vadd.f32 %v1258, %v1286
  %v1291 = vlaneseq
  %v1292 = vshrl.u32 %v1291, 7
  %v1293 = vsub.s32 7, %v1292
  %v1294 = vrot.slane %v31, %v1293
  %v1295 = vlaneseq
  %v1296 = vshrl.u32 %v1295, 7
  %v1297 = vsub.s32 7, %v1296
  %v1298 = vrot.slane %v32, %v1297
  %v1299 = vmul.f32 %v1294, %v127
  %v1300 = vmul.f32 %v1298, %v128
  %v1301 = vmul.f32 %v1294, %v129
  %v1302 = vmul.f32 %v1298, %v130
  %v1303 = vsub.f32 %v1287, %v1299
  %v1304 = vsub.f32 %v1288, %v1300
  %v1305 = vsub.f32 %v1289, %v1301
  %v1306 = vsub.f32 %v1290, %v1302
  %v1307 = vmul.f32 %v1278, %v127
  %v1308 = vmul.f32 %v1282, %v128
  %v1309 = vmul.f32 %v1278, %v129
  %v1310 = vmul.f32 %v1282, %v130
  %v1311 = vadd.f32 %v1271, %v1307
  %v1312 = vadd.f32 %v1272, %v1308
  %v1313 = vadd.f32 %v1273, %v1309
  %v1314 = vadd.f32 %v1274, %v1310
  %v1315 = vmul.f32 %v1294, %v63
  %v1316 = vmul.f32 %v1298, %v64
  %v1317 = vmul.f32 %v1294, %v65
  %v1318 = vmul.f32 %v1298, %v66
  %v1319 = vadd.f32 %v1311, %v1315
  %v1320 = vadd.f32 %v1312, %v1316
  %v1321 = vadd.f32 %v1313, %v1317
  %v1322 = vadd.f32 %v1314, %v1318
  %v1323 = vlaneseq
  %v1324 = vshrl.u32 %v1323, 7
  %v1325 = vsub.s32 0, %v1324
  %v1326 = vrot.slane %v25, %v1325
  %v1327 = vlaneseq
  %v1328 = vshrl.u32 %v1327, 7
  %v1329 = vsub.s32 0, %v1328
  %v1330 = vrot.slane %v26, %v1329
  %v1331 = vmul.f32 %v1326, %v67
  %v1332 = vmul.f32 %v1330, %v68
  %v1333 = vmul.f32 %v1326, %v69
  %v1334 = vmul.f32 %v1330, %v70
  %v1335 = vadd.f32 %v1303, %v1331
  %v1336 = vadd.f32 %v1304, %v1332
  %v1337 = vadd.f32 %v1305, %v1333
  %v1338 = vadd.f32 %v1306, %v1334
  %v1339 = vlaneseq
  %v1340 = vshrl.u32 %v1339, 7
  %v1341 = vsub.s32 0, %v1340
  %v1342 = vrot.slane %v33, %v1341
  %v1343 = vlaneseq
  %v1344 = vshrl.u32 %v1343, 7
  %v1345 = vsub.s32 0, %v1344
  %v1346 = vrot.slane %v34, %v1345
  %v1347 = vmul.f32 %v1342, %v131
  %v1348 = vmul.f32 %v1346, %v132
  %v1349 = vmul.f32 %v1342, %v133
  %v1350 = vmul.f32 %v1346, %v134
  %v1351 = vsub.f32 %v1335, %v1347
  %v1352 = vsub.f32 %v1336, %v1348
  %v1353 = vsub.f32 %v1337, %v1349
  %v1354 = vsub.f32 %v1338, %v1350
  %v1355 = vmul.f32 %v1326, %v131
  %v1356 = vmul.f32 %v1330, %v132
  %v1357 = vmul.f32 %v1326, %v133
  %v1358 = vmul.f32 %v1330, %v134
  %v1359 = vadd.f32 %v1319, %v1355
  %v1360 = vadd.f32 %v1320, %v1356
  %v1361 = vadd.f32 %v1321, %v1357
  %v1362 = vadd.f32 %v1322, %v1358
  %v1363 = vmul.f32 %v1342, %v67
  %v1364 = vmul.f32 %v1346, %v68
  %v1365 = vmul.f32 %v1342, %v69
  %v1366 = vmul.f32 %v1346, %v70
  %v1367 = vadd.f32 %v1359, %v1363
  %v1368 = vadd.f32 %v1360, %v1364
  %v1369 = vadd.f32 %v1361, %v1365
  %v1370 = vadd.f32 %v1362, %v1366
  %v1371 = vlaneseq
  %v1372 = vshrl.u32 %v1371, 7
  %v1373 = vsub.s32 1, %v1372
  %v1374 = vrot.slane %v25, %v1373
  %v1375 = vlaneseq
  %v1376 = vshrl.u32 %v1375, 7
  %v1377 = vsub.s32 1, %v1376
  %v1378 = vrot.slane %v26, %v1377
  %v1379 = vmul.f32 %v1374, %v71
  %v1380 = vmul.f32 %v1378, %v72
  %v1381 = vmul.f32 %v1374, %v73
  %v1382 = vmul.f32 %v1378, %v74
  %v1383 = vadd.f32 %v1351, %v1379
  %v1384 = vadd.f32 %v1352, %v1380
  %v1385 = vadd.f32 %v1353, %v1381
  %v1386 = vadd.f32 %v1354, %v1382
  %v1387 = vlaneseq
  %v1388 = vshrl.u32 %v1387, 7
  %v1389 = vsub.s32 1, %v1388
  %v1390 = vrot.slane %v33, %v1389
  %v1391 = vlaneseq
  %v1392 = vshrl.u32 %v1391, 7
  %v1393 = vsub.s32 1, %v1392
  %v1394 = vrot.slane %v34, %v1393
  %v1395 = vmul.f32 %v1390, %v135
  %v1396 = vmul.f32 %v1394, %v136
  %v1397 = vmul.f32 %v1390, %v137
  %v1398 = vmul.f32 %v1394, %v138
  %v1399 = vsub.f32 %v1383, %v1395
  %v1400 = vsub.f32 %v1384, %v1396
  %v1401 = vsub.f32 %v1385, %v1397
  %v1402 = vsub.f32 %v1386, %v1398
  %v1403 = vmul.f32 %v1374, %v135
  %v1404 = vmul.f32 %v1378, %v136
  %v1405 = vmul.f32 %v1374, %v137
  %v1406 = vmul.f32 %v1378, %v138
  %v1407 = vadd.f32 %v1367, %v1403
  %v1408 = vadd.f32 %v1368, %v1404
  %v1409 = vadd.f32 %v1369, %v1405
  %v1410 = vadd.f32 %v1370, %v1406
  %v1411 = vmul.f32 %v1390, %v71
  %v1412 = vmul.f32 %v1394, %v72
  %v1413 = vmul.f32 %v1390, %v73
  %v1414 = vmul.f32 %v1394, %v74
  %v1415 = vadd.f32 %v1407, %v1411
  %v1416 = vadd.f32 %v1408, %v1412
  %v1417 = vadd.f32 %v1409, %v1413
  %v1418 = vadd.f32 %v1410, %v1414
  %v1419 = vlaneseq
  %v1420 = vshrl.u32 %v1419, 7
  %v1421 = vsub.s32 2, %v1420
  %v1422 = vrot.slane %v25, %v1421
  %v1423 = vlaneseq
  %v1424 = vshrl.u32 %v1423, 7
  %v1425 = vsub.s32 2, %v1424
  %v1426 = vrot.slane %v26, %v1425
  %v1427 = vmul.f32 %v1422, %v75
  %v1428 = vmul.f32 %v1426, %v76
  %v1429 = vmul.f32 %v1422, %v77
  %v1430 = vmul.f32 %v1426, %v78
  %v1431 = vadd.f32 %v1399, %v1427
  %v1432 = vadd.f32 %v1400, %v1428
  %v1433 = vadd.f32 %v1401, %v1429
  %v1434 = vadd.f32 %v1402, %v1430
  %v1435 = vlaneseq
  %v1436 = vshrl.u32 %v1435, 7
  %v1437 = vsub.s32 2, %v1436
  %v1438 = vrot.slane %v33, %v1437
  %v1439 = vlaneseq
  %v1440 = vshrl.u32 %v1439, 7
  %v1441 = vsub.s32 2, %v1440
  %v1442 = vrot.slane %v34, %v1441
  %v1443 = vmul.f32 %v1438, %v139
  %v1444 = vmul.f32 %v1442, %v140
  %v1445 = vmul.f32 %v1438, %v141
  %v1446 = vmul.f32 %v1442, %v142
  %v1447 = vsub.f32 %v1431, %v1443
  %v1448 = vsub.f32 %v1432, %v1444
  %v1449 = vsub.f32 %v1433, %v1445
  %v1450 = vsub.f32 %v1434, %v1446
  %v1451 = vmul.f32 %v1422, %v139
  %v1452 = vmul.f32 %v1426, %v140
  %v1453 = vmul.f32 %v1422, %v141
  %v1454 = vmul.f32 %v1426, %v142
  %v1455 = vadd.f32 %v1415, %v1451
  %v1456 = vadd.f32 %v1416, %v1452
  %v1457 = vadd.f32 %v1417, %v1453
  %v1458 = vadd.f32 %v1418, %v1454
  %v1459 = vmul.f32 %v1438, %v75
  %v1460 = vmul.f32 %v1442, %v76
  %v1461 = vmul.f32 %v1438, %v77
  %v1462 = vmul.f32 %v1442, %v78
  %v1463 = vadd.f32 %v1455, %v1459
  %v1464 = vadd.f32 %v1456, %v1460
  %v1465 = vadd.f32 %v1457, %v1461
  %v1466 = vadd.f32 %v1458, %v1462
  %v1467 = vlaneseq
  %v1468 = vshrl.u32 %v1467, 7
  %v1469 = vsub.s32 3, %v1468
  %v1470 = vrot.slane %v25, %v1469
  %v1471 = vlaneseq
  %v1472 = vshrl.u32 %v1471, 7
  %v1473 = vsub.s32 3, %v1472
  %v1474 = vrot.slane %v26, %v1473
  %v1475 = vmul.f32 %v1470, %v79
  %v1476 = vmul.f32 %v1474, %v80
  %v1477 = vmul.f32 %v1470, %v81
  %v1478 = vmul.f32 %v1474, %v82
  %v1479 = vadd.f32 %v1447, %v1475
  %v1480 = vadd.f32 %v1448, %v1476
  %v1481 = vadd.f32 %v1449, %v1477
  %v1482 = vadd.f32 %v1450, %v1478
  %v1483 = vlaneseq
  %v1484 = vshrl.u32 %v1483, 7
  %v1485 = vsub.s32 3, %v1484
  %v1486 = vrot.slane %v33, %v1485
  %v1487 = vlaneseq
  %v1488 = vshrl.u32 %v1487, 7
  %v1489 = vsub.s32 3, %v1488
  %v1490 = vrot.slane %v34, %v1489
  %v1491 = vmul.f32 %v1486, %v143
  %v1492 = vmul.f32 %v1490, %v144
  %v1493 = vmul.f32 %v1486, %v145
  %v1494 = vmul.f32 %v1490, %v146
  %v1495 = vsub.f32 %v1479, %v1491
  %v1496 = vsub.f32 %v1480, %v1492
  %v1497 = vsub.f32 %v1481, %v1493
  %v1498 = vsub.f32 %v1482, %v1494
  %v1499 = vmul.f32 %v1470, %v143
  %v1500 = vmul.f32 %v1474, %v144
  %v1501 = vmul.f32 %v1470, %v145
  %v1502 = vmul.f32 %v1474, %v146
  %v1503 = vadd.f32 %v1463, %v1499
  %v1504 = vadd.f32 %v1464, %v1500
  %v1505 = vadd.f32 %v1465, %v1501
  %v1506 = vadd.f32 %v1466, %v1502
  %v1507 = vmul.f32 %v1486, %v79
  %v1508 = vmul.f32 %v1490, %v80
  %v1509 = vmul.f32 %v1486, %v81
  %v1510 = vmul.f32 %v1490, %v82
  %v1511 = vadd.f32 %v1503, %v1507
  %v1512 = vadd.f32 %v1504, %v1508
  %v1513 = vadd.f32 %v1505, %v1509
  %v1514 = vadd.f32 %v1506, %v1510
  %v1515 = vlaneseq
  %v1516 = vshrl.u32 %v1515, 7
  %v1517 = vsub.s32 4, %v1516
  %v1518 = vrot.slane %v25, %v1517
  %v1519 = vlaneseq
  %v1520 = vshrl.u32 %v1519, 7
  %v1521 = vsub.s32 4, %v1520
  %v1522 = vrot.slane %v26, %v1521
  %v1523 = vmul.f32 %v1518, %v83
  %v1524 = vmul.f32 %v1522, %v84
  %v1525 = vmul.f32 %v1518, %v85
  %v1526 = vmul.f32 %v1522, %v86
  %v1527 = vadd.f32 %v1495, %v1523
  %v1528 = vadd.f32 %v1496, %v1524
  %v1529 = vadd.f32 %v1497, %v1525
  %v1530 = vadd.f32 %v1498, %v1526
  %v1531 = vlaneseq
  %v1532 = vshrl.u32 %v1531, 7
  %v1533 = vsub.s32 4, %v1532
  %v1534 = vrot.slane %v33, %v1533
  %v1535 = vlaneseq
  %v1536 = vshrl.u32 %v1535, 7
  %v1537 = vsub.s32 4, %v1536
  %v1538 = vrot.slane %v34, %v1537
  %v1539 = vmul.f32 %v1534, %v147
  %v1540 = vmul.f32 %v1538, %v148
  %v1541 = vmul.f32 %v1534, %v149
  %v1542 = vmul.f32 %v1538, %v150
  %v1543 = vsub.f32 %v1527, %v1539
  %v1544 = vsub.f32 %v1528, %v1540
  %v1545 = vsub.f32 %v1529, %v1541
  %v1546 = vsub.f32 %v1530, %v1542
  %v1547 = vmul.f32 %v1518, %v147
  %v1548 = vmul.f32 %v1522, %v148
  %v1549 = vmul.f32 %v1518, %v149
  %v1550 = vmul.f32 %v1522, %v150
  %v1551 = vadd.f32 %v1511, %v1547
  %v1552 = vadd.f32 %v1512, %v1548
  %v1553 = vadd.f32 %v1513, %v1549
  %v1554 = vadd.f32 %v1514, %v1550
  %v1555 = vmul.f32 %v1534, %v83
  %v1556 = vmul.f32 %v1538, %v84
  %v1557 = vmul.f32 %v1534, %v85
  %v1558 = vmul.f32 %v1538, %v86
  %v1559 = vadd.f32 %v1551, %v1555
  %v1560 = vadd.f32 %v1552, %v1556
  %v1561 = vadd.f32 %v1553, %v1557
  %v1562 = vadd.f32 %v1554, %v1558
  %v1563 = vlaneseq
  %v1564 = vshrl.u32 %v1563, 7
  %v1565 = vsub.s32 5, %v1564
  %v1566 = vrot.slane %v25, %v1565
  %v1567 = vlaneseq
  %v1568 = vshrl.u32 %v1567, 7
  %v1569 = vsub.s32 5, %v1568
  %v1570 = vrot.slane %v26, %v1569
  %v1571 = vmul.f32 %v1566, %v87
  %v1572 = vmul.f32 %v1570, %v88
  %v1573 = vmul.f32 %v1566, %v89
  %v1574 = vmul.f32 %v1570, %v90
  %v1575 = vadd.f32 %v1543, %v1571
  %v1576 = vadd.f32 %v1544, %v1572
  %v1577 = vadd.f32 %v1545, %v1573
  %v1578 = vadd.f32 %v1546, %v1574
  %v1579 = vlaneseq
  %v1580 = vshrl.u32 %v1579, 7
  %v1581 = vsub.s32 5, %v1580
  %v1582 = vrot.slane %v33, %v1581
  %v1583 = vlaneseq
  %v1584 = vshrl.u32 %v1583, 7
  %v1585 = vsub.s32 5, %v1584
  %v1586 = vrot.slane %v34, %v1585
  %v1587 = vmul.f32 %v1582, %v151
  %v1588 = vmul.f32 %v1586, %v152
  %v1589 = vmul.f32 %v1582, %v153
  %v1590 = vmul.f32 %v1586, %v154
  %v1591 = vsub.f32 %v1575, %v1587
  %v1592 = vsub.f32 %v1576, %v1588
  %v1593 = vsub.f32 %v1577, %v1589
  %v1594 = vsub.f32 %v1578, %v1590
  %v1595 = vmul.f32 %v1566, %v151
  %v1596 = vmul.f32 %v1570, %v152
  %v1597 = vmul.f32 %v1566, %v153
  %v1598 = vmul.f32 %v1570, %v154
  %v1599 = vadd.f32 %v1559, %v1595
  %v1600 = vadd.f32 %v1560, %v1596
  %v1601 = vadd.f32 %v1561, %v1597
  %v1602 = vadd.f32 %v1562, %v1598
  %v1603 = vmul.f32 %v1582, %v87
  %v1604 = vmul.f32 %v1586, %v88
  %v1605 = vmul.f32 %v1582, %v89
  %v1606 = vmul.f32 %v1586, %v90
  %v1607 = vadd.f32 %v1599, %v1603
  %v1608 = vadd.f32 %v1600, %v1604
  %v1609 = vadd.f32 %v1601, %v1605
  %v1610 = vadd.f32 %v1602, %v1606
  %v1611 = vlaneseq
  %v1612 = vshrl.u32 %v1611, 7
  %v1613 = vsub.s32 6, %v1612
  %v1614 = vrot.slane %v25, %v1613
  %v1615 = vlaneseq
  %v1616 = vshrl.u32 %v1615, 7
  %v1617 = vsub.s32 6, %v1616
  %v1618 = vrot.slane %v26, %v1617
  %v1619 = vmul.f32 %v1614, %v91
  %v1620 = vmul.f32 %v1618, %v92
  %v1621 = vmul.f32 %v1614, %v93
  %v1622 = vmul.f32 %v1618, %v94
  %v1623 = vadd.f32 %v1591, %v1619
  %v1624 = vadd.f32 %v1592, %v1620
  %v1625 = vadd.f32 %v1593, %v1621
  %v1626 = vadd.f32 %v1594, %v1622
  %v1627 = vlaneseq
  %v1628 = vshrl.u32 %v1627, 7
  %v1629 = vsub.s32 6, %v1628
  %v1630 = vrot.slane %v33, %v1629
  %v1631 = vlaneseq
  %v1632 = vshrl.u32 %v1631, 7
  %v1633 = vsub.s32 6, %v1632
  %v1634 = vrot.slane %v34, %v1633
  %v1635 = vmul.f32 %v1630, %v155
  %v1636 = vmul.f32 %v1634, %v156
  %v1637 = vmul.f32 %v1630, %v157
  %v1638 = vmul.f32 %v1634, %v158
  %v1639 = vsub.f32 %v1623, %v1635
  %v1640 = vsub.f32 %v1624, %v1636
  %v1641 = vsub.f32 %v1625, %v1637
  %v1642 = vsub.f32 %v1626, %v1638
  %v1643 = vmul.f32 %v1614, %v155
  %v1644 = vmul.f32 %v1618, %v156
  %v1645 = vmul.f32 %v1614, %v157
  %v1646 = vmul.f32 %v1618, %v158
  %v1647 = vadd.f32 %v1607, %v1643
  %v1648 = vadd.f32 %v1608, %v1644
  %v1649 = vadd.f32 %v1609, %v1645
  %v1650 = vadd.f32 %v1610, %v1646
  %v1651 = vmul.f32 %v1630, %v91
  %v1652 = vmul.f32 %v1634, %v92
  %v1653 = vmul.f32 %v1630, %v93
  %v1654 = vmul.f32 %v1634, %v94
  %v1655 = vadd.f32 %v1647, %v1651
  %v1656 = vadd.f32 %v1648, %v1652
  %v1657 = vadd.f32 %v1649, %v1653
  %v1658 = vadd.f32 %v1650, %v1654
  %v1659 = vlaneseq
  %v1660 = vshrl.u32 %v1659, 7
  %v1661 = vsub.s32 7, %v1660
  %v1662 = vrot.slane %v25, %v1661
  %v1663 = vlaneseq
  %v1664 = vshrl.u32 %v1663, 7
  %v1665 = vsub.s32 7, %v1664
  %v1666 = vrot.slane %v26, %v1665
  %v1667 = vmul.f32 %v1662, %v95
  %v1668 = vmul.f32 %v1666, %v96
  %v1669 = vmul.f32 %v1662, %v97
  %v1670 = vmul.f32 %v1666, %v98
  %v1671 = vadd.f32 %v1639, %v1667
  %v1672 = vadd.f32 %v1640, %v1668
  %v1673 = vadd.f32 %v1641, %v1669
  %v1674 = vadd.f32 %v1642, %v1670
  %v1675 = vlaneseq
  %v1676 = vshrl.u32 %v1675, 7
  %v1677 = vsub.s32 7, %v1676
  %v1678 = vrot.slane %v33, %v1677
  %v1679 = vlaneseq
  %v1680 = vshrl.u32 %v1679, 7
  %v1681 = vsub.s32 7, %v1680
  %v1682 = vrot.slane %v34, %v1681
  %v1683 = vmul.f32 %v1678, %v159
  %v1684 = vmul.f32 %v1682, %v160
  %v1685 = vmul.f32 %v1678, %v161
  %v1686 = vmul.f32 %v1682, %v162
  %v1687 = vsub.f32 %v1671, %v1683
  %v1688 = vsub.f32 %v1672, %v1684
  %v1689 = vsub.f32 %v1673, %v1685
  %v1690 = vsub.f32 %v1674, %v1686
  %v1691 = vmul.f32 %v1662, %v159
  %v1692 = vmul.f32 %v1666, %v160
  %v1693 = vmul.f32 %v1662, %v161
  %v1694 = vmul.f32 %v1666, %v162
  %v1695 = vadd.f32 %v1655, %v1691
  %v1696 = vadd.f32 %v1656, %v1692
  %v1697 = vadd.f32 %v1657, %v1693
  %v1698 = vadd.f32 %v1658, %v1694
  %v1699 = vmul.f32 %v1678, %v95
  %v1700 = vmul.f32 %v1682, %v96
  %v1701 = vmul.f32 %v1678, %v97
  %v1702 = vmul.f32 %v1682, %v98
  %v1703 = vadd.f32 %v1695, %v1699
  %v1704 = vadd.f32 %v1696, %v1700
  %v1705 = vadd.f32 %v1697, %v1701
  %v1706 = vadd.f32 %v1698, %v1702
  %s1707 = scalar_lea.vmem %s4, 32
  %1708 = vst [vmem:[%s1707] sm:$0xff] %v1687
  %1709 = vst [vmem:[%s1707 + $0x8] sm:$0xff] %v1688
  %1710 = vst [vmem:[%s1707 + $0x10] sm:$0xff] %v1689
  %1711 = vst [vmem:[%s1707 + $0x18] sm:$0xff] %v1690
  %s1712 = scalar_lea.vmem %s5, 32
  %1713 = vst [vmem:[%s1712] sm:$0xff] %v1703
  %1714 = vst [vmem:[%s1712 + $0x8] sm:$0xff] %v1704
  %1715 = vst [vmem:[%s1712 + $0x10] sm:$0xff] %v1705
  %1716 = vst [vmem:[%s1712 + $0x18] sm:$0xff] %v1706
  // Predicated region
  $region18: #{simple_block2d_forward.11} parent=0 // pred_check
    _
  $region19: #{simple_block2d_forward.11} parent=0 // pred_check_branch
    %1718 = sbr.rel (0) target = $region21
  $region20: #{simple_block2d_forward.11} parent=0 // pred_region
    _
  $region21: #{simple_block2d_forward.11} parent=0 // pred_fallthru
    _
  // Predicated region
  $region22: #{simple_block2d_forward.11} parent=0 // pred_check
    _
  $region23: #{simple_block2d_forward.11} parent=0 // pred_check_branch
    %1720 = sbr.rel (0) target = $region25
  $region24: #{simple_block2d_forward.11} parent=0 // pred_region
    _
  $region25: #{simple_block2d_forward.11} parent=0 // pred_fallthru
    _
  // Predicated region
  $region26: #{simple_block2d_forward.11} parent=0 // pred_check
    _
  $region27: #{simple_block2d_forward.11} parent=0 // pred_check_branch
    %1722 = sbr.rel (0) target = $region29
  $region28: #{simple_block2d_forward.11} parent=0 // pred_region
    _
  $region29: #{simple_block2d_forward.11} parent=0 // pred_fallthru
    _
  // Predicated region
  $region30: #{simple_block2d_forward.11} parent=0 // pred_check
    _
  $region31: #{simple_block2d_forward.11} parent=0 // pred_check_branch
    %1724 = sbr.rel (0) target = $region33
  $region32: #{simple_block2d_forward.11} parent=0 // pred_region
    _
  $region33: #{simple_block2d_forward.11} parent=0 // pred_fallthru
    _

// kernel: reverse.8
$region0: #{reverse.8}
  #allocation0 [shape = 's32[1]{0}', space=sflag, size = 0x4, scoped, tag = 'scoped memory for reverse.8']
  %s0 = inlined_call_operand.vmem [shape: f32[16,2,8,8,3], index: 0, kind: input, shape index: {}]
  %s1 = inlined_call_operand.vmem [shape: f32[16,2,8,8,3], index: 1, kind: output, shape index: {}]
  %s2 = scalar_lea.vmem %s0, 128
  %v3 = vld [vmem:[%s2] sm:$0xff]
  %4 = vst [vmem:[%s1] sm:$0xff] %v3
  %s5 = scalar_lea.vmem %s0, 320
  %v6 = vld [vmem:[%s5] sm:$0xff]
  %s7 = scalar_lea.vmem %s1, 192
  %8 = vst [vmem:[%s7] sm:$0xff] %v6
  %s9 = scalar_lea.vmem %s0, 64
  %v10 = vld [vmem:[%s9] sm:$0xff]
  %s11 = scalar_lea.vmem %s1, 64
  %12 = vst [vmem:[%s11] sm:$0xff] %v10
  %s13 = scalar_lea.vmem %s0, 256
  %v14 = vld [vmem:[%s13] sm:$0xff]
  %s15 = scalar_lea.vmem %s1, 256
  %16 = vst [vmem:[%s15] sm:$0xff] %v14
  %v17 = vld [vmem:[%s0] sm:$0xff]
  %s18 = scalar_lea.vmem %s1, 128
  %19 = vst [vmem:[%s18] sm:$0xff] %v17
  %s20 = scalar_lea.vmem %s0, 192
  %v21 = vld [vmem:[%s20] sm:$0xff]
  %s22 = scalar_lea.vmem %s1, 320
  %23 = vst [vmem:[%s22] sm:$0xff] %v21
  %s24 = scalar_lea.vmem %s0, 136
  %v25 = vld [vmem:[%s24] sm:$0xff]
  %s26 = scalar_lea.vmem %s1, 8
  %27 = vst [vmem:[%s26] sm:$0xff] %v25
  %s28 = scalar_lea.vmem %s0, 328
  %v29 = vld [vmem:[%s28] sm:$0xff]
  %s30 = scalar_lea.vmem %s1, 200
  %31 = vst [vmem:[%s30] sm:$0xff] %v29
  %s32 = scalar_lea.vmem %s0, 72
  %v33 = vld [vmem:[%s32] sm:$0xff]
  %s34 = scalar_lea.vmem %s1, 72
  %35 = vst [vmem:[%s34] sm:$0xff] %v33
  %s36 = scalar_lea.vmem %s0, 264
  %v37 = vld [vmem:[%s36] sm:$0xff]
  %s38 = scalar_lea.vmem %s1, 264
  %39 = vst [vmem:[%s38] sm:$0xff] %v37
  %s40 = scalar_lea.vmem %s0, 8
  %v41 = vld [vmem:[%s40] sm:$0xff]
  %s42 = scalar_lea.vmem %s1, 136
  %43 = vst [vmem:[%s42] sm:$0xff] %v41
  %s44 = scalar_lea.vmem %s0, 200
  %v45 = vld [vmem:[%s44] sm:$0xff]
  %s46 = scalar_lea.vmem %s1, 328
  %47 = vst [vmem:[%s46] sm:$0xff] %v45
  %s48 = scalar_lea.vmem %s0, 144
  %v49 = vld [vmem:[%s48] sm:$0xff]
  %s50 = scalar_lea.vmem %s1, 16
  %51 = vst [vmem:[%s50] sm:$0xff] %v49
  %s52 = scalar_lea.vmem %s0, 336
  %v53 = vld [vmem:[%s52] sm:$0xff]
  %s54 = scalar_lea.vmem %s1, 208
  %55 = vst [vmem:[%s54] sm:$0xff] %v53
  %s56 = scalar_lea.vmem %s0, 80
  %v57 = vld [vmem:[%s56] sm:$0xff]
  %s58 = scalar_lea.vmem %s1, 80
  %59 = vst [vmem:[%s58] sm:$0xff] %v57
  %s60 = scalar_lea.vmem %s0, 272
  %v61 = vld [vmem:[%s60] sm:$0xff]
  %s62 = scalar_lea.vmem %s1, 272
  %63 = vst [vmem:[%s62] sm:$0xff] %v61
  %s64 = scalar_lea.vmem %s0, 16
  %v65 = vld [vmem:[%s64] sm:$0xff]
  %s66 = scalar_lea.vmem %s1, 144
  %67 = vst [vmem:[%s66] sm:$0xff] %v65
  %s68 = scalar_lea.vmem %s0, 208
  %v69 = vld [vmem:[%s68] sm:$0xff]
  %s70 = scalar_lea.vmem %s1, 336
  %71 = vst [vmem:[%s70] sm:$0xff] %v69
  %s72 = scalar_lea.vmem %s0, 152
  %v73 = vld [vmem:[%s72] sm:$0xff]
  %s74 = scalar_lea.vmem %s1, 24
  %75 = vst [vmem:[%s74] sm:$0xff] %v73
  %s76 = scalar_lea.vmem %s0, 344
  %v77 = vld [vmem:[%s76] sm:$0xff]
  %s78 = scalar_lea.vmem %s1, 216
  %79 = vst [vmem:[%s78] sm:$0xff] %v77
  %s80 = scalar_lea.vmem %s0, 88
  %v81 = vld [vmem:[%s80] sm:$0xff]
  %s82 = scalar_lea.vmem %s1, 88
  %83 = vst [vmem:[%s82] sm:$0xff] %v81
  %s84 = scalar_lea.vmem %s0, 280
  %v85 = vld [vmem:[%s84] sm:$0xff]
  %s86 = scalar_lea.vmem %s1, 280
  %87 = vst [vmem:[%s86] sm:$0xff] %v85
  %s88 = scalar_lea.vmem %s0, 24
  %v89 = vld [vmem:[%s88] sm:$0xff]
  %s90 = scalar_lea.vmem %s1, 152
  %91 = vst [vmem:[%s90] sm:$0xff] %v89
  %s92 = scalar_lea.vmem %s0, 216
  %v93 = vld [vmem:[%s92] sm:$0xff]
  %s94 = scalar_lea.vmem %s1, 344
  %95 = vst [vmem:[%s94] sm:$0xff] %v93
  %s96 = scalar_lea.vmem %s0, 160
  %v97 = vld [vmem:[%s96] sm:$0xff]
  %s98 = scalar_lea.vmem %s1, 32
  %99 = vst [vmem:[%s98] sm:$0xff] %v97
  %s100 = scalar_lea.vmem %s0, 352
  %v101 = vld [vmem:[%s100] sm:$0xff]
  %s102 = scalar_lea.vmem %s1, 224
  %103 = vst [vmem:[%s102] sm:$0xff] %v101
  %s104 = scalar_lea.vmem %s0, 96
  %v105 = vld [vmem:[%s104] sm:$0xff]
  %s106 = scalar_lea.vmem %s1, 96
  %107 = vst [vmem:[%s106] sm:$0xff] %v105
  %s108 = scalar_lea.vmem %s0, 288
  %v109 = vld [vmem:[%s108] sm:$0xff]
  %s110 = scalar_lea.vmem %s1, 288
  %111 = vst [vmem:[%s110] sm:$0xff] %v109
  %s112 = scalar_lea.vmem %s0, 32
  %v113 = vld [vmem:[%s112] sm:$0xff]
  %s114 = scalar_lea.vmem %s1, 160
  %115 = vst [vmem:[%s114] sm:$0xff] %v113
  %s116 = scalar_lea.vmem %s0, 224
  %v117 = vld [vmem:[%s116] sm:$0xff]
  %s118 = scalar_lea.vmem %s1, 352
  %119 = vst [vmem:[%s118] sm:$0xff] %v117
  %s120 = scalar_lea.vmem %s0, 168
  %v121 = vld [vmem:[%s120] sm:$0xff]
  %s122 = scalar_lea.vmem %s1, 40
  %123 = vst [vmem:[%s122] sm:$0xff] %v121
  %s124 = scalar_lea.vmem %s0, 360
  %v125 = vld [vmem:[%s124] sm:$0xff]
  %s126 = scalar_lea.vmem %s1, 232
  %127 = vst [vmem:[%s126] sm:$0xff] %v125
  %s128 = scalar_lea.vmem %s0, 104
  %v129 = vld [vmem:[%s128] sm:$0xff]
  %s130 = scalar_lea.vmem %s1, 104
  %131 = vst [vmem:[%s130] sm:$0xff] %v129
  %s132 = scalar_lea.vmem %s0, 296
  %v133 = vld [vmem:[%s132] sm:$0xff]
  %s134 = scalar_lea.vmem %s1, 296
  %135 = vst [vmem:[%s134] sm:$0xff] %v133
  %s136 = scalar_lea.vmem %s0, 40
  %v137 = vld [vmem:[%s136] sm:$0xff]
  %s138 = scalar_lea.vmem %s1, 168
  %139 = vst [vmem:[%s138] sm:$0xff] %v137
  %s140 = scalar_lea.vmem %s0, 232
  %v141 = vld [vmem:[%s140] sm:$0xff]
  %s142 = scalar_lea.vmem %s1, 360
  %143 = vst [vmem:[%s142] sm:$0xff] %v141
  %s144 = scalar_lea.vmem %s0, 176
  %v145 = vld [vmem:[%s144] sm:$0xff]
  %s146 = scalar_lea.vmem %s1, 48
  %147 = vst [vmem:[%s146] sm:$0xff] %v145
  %s148 = scalar_lea.vmem %s0, 368
  %v149 = vld [vmem:[%s148] sm:$0xff]
  %s150 = scalar_lea.vmem %s1, 240
  %151 = vst [vmem:[%s150] sm:$0xff] %v149
  %s152 = scalar_lea.vmem %s0, 112
  %v153 = vld [vmem:[%s152] sm:$0xff]
  %s154 = scalar_lea.vmem %s1, 112
  %155 = vst [vmem:[%s154] sm:$0xff] %v153
  %s156 = scalar_lea.vmem %s0, 304
  %v157 = vld [vmem:[%s156] sm:$0xff]
  %s158 = scalar_lea.vmem %s1, 304
  %159 = vst [vmem:[%s158] sm:$0xff] %v157
  %s160 = scalar_lea.vmem %s0, 48
  %v161 = vld [vmem:[%s160] sm:$0xff]
  %s162 = scalar_lea.vmem %s1, 176
  %163 = vst [vmem:[%s162] sm:$0xff] %v161
  %s164 = scalar_lea.vmem %s0, 240
  %v165 = vld [vmem:[%s164] sm:$0xff]
  %s166 = scalar_lea.vmem %s1, 368
  %167 = vst [vmem:[%s166] sm:$0xff] %v165
  %s168 = scalar_lea.vmem %s0, 184
  %v169 = vld [vmem:[%s168] sm:$0xff]
  %s170 = scalar_lea.vmem %s1, 56
  %171 = vst [vmem:[%s170] sm:$0xff] %v169
  %s172 = scalar_lea.vmem %s0, 376
  %v173 = vld [vmem:[%s172] sm:$0xff]
  %s174 = scalar_lea.vmem %s1, 248
  %175 = vst [vmem:[%s174] sm:$0xff] %v173
  %s176 = scalar_lea.vmem %s0, 120
  %v177 = vld [vmem:[%s176] sm:$0xff]
  %s178 = scalar_lea.vmem %s1, 120
  %179 = vst [vmem:[%s178] sm:$0xff] %v177
  %s180 = scalar_lea.vmem %s0, 312
  %v181 = vld [vmem:[%s180] sm:$0xff]
  %s182 = scalar_lea.vmem %s1, 312
  %183 = vst [vmem:[%s182] sm:$0xff] %v181
  %s184 = scalar_lea.vmem %s0, 56
  %v185 = vld [vmem:[%s184] sm:$0xff]
  %s186 = scalar_lea.vmem %s1, 184
  %187 = vst [vmem:[%s186] sm:$0xff] %v185
  %s188 = scalar_lea.vmem %s0, 248
  %v189 = vld [vmem:[%s188] sm:$0xff]
  %s190 = scalar_lea.vmem %s1, 376
  %191 = vst [vmem:[%s190] sm:$0xff] %v189

// kernel: simple_block2d_forward.12
$region0: #{simple_block2d_forward.12}
  #allocation0 [shape = 'u32[]', space=smem, size = 0x4, offset = 0x4, fixed_abs, tag = 'smem constant byte address 0x4 - core index']
  #allocation1 [shape = 'u32[144,128]{1,0:T(1,128)}', space=vmem, size = 0x12000, scoped, tag = 'internal scratch']
  %s0 = inlined_call_operand.vmem [shape: f32[16,1024], index: 0, kind: input, shape index: {}]
  %s1 = inlined_call_operand.vmem [shape: f32[16,1024], index: 1, kind: input, shape index: {}]
  %s2 = inlined_call_operand.vmem [shape: f32[16,16], index: 2, kind: input, shape index: {}]
  %s3 = inlined_call_operand.vmem [shape: f32[16,1], index: 3, kind: input, shape index: {}]
  %s4 = inlined_call_operand.vmem [shape: f32[16,1], index: 4, kind: input, shape index: {}]
  %s5 = inlined_call_operand.vmem [shape: f32[16,1], index: 5, kind: input, shape index: {}]
  %s6 = inlined_call_operand.vmem [shape: f32[16,1024], index: 6, kind: output, shape index: {}]
  %s7 = sld [smem:[#allocation0]]
  $region34: #{simple_block2d_forward.12} parent=0
    _
  %s9 = ssub.s32 1, %s7
  %s10 = scalar_select 0, %s9, %s7
  // Predicated region
  $region2: #{simple_block2d_forward.12} parent=0 // pred_check
    _
  $region3: #{simple_block2d_forward.12} parent=0 // pred_check_branch
    %12 = sbr.rel (0) target = $region5
  $region4: #{simple_block2d_forward.12} parent=0 // pred_region
    _
  $region5: #{simple_block2d_forward.12} parent=0 // pred_fallthru
    _
  // Predicated region
  $region6: #{simple_block2d_forward.12} parent=0 // pred_check
    _
  $region7: #{simple_block2d_forward.12} parent=0 // pred_check_branch
    %14 = sbr.rel (0) target = $region9
  $region8: #{simple_block2d_forward.12} parent=0 // pred_region
    _
  $region9: #{simple_block2d_forward.12} parent=0 // pred_fallthru
    _
  // Predicated region
  $region10: #{simple_block2d_forward.12} parent=0 // pred_check
    _
  $region11: #{simple_block2d_forward.12} parent=0 // pred_check_branch
    %16 = sbr.rel (0) target = $region13
  $region12: #{simple_block2d_forward.12} parent=0 // pred_region
    _
  $region13: #{simple_block2d_forward.12} parent=0 // pred_fallthru
    _
  // Predicated region
  $region14: #{simple_block2d_forward.12} parent=0 // pred_check
    _
  $region15: #{simple_block2d_forward.12} parent=0 // pred_check_branch
    %18 = sbr.rel (0) target = $region17
  $region16: #{simple_block2d_forward.12} parent=0 // pred_region
    _
  $region17: #{simple_block2d_forward.12} parent=0 // pred_fallthru
    _
  // Predicated region
  $region18: #{simple_block2d_forward.12} parent=0 // pred_check
    _
  $region19: #{simple_block2d_forward.12} parent=0 // pred_check_branch
    %20 = sbr.rel (0) target = $region21
  $region20: #{simple_block2d_forward.12} parent=0 // pred_region
    _
  $region21: #{simple_block2d_forward.12} parent=0 // pred_fallthru
    _
  // Predicated region
  $region22: #{simple_block2d_forward.12} parent=0 // pred_check
    _
  $region23: #{simple_block2d_forward.12} parent=0 // pred_check_branch
    %22 = sbr.rel (0) target = $region25
  $region24: #{simple_block2d_forward.12} parent=0 // pred_region
    _
  $region25: #{simple_block2d_forward.12} parent=0 // pred_fallthru
    _
  %v23 = vld [vmem:[%s2] sm:$0xff]
  %v24 = vld [vmem:[%s2 + $0x8] sm:$0xff]
  %v25 = vld [vmem:[%s1] sm:$0xff]
  %v26 = vld [vmem:[%s1 + $0x8] sm:$0xff]
  %v27 = vld [vmem:[%s1 + $0x10] sm:$0xff]
  %v28 = vld [vmem:[%s1 + $0x18] sm:$0xff]
  %v29 = vld [vmem:[%s1 + $0x20] sm:$0xff]
  %v30 = vld [vmem:[%s1 + $0x28] sm:$0xff]
  %v31 = vld [vmem:[%s1 + $0x30] sm:$0xff]
  %v32 = vld [vmem:[%s1 + $0x38] sm:$0xff]
  %v33 = vld [vmem:[%s1 + $0x40] sm:$0xff]
  %v34 = vld [vmem:[%s1 + $0x48] sm:$0xff]
  %v35 = vld [vmem:[%s1 + $0x50] sm:$0xff]
  %v36 = vld [vmem:[%s1 + $0x58] sm:$0xff]
  %v37 = vld [vmem:[%s1 + $0x60] sm:$0xff]
  %v38 = vld [vmem:[%s1 + $0x68] sm:$0xff]
  %v39 = vld [vmem:[%s1 + $0x70] sm:$0xff]
  %v40 = vld [vmem:[%s1 + $0x78] sm:$0xff]
  %v41 = vld [vmem:[%s3] sm:$0xff]
  %v42 = vld [vmem:[%s3 + $0x8] sm:$0xff]
  %44 = vset.pattern.permute.xlu0 0
  %45 = vperm.xlu0 %44, %v41
  %v46 = vpop.permute.xlu0 %45
  %49 = vset.pattern.permute.xlu0 0
  %50 = vperm.xlu0 %49, %v42
  %v51 = vpop.permute.xlu0 %50
  %vm53 = vcmask 130048
  %v55 = vsel %vm53, %v23, 0
  %v58 = vsel %vm53, %v24, 0
  %60 = vmatprep.subr.mxu0 %v26
  %61 = vmatpush1.msra.mxu0 %v25
  %62 = vmatprep.subr.mxu0 %v34
  %63 = vmatpush1.msra.mxu0 %v33
  %64 = vmatprep.subr.mxu0 0.0
  %65 = vmatpush1.msra.mxu0 0.0
  %66 = vmatprep.subr.mxu0 0.0
  %67 = vmatpush1.msra.mxu0 0.0
  %68 = vmatprep.subr.mxu0 0.0
  %69 = vmatpush1.msra.mxu0 0.0
  %70 = vmatprep.subr.mxu0 0.0
  %71 = vmatpush1.msra.mxu0 0.0
  %72 = vmatprep.subr.mxu0 0.0
  %73 = vmatpush1.msra.mxu0 0.0
  %74 = vmatprep.subr.mxu0 0.0
  %75 = vmatpush1.msra.mxu0 0.0
  %76 = vmatprep.subr.mxu0 0.0
  %77 = vmatpush1.msra.mxu0 0.0
  %78 = vmatprep.subr.mxu0 0.0
  %79 = vmatpush1.msra.mxu0 0.0
  %80 = vmatprep.subr.mxu0 0.0
  %81 = vmatpush1.msra.mxu0 0.0
  %82 = vmatprep.subr.mxu0 0.0
  %83 = vmatpush1.msra.mxu0 0.0
  %84 = vmatprep.subr.mxu0 0.0
  %85 = vmatpush1.msra.mxu0 0.0
  %86 = vmatprep.subr.mxu0 0.0
  %87 = vmatpush1.msra.mxu0 0.0
  %88 = vmatprep.subr.mxu0 0.0
  %89 = vmatpush1.msra.mxu0 0.0
  %90 = vmatprep.subr.mxu0 0.0
  %91 = vmatpush1.msra.mxu0 0.0
  %92 = vmatprep.subr.mxu0 0.0
  %93 = vmatpush1.msra.mxu0 0.0
  %94 = vmatprep.subr.mxu0 0.0
  %95 = vmatpush1.msra.mxu0 0.0
  %96 = vmatprep.subr.mxu0 0.0
  %97 = vmatpush1.msra.mxu0 0.0
  %98 = vmatprep.subr.mxu0 0.0
  %99 = vmatpush1.msra.mxu0 0.0
  %100 = vmatprep.subr.mxu0 0.0
  %101 = vmatpush1.msra.mxu0 0.0
  %102 = vmatprep.subr.mxu0 0.0
  %103 = vmatpush1.msra.mxu0 0.0
  %104 = vmatprep.subr.mxu0 0.0
  %105 = vmatpush1.msra.mxu0 0.0
  %106 = vmatprep.subr.mxu0 0.0
  %107 = vmatpush1.msra.mxu0 0.0
  %108 = vmatprep.subr.mxu0 0.0
  %109 = vmatpush1.msra.mxu0 0.0
  %110 = vmatprep.subr.mxu0 0.0
  %111 = vmatpush1.msra.mxu0 0.0
  %112 = vmatprep.subr.mxu0 0.0
  %113 = vmatpush1.msra.mxu0 0.0
  %114 = vmatprep.subr.mxu0 0.0
  %115 = vmatpush1.msra.mxu0 0.0
  %116 = vmatprep.subr.mxu0 0.0
  %117 = vmatpush1.msra.mxu0 0.0
  %118 = vmatprep.subr.mxu0 0.0
  %119 = vmatpush1.msra.mxu0 0.0
  %120 = vmatprep.subr.mxu0 0.0
  %121 = vmatpush1.msra.mxu0 0.0
  %122 = vmatprep.subr.mxu0 0.0
  %123 = vmatpush1.msra.mxu0 0.0
  %124 = vmatprep.mubr.f32.mxu0 0.0
  %125 = vmatmul.mubr.f32.gmra.mrb[0].mxu0 %v55
  %v126 = vpop.f32.mrb[0].mxu0
  %v127 = vadd.f32 %v46, %v126
  %v128 = vpop.f32.mrb[0].mxu0
  %v129 = vadd.f32 %v46, %v128
  %130 = vmatprep.mubr.f32.mxu0 0.0
  %131 = vmatmul.mubr.f32.gmra.mrb[0].mxu0 %v58
  %v132 = vpop.f32.mrb[0].mxu0
  %v133 = vadd.f32 %v51, %v132
  %v134 = vpop.f32.mrb[0].mxu0
  %v135 = vadd.f32 %v51, %v134
  %136 = vdwg.mxu0
  %137 = vmatprep.subr.mxu0 %v28
  %138 = vmatpush1.msra.mxu0 %v27
  %139 = vmatprep.subr.mxu0 %v36
  %140 = vmatpush1.msra.mxu0 %v35
  %141 = vmatprep.subr.mxu0 0.0
  %142 = vmatpush1.msra.mxu0 0.0
  %143 = vmatprep.subr.mxu0 0.0
  %144 = vmatpush1.msra.mxu0 0.0
  %145 = vmatprep.subr.mxu0 0.0
  %146 = vmatpush1.msra.mxu0 0.0
  %147 = vmatprep.subr.mxu0 0.0
  %148 = vmatpush1.msra.mxu0 0.0
  %149 = vmatprep.subr.mxu0 0.0
  %150 = vmatpush1.msra.mxu0 0.0
  %151 = vmatprep.subr.mxu0 0.0
  %152 = vmatpush1.msra.mxu0 0.0
  %153 = vmatprep.subr.mxu0 0.0
  %154 = vmatpush1.msra.mxu0 0.0
  %155 = vmatprep.subr.mxu0 0.0
  %156 = vmatpush1.msra.mxu0 0.0
  %157 = vmatprep.subr.mxu0 0.0
  %158 = vmatpush1.msra.mxu0 0.0
  %159 = vmatprep.subr.mxu0 0.0
  %160 = vmatpush1.msra.mxu0 0.0
  %161 = vmatprep.subr.mxu0 0.0
  %162 = vmatpush1.msra.mxu0 0.0
  %163 = vmatprep.subr.mxu0 0.0
  %164 = vmatpush1.msra.mxu0 0.0
  %165 = vmatprep.subr.mxu0 0.0
  %166 = vmatpush1.msra.mxu0 0.0
  %167 = vmatprep.subr.mxu0 0.0
  %168 = vmatpush1.msra.mxu0 0.0
  %169 = vmatprep.subr.mxu0 0.0
  %170 = vmatpush1.msra.mxu0 0.0
  %171 = vmatprep.subr.mxu0 0.0
  %172 = vmatpush1.msra.mxu0 0.0
  %173 = vmatprep.subr.mxu0 0.0
  %174 = vmatpush1.msra.mxu0 0.0
  %175 = vmatprep.subr.mxu0 0.0
  %176 = vmatpush1.msra.mxu0 0.0
  %177 = vmatprep.subr.mxu0 0.0
  %178 = vmatpush1.msra.mxu0 0.0
  %179 = vmatprep.subr.mxu0 0.0
  %180 = vmatpush1.msra.mxu0 0.0
  %181 = vmatprep.subr.mxu0 0.0
  %182 = vmatpush1.msra.mxu0 0.0
  %183 = vmatprep.subr.mxu0 0.0
  %184 = vmatpush1.msra.mxu0 0.0
  %185 = vmatprep.subr.mxu0 0.0
  %186 = vmatpush1.msra.mxu0 0.0
  %187 = vmatprep.subr.mxu0 0.0
  %188 = vmatpush1.msra.mxu0 0.0
  %189 = vmatprep.subr.mxu0 0.0
  %190 = vmatpush1.msra.mxu0 0.0
  %191 = vmatprep.subr.mxu0 0.0
  %192 = vmatpush1.msra.mxu0 0.0
  %193 = vmatprep.subr.mxu0 0.0
  %194 = vmatpush1.msra.mxu0 0.0
  %195 = vmatprep.subr.mxu0 0.0
  %196 = vmatpush1.msra.mxu0 0.0
  %197 = vmatprep.subr.mxu0 0.0
  %198 = vmatpush1.msra.mxu0 0.0
  %199 = vmatprep.subr.mxu0 0.0
  %200 = vmatpush1.msra.mxu0 0.0
  %201 = vmatprep.mubr.f32.mxu0 0.0
  %202 = vmatmul.mubr.f32.gmra.mrb[0].mxu0 %v55
  %v203 = vpop.f32.mrb[0].mxu0
  %v204 = vadd.f32 %v46, %v203
  %v205 = vpop.f32.mrb[0].mxu0
  %v206 = vadd.f32 %v46, %v205
  %207 = vmatprep.mubr.f32.mxu0 0.0
  %208 = vmatmul.mubr.f32.gmra.mrb[0].mxu0 %v58
  %v209 = vpop.f32.mrb[0].mxu0
  %v210 = vadd.f32 %v51, %v209
  %v211 = vpop.f32.mrb[0].mxu0
  %v212 = vadd.f32 %v51, %v211
  %213 = vdwg.mxu0
  %214 = vmatprep.subr.mxu0 %v30
  %215 = vmatpush1.msra.mxu0 %v29
  %216 = vmatprep.subr.mxu0 %v38
  %217 = vmatpush1.msra.mxu0 %v37
  %218 = vmatprep.subr.mxu0 0.0
  %219 = vmatpush1.msra.mxu0 0.0
  %220 = vmatprep.subr.mxu0 0.0
  %221 = vmatpush1.msra.mxu0 0.0
  %222 = vmatprep.subr.mxu0 0.0
  %223 = vmatpush1.msra.mxu0 0.0
  %224 = vmatprep.subr.mxu0 0.0
  %225 = vmatpush1.msra.mxu0 0.0
  %226 = vmatprep.subr.mxu0 0.0
  %227 = vmatpush1.msra.mxu0 0.0
  %228 = vmatprep.subr.mxu0 0.0
  %229 = vmatpush1.msra.mxu0 0.0
  %230 = vmatprep.subr.mxu0 0.0
  %231 = vmatpush1.msra.mxu0 0.0
  %232 = vmatprep.subr.mxu0 0.0
  %233 = vmatpush1.msra.mxu0 0.0
  %234 = vmatprep.subr.mxu0 0.0
  %235 = vmatpush1.msra.mxu0 0.0
  %236 = vmatprep.subr.mxu0 0.0
  %237 = vmatpush1.msra.mxu0 0.0
  %238 = vmatprep.subr.mxu0 0.0
  %239 = vmatpush1.msra.mxu0 0.0
  %240 = vmatprep.subr.mxu0 0.0
  %241 = vmatpush1.msra.mxu0 0.0
  %242 = vmatprep.subr.mxu0 0.0
  %243 = vmatpush1.msra.mxu0 0.0
  %244 = vmatprep.subr.mxu0 0.0
  %245 = vmatpush1.msra.mxu0 0.0
  %246 = vmatprep.subr.mxu0 0.0
  %247 = vmatpush1.msra.mxu0 0.0
  %248 = vmatprep.subr.mxu0 0.0
  %249 = vmatpush1.msra.mxu0 0.0
  %250 = vmatprep.subr.mxu0 0.0
  %251 = vmatpush1.msra.mxu0 0.0
  %252 = vmatprep.subr.mxu0 0.0
  %253 = vmatpush1.msra.mxu0 0.0
  %254 = vmatprep.subr.mxu0 0.0
  %255 = vmatpush1.msra.mxu0 0.0
  %256 = vmatprep.subr.mxu0 0.0
  %257 = vmatpush1.msra.mxu0 0.0
  %258 = vmatprep.subr.mxu0 0.0
  %259 = vmatpush1.msra.mxu0 0.0
  %260 = vmatprep.subr.mxu0 0.0
  %261 = vmatpush1.msra.mxu0 0.0
  %262 = vmatprep.subr.mxu0 0.0
  %263 = vmatpush1.msra.mxu0 0.0
  %264 = vmatprep.subr.mxu0 0.0
  %265 = vmatpush1.msra.mxu0 0.0
  %266 = vmatprep.subr.mxu0 0.0
  %267 = vmatpush1.msra.mxu0 0.0
  %268 = vmatprep.subr.mxu0 0.0
  %269 = vmatpush1.msra.mxu0 0.0
  %270 = vmatprep.subr.mxu0 0.0
  %271 = vmatpush1.msra.mxu0 0.0
  %272 = vmatprep.subr.mxu0 0.0
  %273 = vmatpush1.msra.mxu0 0.0
  %274 = vmatprep.subr.mxu0 0.0
  %275 = vmatpush1.msra.mxu0 0.0
  %276 = vmatprep.subr.mxu0 0.0
  %277 = vmatpush1.msra.mxu0 0.0
  %278 = vmatprep.mubr.f32.mxu0 0.0
  %279 = vmatmul.mubr.f32.gmra.mrb[0].mxu0 %v55
  %v280 = vpop.f32.mrb[0].mxu0
  %v281 = vadd.f32 %v46, %v280
  %v282 = vpop.f32.mrb[0].mxu0
  %v283 = vadd.f32 %v46, %v282
  %284 = vmatprep.mubr.f32.mxu0 0.0
  %285 = vmatmul.mubr.f32.gmra.mrb[0].mxu0 %v58
  %v286 = vpop.f32.mrb[0].mxu0
  %v287 = vadd.f32 %v51, %v286
  %v288 = vpop.f32.mrb[0].mxu0
  %v289 = vadd.f32 %v51, %v288
  %290 = vdwg.mxu0
  %291 = vmatprep.subr.mxu0 %v32
  %292 = vmatpush1.msra.mxu0 %v31
  %293 = vmatprep.subr.mxu0 %v40
  %294 = vmatpush1.msra.mxu0 %v39
  %295 = vmatprep.subr.mxu0 0.0
  %296 = vmatpush1.msra.mxu0 0.0
  %297 = vmatprep.subr.mxu0 0.0
  %298 = vmatpush1.msra.mxu0 0.0
  %299 = vmatprep.subr.mxu0 0.0
  %300 = vmatpush1.msra.mxu0 0.0
  %301 = vmatprep.subr.mxu0 0.0
  %302 = vmatpush1.msra.mxu0 0.0
  %303 = vmatprep.subr.mxu0 0.0
  %304 = vmatpush1.msra.mxu0 0.0
  %305 = vmatprep.subr.mxu0 0.0
  %306 = vmatpush1.msra.mxu0 0.0
  %307 = vmatprep.subr.mxu0 0.0
  %308 = vmatpush1.msra.mxu0 0.0
  %309 = vmatprep.subr.mxu0 0.0
  %310 = vmatpush1.msra.mxu0 0.0
  %311 = vmatprep.subr.mxu0 0.0
  %312 = vmatpush1.msra.mxu0 0.0
  %313 = vmatprep.subr.mxu0 0.0
  %314 = vmatpush1.msra.mxu0 0.0
  %315 = vmatprep.subr.mxu0 0.0
  %316 = vmatpush1.msra.mxu0 0.0
  %317 = vmatprep.subr.mxu0 0.0
  %318 = vmatpush1.msra.mxu0 0.0
  %319 = vmatprep.subr.mxu0 0.0
  %320 = vmatpush1.msra.mxu0 0.0
  %321 = vmatprep.subr.mxu0 0.0
  %322 = vmatpush1.msra.mxu0 0.0
  %323 = vmatprep.subr.mxu0 0.0
  %324 = vmatpush1.msra.mxu0 0.0
  %325 = vmatprep.subr.mxu0 0.0
  %326 = vmatpush1.msra.mxu0 0.0
  %327 = vmatprep.subr.mxu0 0.0
  %328 = vmatpush1.msra.mxu0 0.0
  %329 = vmatprep.subr.mxu0 0.0
  %330 = vmatpush1.msra.mxu0 0.0
  %331 = vmatprep.subr.mxu0 0.0
  %332 = vmatpush1.msra.mxu0 0.0
  %333 = vmatprep.subr.mxu0 0.0
  %334 = vmatpush1.msra.mxu0 0.0
  %335 = vmatprep.subr.mxu0 0.0
  %336 = vmatpush1.msra.mxu0 0.0
  %337 = vmatprep.subr.mxu0 0.0
  %338 = vmatpush1.msra.mxu0 0.0
  %339 = vmatprep.subr.mxu0 0.0
  %340 = vmatpush1.msra.mxu0 0.0
  %341 = vmatprep.subr.mxu0 0.0
  %342 = vmatpush1.msra.mxu0 0.0
  %343 = vmatprep.subr.mxu0 0.0
  %344 = vmatpush1.msra.mxu0 0.0
  %345 = vmatprep.subr.mxu0 0.0
  %346 = vmatpush1.msra.mxu0 0.0
  %347 = vmatprep.subr.mxu0 0.0
  %348 = vmatpush1.msra.mxu0 0.0
  %349 = vmatprep.subr.mxu0 0.0
  %350 = vmatpush1.msra.mxu0 0.0
  %351 = vmatprep.subr.mxu0 0.0
  %352 = vmatpush1.msra.mxu0 0.0
  %353 = vmatprep.subr.mxu0 0.0
  %354 = vmatpush1.msra.mxu0 0.0
  %355 = vmatprep.mubr.f32.mxu0 0.0
  %356 = vmatmul.mubr.f32.gmra.mrb[0].mxu0 %v55
  %v357 = vpop.f32.mrb[0].mxu0
  %v358 = vadd.f32 %v46, %v357
  %v359 = vpop.f32.mrb[0].mxu0
  %v360 = vadd.f32 %v46, %v359
  %361 = vmatprep.mubr.f32.mxu0 0.0
  %362 = vmatmul.mubr.f32.gmra.mrb[0].mxu0 %v58
  %v363 = vpop.f32.mrb[0].mxu0
  %v364 = vadd.f32 %v51, %v363
  %v365 = vpop.f32.mrb[0].mxu0
  %v366 = vadd.f32 %v51, %v365
  %367 = vdwg.mxu0
  %v368 = vld [vmem:[%s0] sm:$0xff]
  %v369 = vld [vmem:[%s0 + $0x8] sm:$0xff]
  %v370 = vld [vmem:[%s0 + $0x10] sm:$0xff]
  %v371 = vld [vmem:[%s0 + $0x18] sm:$0xff]
  %v372 = vld [vmem:[%s0 + $0x20] sm:$0xff]
  %v373 = vld [vmem:[%s0 + $0x28] sm:$0xff]
  %v374 = vld [vmem:[%s0 + $0x30] sm:$0xff]
  %v375 = vld [vmem:[%s0 + $0x38] sm:$0xff]
  %v376 = vld [vmem:[%s0 + $0x40] sm:$0xff]
  %v377 = vld [vmem:[%s0 + $0x48] sm:$0xff]
  %v378 = vld [vmem:[%s0 + $0x50] sm:$0xff]
  %v379 = vld [vmem:[%s0 + $0x58] sm:$0xff]
  %v380 = vld [vmem:[%s0 + $0x60] sm:$0xff]
  %v381 = vld [vmem:[%s0 + $0x68] sm:$0xff]
  %v382 = vld [vmem:[%s0 + $0x70] sm:$0xff]
  %v383 = vld [vmem:[%s0 + $0x78] sm:$0xff]
  %v384 = vadd.f32 %v368, %v127
  %v385 = vadd.f32 %v369, %v129
  %v386 = vadd.f32 %v370, %v204
  %v387 = vadd.f32 %v371, %v206
  %v388 = vadd.f32 %v372, %v281
  %v389 = vadd.f32 %v373, %v283
  %v390 = vadd.f32 %v374, %v358
  %v391 = vadd.f32 %v375, %v360
  %v392 = vadd.f32 %v376, %v133
  %v393 = vadd.f32 %v377, %v135
  %v394 = vadd.f32 %v378, %v210
  %v395 = vadd.f32 %v379, %v212
  %v396 = vadd.f32 %v380, %v287
  %v397 = vadd.f32 %v381, %v289
  %v398 = vadd.f32 %v382, %v364
  %v399 = vadd.f32 %v383, %v366
  %v400 = vadd.f32 %v384, %v385
  %v401 = vadd.f32 %v400, %v386
  %v402 = vadd.f32 %v401, %v387
  %v403 = vadd.f32 %v402, %v388
  %v404 = vadd.f32 %v403, %v389
  %v405 = vadd.f32 %v404, %v390
  %v406 = vadd.f32 %v405, %v391
  %407 = vadd.xlane.f32.xlu0 %v406
  %v408 = vpop.xlane.xlu0 %407
  %v409 = vadd.f32 %v392, %v393
  %v410 = vadd.f32 %v409, %v394
  %v411 = vadd.f32 %v410, %v395
  %v412 = vadd.f32 %v411, %v396
  %v413 = vadd.f32 %v412, %v397
  %v414 = vadd.f32 %v413, %v398
  %v415 = vadd.f32 %v414, %v399
  %416 = vadd.xlane.f32.xlu0 %v415
  %v417 = vpop.xlane.xlu0 %416
  %v418 = vmul.f32 %v408, 0.0009765625
  %v419 = vmul.f32 %v417, 0.0009765625
  %v420 = vmul.f32 %v384, %v384
  %v421 = vmul.f32 %v385, %v385
  %v422 = vmul.f32 %v386, %v386
  %v423 = vmul.f32 %v387, %v387
  %v424 = vmul.f32 %v388, %v388
  %v425 = vmul.f32 %v389, %v389
  %v426 = vmul.f32 %v390, %v390
  %v427 = vmul.f32 %v391, %v391
  %v428 = vmul.f32 %v392, %v392
  %v429 = vmul.f32 %v393, %v393
  %v430 = vmul.f32 %v394, %v394
  %v431 = vmul.f32 %v395, %v395
  %v432 = vmul.f32 %v396, %v396
  %v433 = vmul.f32 %v397, %v397
  %v434 = vmul.f32 %v398, %v398
  %v435 = vmul.f32 %v399, %v399
  %v436 = vadd.f32 %v420, %v421
  %v437 = vadd.f32 %v436, %v422
  %v438 = vadd.f32 %v437, %v423
  %v439 = vadd.f32 %v438, %v424
  %v440 = vadd.f32 %v439, %v425
  %v441 = vadd.f32 %v440, %v426
  %v442 = vadd.f32 %v441, %v427
  %443 = vadd.xlane.f32.xlu0 %v442
  %v444 = vpop.xlane.xlu0 %443
  %v445 = vadd.f32 %v428, %v429
  %v446 = vadd.f32 %v445, %v430
  %v447 = vadd.f32 %v446, %v431
  %v448 = vadd.f32 %v447, %v432
  %v449 = vadd.f32 %v448, %v433
  %v450 = vadd.f32 %v449, %v434
  %v451 = vadd.f32 %v450, %v435
  %452 = vadd.xlane.f32.xlu0 %v451
  %v453 = vpop.xlane.xlu0 %452
  %v454 = vmul.f32 %v444, 0.0009765625
  %v455 = vmul.f32 %v453, 0.0009765625
  %v456 = vmul.f32 %v418, %v418
  %v457 = vmul.f32 %v419, %v419
  %v458 = vsub.f32 %v454, %v456
  %v459 = vsub.f32 %v455, %v457
  %v460 = vmax.f32 %v458, 0.0
  %v461 = vmax.f32 %v459, 0.0
  %v462 = vadd.f32 %v460, 1e-05
  %v463 = vadd.f32 %v461, 1e-05
  %v464 = vrsqrt.pop %v462
  %v465 = vrsqrt.pop %v463
  %v466 = vld [vmem:[%s4] sm:$0xff]
  %v467 = vld [vmem:[%s4 + $0x8] sm:$0xff]
  %v468 = vmul.f32 %v466, %v464
  %v469 = vmul.f32 %v467, %v465
  %v470 = vld [vmem:[%s5] sm:$0xff]
  %v471 = vld [vmem:[%s5 + $0x8] sm:$0xff]
  %v472 = vmul.f32 %v418, %v468
  %v473 = vmul.f32 %v419, %v469
  %v474 = vsub.f32 %v470, %v472
  %v475 = vsub.f32 %v471, %v473
  %477 = vset.pattern.permute.xlu0 0
  %478 = vperm.xlu0 %477, %v468
  %v479 = vpop.permute.xlu0 %478
  %482 = vset.pattern.permute.xlu0 0
  %483 = vperm.xlu0 %482, %v469
  %v484 = vpop.permute.xlu0 %483
  %v486 = vmul.f32 %v384, %v479
  %v487 = vmul.f32 %v385, %v479
  %v488 = vmul.f32 %v386, %v479
  %v489 = vmul.f32 %v387, %v479
  %v490 = vmul.f32 %v388, %v479
  %v491 = vmul.f32 %v389, %v479
  %v492 = vmul.f32 %v390, %v479
  %v493 = vmul.f32 %v391, %v479
  %v494 = vmul.f32 %v392, %v484
  %v495 = vmul.f32 %v393, %v484
  %v496 = vmul.f32 %v394, %v484
  %v497 = vmul.f32 %v395, %v484
  %v498 = vmul.f32 %v396, %v484
  %v499 = vmul.f32 %v397, %v484
  %v500 = vmul.f32 %v398, %v484
  %v501 = vmul.f32 %v399, %v484
  %503 = vset.pattern.permute.xlu0 0
  %504 = vperm.xlu0 %503, %v474
  %v505 = vpop.permute.xlu0 %504
  %508 = vset.pattern.permute.xlu0 0
  %509 = vperm.xlu0 %508, %v475
  %v510 = vpop.permute.xlu0 %509
  %v512 = vadd.f32 %v486, %v505
  %v513 = vadd.f32 %v487, %v505
  %v514 = vadd.f32 %v488, %v505
  %v515 = vadd.f32 %v489, %v505
  %v516 = vadd.f32 %v490, %v505
  %v517 = vadd.f32 %v491, %v505
  %v518 = vadd.f32 %v492, %v505
  %v519 = vadd.f32 %v493, %v505
  %v520 = vadd.f32 %v494, %v510
  %v521 = vadd.f32 %v495, %v510
  %v522 = vadd.f32 %v496, %v510
  %v523 = vadd.f32 %v497, %v510
  %v524 = vadd.f32 %v498, %v510
  %v525 = vadd.f32 %v499, %v510
  %v526 = vadd.f32 %v500, %v510
  %v527 = vadd.f32 %v501, %v510
  %v528 = vmax.f32 %v512, 0.0
  %v529 = vmax.f32 %v513, 0.0
  %v530 = vmax.f32 %v514, 0.0
  %v531 = vmax.f32 %v515, 0.0
  %v532 = vmax.f32 %v516, 0.0
  %v533 = vmax.f32 %v517, 0.0
  %v534 = vmax.f32 %v518, 0.0
  %v535 = vmax.f32 %v519, 0.0
  %v536 = vmax.f32 %v520, 0.0
  %v537 = vmax.f32 %v521, 0.0
  %v538 = vmax.f32 %v522, 0.0
  %v539 = vmax.f32 %v523, 0.0
  %v540 = vmax.f32 %v524, 0.0
  %v541 = vmax.f32 %v525, 0.0
  %v542 = vmax.f32 %v526, 0.0
  %v543 = vmax.f32 %v527, 0.0
  %544 = vst [vmem:[%s6] sm:$0xff] %v528
  %545 = vst [vmem:[%s6 + $0x8] sm:$0xff] %v529
  %546 = vst [vmem:[%s6 + $0x10] sm:$0xff] %v530
  %547 = vst [vmem:[%s6 + $0x18] sm:$0xff] %v531
  %548 = vst [vmem:[%s6 + $0x20] sm:$0xff] %v532
  %549 = vst [vmem:[%s6 + $0x28] sm:$0xff] %v533
  %550 = vst [vmem:[%s6 + $0x30] sm:$0xff] %v534
  %551 = vst [vmem:[%s6 + $0x38] sm:$0xff] %v535
  %552 = vst [vmem:[%s6 + $0x40] sm:$0xff] %v536
  %553 = vst [vmem:[%s6 + $0x48] sm:$0xff] %v537
  %554 = vst [vmem:[%s6 + $0x50] sm:$0xff] %v538
  %555 = vst [vmem:[%s6 + $0x58] sm:$0xff] %v539
  %556 = vst [vmem:[%s6 + $0x60] sm:$0xff] %v540
  %557 = vst [vmem:[%s6 + $0x68] sm:$0xff] %v541
  %558 = vst [vmem:[%s6 + $0x70] sm:$0xff] %v542
  %559 = vst [vmem:[%s6 + $0x78] sm:$0xff] %v543
  // Predicated region
  $region26: #{simple_block2d_forward.12} parent=0 // pred_check
    _
  $region27: #{simple_block2d_forward.12} parent=0 // pred_check_branch
    %561 = sbr.rel (0) target = $region29
  $region28: #{simple_block2d_forward.12} parent=0 // pred_region
    _
  $region29: #{simple_block2d_forward.12} parent=0 // pred_fallthru
    _
  // Predicated region
  $region30: #{simple_block2d_forward.12} parent=0 // pred_check
    _
  $region31: #{simple_block2d_forward.12} parent=0 // pred_check_branch
    %563 = sbr.rel (0) target = $region33
  $region32: #{simple_block2d_forward.12} parent=0 // pred_region
    _
  $region33: #{simple_block2d_forward.12} parent=0 // pred_fallthru
    _

// kernel: simple_block2d_forward.18
$region0: #{simple_block2d_forward.18}
  #allocation0 [shape = 'u32[]', space=smem, size = 0x4, offset = 0x4, fixed_abs, tag = 'smem constant byte address 0x4 - core index']
  #allocation1 [shape = 'u32[144,128]{1,0:T(1,128)}', space=vmem, size = 0x12000, scoped, tag = 'internal scratch']
  %s0 = inlined_call_operand.vmem [shape: f32[16,1024], index: 0, kind: input, shape index: {}]
  %s1 = inlined_call_operand.vmem [shape: f32[16,1024], index: 1, kind: input, shape index: {}]
  %s2 = inlined_call_operand.vmem [shape: f32[16,16], index: 2, kind: input, shape index: {}]
  %s3 = inlined_call_operand.vmem [shape: f32[16,1], index: 3, kind: input, shape index: {}]
  %s4 = inlined_call_operand.vmem [shape: f32[16,1], index: 4, kind: input, shape index: {}]
  %s5 = inlined_call_operand.vmem [shape: f32[16,1], index: 5, kind: input, shape index: {}]
  %s6 = inlined_call_operand.vmem [shape: f32[16,1024], index: 6, kind: output, shape index: {}]
  %s7 = sld [smem:[#allocation0]]
  $region34: #{simple_block2d_forward.18} parent=0
    _
  %s9 = ssub.s32 1, %s7
  %s10 = scalar_select 0, %s9, %s7
  // Predicated region
  $region2: #{simple_block2d_forward.18} parent=0 // pred_check
    _
  $region3: #{simple_block2d_forward.18} parent=0 // pred_check_branch
    %12 = sbr.rel (0) target = $region5
  $region4: #{simple_block2d_forward.18} parent=0 // pred_region
    _
  $region5: #{simple_block2d_forward.18} parent=0 // pred_fallthru
    _
  // Predicated region
  $region6: #{simple_block2d_forward.18} parent=0 // pred_check
    _
  $region7: #{simple_block2d_forward.18} parent=0 // pred_check_branch
    %14 = sbr.rel (0) target = $region9
  $region8: #{simple_block2d_forward.18} parent=0 // pred_region
    _
  $region9: #{simple_block2d_forward.18} parent=0 // pred_fallthru
    _
  // Predicated region
  $region10: #{simple_block2d_forward.18} parent=0 // pred_check
    _
  $region11: #{simple_block2d_forward.18} parent=0 // pred_check_branch
    %16 = sbr.rel (0) target = $region13
  $region12: #{simple_block2d_forward.18} parent=0 // pred_region
    _
  $region13: #{simple_block2d_forward.18} parent=0 // pred_fallthru
    _
  // Predicated region
  $region14: #{simple_block2d_forward.18} parent=0 // pred_check
    _
  $region15: #{simple_block2d_forward.18} parent=0 // pred_check_branch
    %18 = sbr.rel (0) target = $region17
  $region16: #{simple_block2d_forward.18} parent=0 // pred_region
    _
  $region17: #{simple_block2d_forward.18} parent=0 // pred_fallthru
    _
  // Predicated region
  $region18: #{simple_block2d_forward.18} parent=0 // pred_check
    _
  $region19: #{simple_block2d_forward.18} parent=0 // pred_check_branch
    %20 = sbr.rel (0) target = $region21
  $region20: #{simple_block2d_forward.18} parent=0 // pred_region
    _
  $region21: #{simple_block2d_forward.18} parent=0 // pred_fallthru
    _
  // Predicated region
  $region22: #{simple_block2d_forward.18} parent=0 // pred_check
    _
  $region23: #{simple_block2d_forward.18} parent=0 // pred_check_branch
    %22 = sbr.rel (0) target = $region25
  $region24: #{simple_block2d_forward.18} parent=0 // pred_region
    _
  $region25: #{simple_block2d_forward.18} parent=0 // pred_fallthru
    _
  %v23 = vld [vmem:[%s2] sm:$0xff]
  %v24 = vld [vmem:[%s2 + $0x8] sm:$0xff]
  %v25 = vld [vmem:[%s1] sm:$0xff]
  %v26 = vld [vmem:[%s1 + $0x8] sm:$0xff]
  %v27 = vld [vmem:[%s1 + $0x10] sm:$0xff]
  %v28 = vld [vmem:[%s1 + $0x18] sm:$0xff]
  %v29 = vld [vmem:[%s1 + $0x20] sm:$0xff]
  %v30 = vld [vmem:[%s1 + $0x28] sm:$0xff]
  %v31 = vld [vmem:[%s1 + $0x30] sm:$0xff]
  %v32 = vld [vmem:[%s1 + $0x38] sm:$0xff]
  %v33 = vld [vmem:[%s1 + $0x40] sm:$0xff]
  %v34 = vld [vmem:[%s1 + $0x48] sm:$0xff]
  %v35 = vld [vmem:[%s1 + $0x50] sm:$0xff]
  %v36 = vld [vmem:[%s1 + $0x58] sm:$0xff]
  %v37 = vld [vmem:[%s1 + $0x60] sm:$0xff]
  %v38 = vld [vmem:[%s1 + $0x68] sm:$0xff]
  %v39 = vld [vmem:[%s1 + $0x70] sm:$0xff]
  %v40 = vld [vmem:[%s1 + $0x78] sm:$0xff]
  %v41 = vld [vmem:[%s3] sm:$0xff]
  %v42 = vld [vmem:[%s3 + $0x8] sm:$0xff]
  %44 = vset.pattern.permute.xlu0 0
  %45 = vperm.xlu0 %44, %v41
  %v46 = vpop.permute.xlu0 %45
  %49 = vset.pattern.permute.xlu0 0
  %50 = vperm.xlu0 %49, %v42
  %v51 = vpop.permute.xlu0 %50
  %vm53 = vcmask 130048
  %v55 = vsel %vm53, %v23, 0
  %v58 = vsel %vm53, %v24, 0
  %60 = vmatprep.subr.mxu0 %v26
  %61 = vmatpush1.msra.mxu0 %v25
  %62 = vmatprep.subr.mxu0 %v34
  %63 = vmatpush1.msra.mxu0 %v33
  %64 = vmatprep.subr.mxu0 0.0
  %65 = vmatpush1.msra.mxu0 0.0
  %66 = vmatprep.subr.mxu0 0.0
  %67 = vmatpush1.msra.mxu0 0.0
  %68 = vmatprep.subr.mxu0 0.0
  %69 = vmatpush1.msra.mxu0 0.0
  %70 = vmatprep.subr.mxu0 0.0
  %71 = vmatpush1.msra.mxu0 0.0
  %72 = vmatprep.subr.mxu0 0.0
  %73 = vmatpush1.msra.mxu0 0.0
  %74 = vmatprep.subr.mxu0 0.0
  %75 = vmatpush1.msra.mxu0 0.0
  %76 = vmatprep.subr.mxu0 0.0
  %77 = vmatpush1.msra.mxu0 0.0
  %78 = vmatprep.subr.mxu0 0.0
  %79 = vmatpush1.msra.mxu0 0.0
  %80 = vmatprep.subr.mxu0 0.0
  %81 = vmatpush1.msra.mxu0 0.0
  %82 = vmatprep.subr.mxu0 0.0
  %83 = vmatpush1.msra.mxu0 0.0
  %84 = vmatprep.subr.mxu0 0.0
  %85 = vmatpush1.msra.mxu0 0.0
  %86 = vmatprep.subr.mxu0 0.0
  %87 = vmatpush1.msra.mxu0 0.0
  %88 = vmatprep.subr.mxu0 0.0
  %89 = vmatpush1.msra.mxu0 0.0
  %90 = vmatprep.subr.mxu0 0.0
  %91 = vmatpush1.msra.mxu0 0.0
  %92 = vmatprep.subr.mxu0 0.0
  %93 = vmatpush1.msra.mxu0 0.0
  %94 = vmatprep.subr.mxu0 0.0
  %95 = vmatpush1.msra.mxu0 0.0
  %96 = vmatprep.subr.mxu0 0.0
  %97 = vmatpush1.msra.mxu0 0.0
  %98 = vmatprep.subr.mxu0 0.0
  %99 = vmatpush1.msra.mxu0 0.0
  %100 = vmatprep.subr.mxu0 0.0
  %101 = vmatpush1.msra.mxu0 0.0
  %102 = vmatprep.subr.mxu0 0.0
  %103 = vmatpush1.msra.mxu0 0.0
  %104 = vmatprep.subr.mxu0 0.0
  %105 = vmatpush1.msra.mxu0 0.0
  %106 = vmatprep.subr.mxu0 0.0
  %107 = vmatpush1.msra.mxu0 0.0
  %108 = vmatprep.subr.mxu0 0.0
  %109 = vmatpush1.msra.mxu0 0.0
  %110 = vmatprep.subr.mxu0 0.0
  %111 = vmatpush1.msra.mxu0 0.0
  %112 = vmatprep.subr.mxu0 0.0
  %113 = vmatpush1.msra.mxu0 0.0
  %114 = vmatprep.subr.mxu0 0.0
  %115 = vmatpush1.msra.mxu0 0.0
  %116 = vmatprep.subr.mxu0 0.0
  %117 = vmatpush1.msra.mxu0 0.0
  %118 = vmatprep.subr.mxu0 0.0
  %119 = vmatpush1.msra.mxu0 0.0
  %120 = vmatprep.subr.mxu0 0.0
  %121 = vmatpush1.msra.mxu0 0.0
  %122 = vmatprep.subr.mxu0 0.0
  %123 = vmatpush1.msra.mxu0 0.0
  %124 = vmatprep.mubr.f32.mxu0 0.0
  %125 = vmatmul.mubr.f32.gmra.mrb[0].mxu0 %v55
  %v126 = vpop.f32.mrb[0].mxu0
  %v127 = vadd.f32 %v46, %v126
  %v128 = vpop.f32.mrb[0].mxu0
  %v129 = vadd.f32 %v46, %v128
  %130 = vmatprep.mubr.f32.mxu0 0.0
  %131 = vmatmul.mubr.f32.gmra.mrb[0].mxu0 %v58
  %v132 = vpop.f32.mrb[0].mxu0
  %v133 = vadd.f32 %v51, %v132
  %v134 = vpop.f32.mrb[0].mxu0
  %v135 = vadd.f32 %v51, %v134
  %136 = vdwg.mxu0
  %137 = vmatprep.subr.mxu0 %v28
  %138 = vmatpush1.msra.mxu0 %v27
  %139 = vmatprep.subr.mxu0 %v36
  %140 = vmatpush1.msra.mxu0 %v35
  %141 = vmatprep.subr.mxu0 0.0
  %142 = vmatpush1.msra.mxu0 0.0
  %143 = vmatprep.subr.mxu0 0.0
  %144 = vmatpush1.msra.mxu0 0.0
  %145 = vmatprep.subr.mxu0 0.0
  %146 = vmatpush1.msra.mxu0 0.0
  %147 = vmatprep.subr.mxu0 0.0
  %148 = vmatpush1.msra.mxu0 0.0
  %149 = vmatprep.subr.mxu0 0.0
  %150 = vmatpush1.msra.mxu0 0.0
  %151 = vmatprep.subr.mxu0 0.0
  %152 = vmatpush1.msra.mxu0 0.0
  %153 = vmatprep.subr.mxu0 0.0
  %154 = vmatpush1.msra.mxu0 0.0
  %155 = vmatprep.subr.mxu0 0.0
  %156 = vmatpush1.msra.mxu0 0.0
  %157 = vmatprep.subr.mxu0 0.0
  %158 = vmatpush1.msra.mxu0 0.0
  %159 = vmatprep.subr.mxu0 0.0
  %160 = vmatpush1.msra.mxu0 0.0
  %161 = vmatprep.subr.mxu0 0.0
  %162 = vmatpush1.msra.mxu0 0.0
  %163 = vmatprep.subr.mxu0 0.0
  %164 = vmatpush1.msra.mxu0 0.0
  %165 = vmatprep.subr.mxu0 0.0
  %166 = vmatpush1.msra.mxu0 0.0
  %167 = vmatprep.subr.mxu0 0.0
  %168 = vmatpush1.msra.mxu0 0.0
  %169 = vmatprep.subr.mxu0 0.0
  %170 = vmatpush1.msra.mxu0 0.0
  %171 = vmatprep.subr.mxu0 0.0
  %172 = vmatpush1.msra.mxu0 0.0
  %173 = vmatprep.subr.mxu0 0.0
  %174 = vmatpush1.msra.mxu0 0.0
  %175 = vmatprep.subr.mxu0 0.0
  %176 = vmatpush1.msra.mxu0 0.0
  %177 = vmatprep.subr.mxu0 0.0
  %178 = vmatpush1.msra.mxu0 0.0
  %179 = vmatprep.subr.mxu0 0.0
  %180 = vmatpush1.msra.mxu0 0.0
  %181 = vmatprep.subr.mxu0 0.0
  %182 = vmatpush1.msra.mxu0 0.0
  %183 = vmatprep.subr.mxu0 0.0
  %184 = vmatpush1.msra.mxu0 0.0
  %185 = vmatprep.subr.mxu0 0.0
  %186 = vmatpush1.msra.mxu0 0.0
  %187 = vmatprep.subr.mxu0 0.0
  %188 = vmatpush1.msra.mxu0 0.0
  %189 = vmatprep.subr.mxu0 0.0
  %190 = vmatpush1.msra.mxu0 0.0
  %191 = vmatprep.subr.mxu0 0.0
  %192 = vmatpush1.msra.mxu0 0.0
  %193 = vmatprep.subr.mxu0 0.0
  %194 = vmatpush1.msra.mxu0 0.0
  %195 = vmatprep.subr.mxu0 0.0
  %196 = vmatpush1.msra.mxu0 0.0
  %197 = vmatprep.subr.mxu0 0.0
  %198 = vmatpush1.msra.mxu0 0.0
  %199 = vmatprep.subr.mxu0 0.0
  %200 = vmatpush1.msra.mxu0 0.0
  %201 = vmatprep.mubr.f32.mxu0 0.0
  %202 = vmatmul.mubr.f32.gmra.mrb[0].mxu0 %v55
  %v203 = vpop.f32.mrb[0].mxu0
  %v204 = vadd.f32 %v46, %v203
  %v205 = vpop.f32.mrb[0].mxu0
  %v206 = vadd.f32 %v46, %v205
  %207 = vmatprep.mubr.f32.mxu0 0.0
  %208 = vmatmul.mubr.f32.gmra.mrb[0].mxu0 %v58
  %v209 = vpop.f32.mrb[0].mxu0
  %v210 = vadd.f32 %v51, %v209
  %v211 = vpop.f32.mrb[0].mxu0
  %v212 = vadd.f32 %v51, %v211
  %213 = vdwg.mxu0
  %214 = vmatprep.subr.mxu0 %v30
  %215 = vmatpush1.msra.mxu0 %v29
  %216 = vmatprep.subr.mxu0 %v38
  %217 = vmatpush1.msra.mxu0 %v37
  %218 = vmatprep.subr.mxu0 0.0
  %219 = vmatpush1.msra.mxu0 0.0
  %220 = vmatprep.subr.mxu0 0.0
  %221 = vmatpush1.msra.mxu0 0.0
  %222 = vmatprep.subr.mxu0 0.0
  %223 = vmatpush1.msra.mxu0 0.0
  %224 = vmatprep.subr.mxu0 0.0
  %225 = vmatpush1.msra.mxu0 0.0
  %226 = vmatprep.subr.mxu0 0.0
  %227 = vmatpush1.msra.mxu0 0.0
  %228 = vmatprep.subr.mxu0 0.0
  %229 = vmatpush1.msra.mxu0 0.0
  %230 = vmatprep.subr.mxu0 0.0
  %231 = vmatpush1.msra.mxu0 0.0
  %232 = vmatprep.subr.mxu0 0.0
  %233 = vmatpush1.msra.mxu0 0.0
  %234 = vmatprep.subr.mxu0 0.0
  %235 = vmatpush1.msra.mxu0 0.0
  %236 = vmatprep.subr.mxu0 0.0
  %237 = vmatpush1.msra.mxu0 0.0
  %238 = vmatprep.subr.mxu0 0.0
  %239 = vmatpush1.msra.mxu0 0.0
  %240 = vmatprep.subr.mxu0 0.0
  %241 = vmatpush1.msra.mxu0 0.0
  %242 = vmatprep.subr.mxu0 0.0
  %243 = vmatpush1.msra.mxu0 0.0
  %244 = vmatprep.subr.mxu0 0.0
  %245 = vmatpush1.msra.mxu0 0.0
  %246 = vmatprep.subr.mxu0 0.0
  %247 = vmatpush1.msra.mxu0 0.0
  %248 = vmatprep.subr.mxu0 0.0
  %249 = vmatpush1.msra.mxu0 0.0
  %250 = vmatprep.subr.mxu0 0.0
  %251 = vmatpush1.msra.mxu0 0.0
  %252 = vmatprep.subr.mxu0 0.0
  %253 = vmatpush1.msra.mxu0 0.0
  %254 = vmatprep.subr.mxu0 0.0
  %255 = vmatpush1.msra.mxu0 0.0
  %256 = vmatprep.subr.mxu0 0.0
  %257 = vmatpush1.msra.mxu0 0.0
  %258 = vmatprep.subr.mxu0 0.0
  %259 = vmatpush1.msra.mxu0 0.0
  %260 = vmatprep.subr.mxu0 0.0
  %261 = vmatpush1.msra.mxu0 0.0
  %262 = vmatprep.subr.mxu0 0.0
  %263 = vmatpush1.msra.mxu0 0.0
  %264 = vmatprep.subr.mxu0 0.0
  %265 = vmatpush1.msra.mxu0 0.0
  %266 = vmatprep.subr.mxu0 0.0
  %267 = vmatpush1.msra.mxu0 0.0
  %268 = vmatprep.subr.mxu0 0.0
  %269 = vmatpush1.msra.mxu0 0.0
  %270 = vmatprep.subr.mxu0 0.0
  %271 = vmatpush1.msra.mxu0 0.0
  %272 = vmatprep.subr.mxu0 0.0
  %273 = vmatpush1.msra.mxu0 0.0
  %274 = vmatprep.subr.mxu0 0.0
  %275 = vmatpush1.msra.mxu0 0.0
  %276 = vmatprep.subr.mxu0 0.0
  %277 = vmatpush1.msra.mxu0 0.0
  %278 = vmatprep.mubr.f32.mxu0 0.0
  %279 = vmatmul.mubr.f32.gmra.mrb[0].mxu0 %v55
  %v280 = vpop.f32.mrb[0].mxu0
  %v281 = vadd.f32 %v46, %v280
  %v282 = vpop.f32.mrb[0].mxu0
  %v283 = vadd.f32 %v46, %v282
  %284 = vmatprep.mubr.f32.mxu0 0.0
  %285 = vmatmul.mubr.f32.gmra.mrb[0].mxu0 %v58
  %v286 = vpop.f32.mrb[0].mxu0
  %v287 = vadd.f32 %v51, %v286
  %v288 = vpop.f32.mrb[0].mxu0
  %v289 = vadd.f32 %v51, %v288
  %290 = vdwg.mxu0
  %291 = vmatprep.subr.mxu0 %v32
  %292 = vmatpush1.msra.mxu0 %v31
  %293 = vmatprep.subr.mxu0 %v40
  %294 = vmatpush1.msra.mxu0 %v39
  %295 = vmatprep.subr.mxu0 0.0
  %296 = vmatpush1.msra.mxu0 0.0
  %297 = vmatprep.subr.mxu0 0.0
  %298 = vmatpush1.msra.mxu0 0.0
  %299 = vmatprep.subr.mxu0 0.0
  %300 = vmatpush1.msra.mxu0 0.0
  %301 = vmatprep.subr.mxu0 0.0
  %302 = vmatpush1.msra.mxu0 0.0
  %303 = vmatprep.subr.mxu0 0.0
  %304 = vmatpush1.msra.mxu0 0.0
  %305 = vmatprep.subr.mxu0 0.0
  %306 = vmatpush1.msra.mxu0 0.0
  %307 = vmatprep.subr.mxu0 0.0
  %308 = vmatpush1.msra.mxu0 0.0
  %309 = vmatprep.subr.mxu0 0.0
  %310 = vmatpush1.msra.mxu0 0.0
  %311 = vmatprep.subr.mxu0 0.0
  %312 = vmatpush1.msra.mxu0 0.0
  %313 = vmatprep.subr.mxu0 0.0
  %314 = vmatpush1.msra.mxu0 0.0
  %315 = vmatprep.subr.mxu0 0.0
  %316 = vmatpush1.msra.mxu0 0.0
  %317 = vmatprep.subr.mxu0 0.0
  %318 = vmatpush1.msra.mxu0 0.0
  %319 = vmatprep.subr.mxu0 0.0
  %320 = vmatpush1.msra.mxu0 0.0
  %321 = vmatprep.subr.mxu0 0.0
  %322 = vmatpush1.msra.mxu0 0.0
  %323 = vmatprep.subr.mxu0 0.0
  %324 = vmatpush1.msra.mxu0 0.0
  %325 = vmatprep.subr.mxu0 0.0
  %326 = vmatpush1.msra.mxu0 0.0
  %327 = vmatprep.subr.mxu0 0.0
  %328 = vmatpush1.msra.mxu0 0.0
  %329 = vmatprep.subr.mxu0 0.0
  %330 = vmatpush1.msra.mxu0 0.0
  %331 = vmatprep.subr.mxu0 0.0
  %332 = vmatpush1.msra.mxu0 0.0
  %333 = vmatprep.subr.mxu0 0.0
  %334 = vmatpush1.msra.mxu0 0.0
  %335 = vmatprep.subr.mxu0 0.0
  %336 = vmatpush1.msra.mxu0 0.0
  %337 = vmatprep.subr.mxu0 0.0
  %338 = vmatpush1.msra.mxu0 0.0
  %339 = vmatprep.subr.mxu0 0.0
  %340 = vmatpush1.msra.mxu0 0.0
  %341 = vmatprep.subr.mxu0 0.0
  %342 = vmatpush1.msra.mxu0 0.0
  %343 = vmatprep.subr.mxu0 0.0
  %344 = vmatpush1.msra.mxu0 0.0
  %345 = vmatprep.subr.mxu0 0.0
  %346 = vmatpush1.msra.mxu0 0.0
  %347 = vmatprep.subr.mxu0 0.0
  %348 = vmatpush1.msra.mxu0 0.0
  %349 = vmatprep.subr.mxu0 0.0
  %350 = vmatpush1.msra.mxu0 0.0
  %351 = vmatprep.subr.mxu0 0.0
  %352 = vmatpush1.msra.mxu0 0.0
  %353 = vmatprep.subr.mxu0 0.0
  %354 = vmatpush1.msra.mxu0 0.0
  %355 = vmatprep.mubr.f32.mxu0 0.0
  %356 = vmatmul.mubr.f32.gmra.mrb[0].mxu0 %v55
  %v357 = vpop.f32.mrb[0].mxu0
  %v358 = vadd.f32 %v46, %v357
  %v359 = vpop.f32.mrb[0].mxu0
  %v360 = vadd.f32 %v46, %v359
  %361 = vmatprep.mubr.f32.mxu0 0.0
  %362 = vmatmul.mubr.f32.gmra.mrb[0].mxu0 %v58
  %v363 = vpop.f32.mrb[0].mxu0
  %v364 = vadd.f32 %v51, %v363
  %v365 = vpop.f32.mrb[0].mxu0
  %v366 = vadd.f32 %v51, %v365
  %367 = vdwg.mxu0
  %v368 = vld [vmem:[%s0] sm:$0xff]
  %v369 = vld [vmem:[%s0 + $0x8] sm:$0xff]
  %v370 = vld [vmem:[%s0 + $0x10] sm:$0xff]
  %v371 = vld [vmem:[%s0 + $0x18] sm:$0xff]
  %v372 = vld [vmem:[%s0 + $0x20] sm:$0xff]
  %v373 = vld [vmem:[%s0 + $0x28] sm:$0xff]
  %v374 = vld [vmem:[%s0 + $0x30] sm:$0xff]
  %v375 = vld [vmem:[%s0 + $0x38] sm:$0xff]
  %v376 = vld [vmem:[%s0 + $0x40] sm:$0xff]
  %v377 = vld [vmem:[%s0 + $0x48] sm:$0xff]
  %v378 = vld [vmem:[%s0 + $0x50] sm:$0xff]
  %v379 = vld [vmem:[%s0 + $0x58] sm:$0xff]
  %v380 = vld [vmem:[%s0 + $0x60] sm:$0xff]
  %v381 = vld [vmem:[%s0 + $0x68] sm:$0xff]
  %v382 = vld [vmem:[%s0 + $0x70] sm:$0xff]
  %v383 = vld [vmem:[%s0 + $0x78] sm:$0xff]
  %v384 = vadd.f32 %v368, %v127
  %v385 = vadd.f32 %v369, %v129
  %v386 = vadd.f32 %v370, %v204
  %v387 = vadd.f32 %v371, %v206
  %v388 = vadd.f32 %v372, %v281
  %v389 = vadd.f32 %v373, %v283
  %v390 = vadd.f32 %v374, %v358
  %v391 = vadd.f32 %v375, %v360
  %v392 = vadd.f32 %v376, %v133
  %v393 = vadd.f32 %v377, %v135
  %v394 = vadd.f32 %v378, %v210
  %v395 = vadd.f32 %v379, %v212
  %v396 = vadd.f32 %v380, %v287
  %v397 = vadd.f32 %v381, %v289
  %v398 = vadd.f32 %v382, %v364
  %v399 = vadd.f32 %v383, %v366
  %v400 = vadd.f32 %v384, %v385
  %v401 = vadd.f32 %v400, %v386
  %v402 = vadd.f32 %v401, %v387
  %v403 = vadd.f32 %v402, %v388
  %v404 = vadd.f32 %v403, %v389
  %v405 = vadd.f32 %v404, %v390
  %v406 = vadd.f32 %v405, %v391
  %407 = vadd.xlane.f32.xlu0 %v406
  %v408 = vpop.xlane.xlu0 %407
  %v409 = vadd.f32 %v392, %v393
  %v410 = vadd.f32 %v409, %v394
  %v411 = vadd.f32 %v410, %v395
  %v412 = vadd.f32 %v411, %v396
  %v413 = vadd.f32 %v412, %v397
  %v414 = vadd.f32 %v413, %v398
  %v415 = vadd.f32 %v414, %v399
  %416 = vadd.xlane.f32.xlu0 %v415
  %v417 = vpop.xlane.xlu0 %416
  %v418 = vmul.f32 %v408, 0.0009765625
  %v419 = vmul.f32 %v417, 0.0009765625
  %v420 = vmul.f32 %v384, %v384
  %v421 = vmul.f32 %v385, %v385
  %v422 = vmul.f32 %v386, %v386
  %v423 = vmul.f32 %v387, %v387
  %v424 = vmul.f32 %v388, %v388
  %v425 = vmul.f32 %v389, %v389
  %v426 = vmul.f32 %v390, %v390
  %v427 = vmul.f32 %v391, %v391
  %v428 = vmul.f32 %v392, %v392
  %v429 = vmul.f32 %v393, %v393
  %v430 = vmul.f32 %v394, %v394
  %v431 = vmul.f32 %v395, %v395
  %v432 = vmul.f32 %v396, %v396
  %v433 = vmul.f32 %v397, %v397
  %v434 = vmul.f32 %v398, %v398
  %v435 = vmul.f32 %v399, %v399
  %v436 = vadd.f32 %v420, %v421
  %v437 = vadd.f32 %v436, %v422
  %v438 = vadd.f32 %v437, %v423
  %v439 = vadd.f32 %v438, %v424
  %v440 = vadd.f32 %v439, %v425
  %v441 = vadd.f32 %v440, %v426
  %v442 = vadd.f32 %v441, %v427
  %443 = vadd.xlane.f32.xlu0 %v442
  %v444 = vpop.xlane.xlu0 %443
  %v445 = vadd.f32 %v428, %v429
  %v446 = vadd.f32 %v445, %v430
  %v447 = vadd.f32 %v446, %v431
  %v448 = vadd.f32 %v447, %v432
  %v449 = vadd.f32 %v448, %v433
  %v450 = vadd.f32 %v449, %v434
  %v451 = vadd.f32 %v450, %v435
  %452 = vadd.xlane.f32.xlu0 %v451
  %v453 = vpop.xlane.xlu0 %452
  %v454 = vmul.f32 %v444, 0.0009765625
  %v455 = vmul.f32 %v453, 0.0009765625
  %v456 = vmul.f32 %v418, %v418
  %v457 = vmul.f32 %v419, %v419
  %v458 = vsub.f32 %v454, %v456
  %v459 = vsub.f32 %v455, %v457
  %v460 = vmax.f32 %v458, 0.0
  %v461 = vmax.f32 %v459, 0.0
  %v462 = vadd.f32 %v460, 1e-05
  %v463 = vadd.f32 %v461, 1e-05
  %v464 = vrsqrt.pop %v462
  %v465 = vrsqrt.pop %v463
  %v466 = vld [vmem:[%s4] sm:$0xff]
  %v467 = vld [vmem:[%s4 + $0x8] sm:$0xff]
  %v468 = vmul.f32 %v466, %v464
  %v469 = vmul.f32 %v467, %v465
  %v470 = vld [vmem:[%s5] sm:$0xff]
  %v471 = vld [vmem:[%s5 + $0x8] sm:$0xff]
  %v472 = vmul.f32 %v418, %v468
  %v473 = vmul.f32 %v419, %v469
  %v474 = vsub.f32 %v470, %v472
  %v475 = vsub.f32 %v471, %v473
  %477 = vset.pattern.permute.xlu0 0
  %478 = vperm.xlu0 %477, %v468
  %v479 = vpop.permute.xlu0 %478
  %482 = vset.pattern.permute.xlu0 0
  %483 = vperm.xlu0 %482, %v469
  %v484 = vpop.permute.xlu0 %483
  %v486 = vmul.f32 %v384, %v479
  %v487 = vmul.f32 %v385, %v479
  %v488 = vmul.f32 %v386, %v479
  %v489 = vmul.f32 %v387, %v479
  %v490 = vmul.f32 %v388, %v479
  %v491 = vmul.f32 %v389, %v479
  %v492 = vmul.f32 %v390, %v479
  %v493 = vmul.f32 %v391, %v479
  %v494 = vmul.f32 %v392, %v484
  %v495 = vmul.f32 %v393, %v484
  %v496 = vmul.f32 %v394, %v484
  %v497 = vmul.f32 %v395, %v484
  %v498 = vmul.f32 %v396, %v484
  %v499 = vmul.f32 %v397, %v484
  %v500 = vmul.f32 %v398, %v484
  %v501 = vmul.f32 %v399, %v484
  %503 = vset.pattern.permute.xlu0 0
  %504 = vperm.xlu0 %503, %v474
  %v505 = vpop.permute.xlu0 %504
  %508 = vset.pattern.permute.xlu0 0
  %509 = vperm.xlu0 %508, %v475
  %v510 = vpop.permute.xlu0 %509
  %v512 = vadd.f32 %v486, %v505
  %v513 = vadd.f32 %v487, %v505
  %v514 = vadd.f32 %v488, %v505
  %v515 = vadd.f32 %v489, %v505
  %v516 = vadd.f32 %v490, %v505
  %v517 = vadd.f32 %v491, %v505
  %v518 = vadd.f32 %v492, %v505
  %v519 = vadd.f32 %v493, %v505
  %v520 = vadd.f32 %v494, %v510
  %v521 = vadd.f32 %v495, %v510
  %v522 = vadd.f32 %v496, %v510
  %v523 = vadd.f32 %v497, %v510
  %v524 = vadd.f32 %v498, %v510
  %v525 = vadd.f32 %v499, %v510
  %v526 = vadd.f32 %v500, %v510
  %v527 = vadd.f32 %v501, %v510
  %528 = vst [vmem:[%s6] sm:$0xff] %v512
  %529 = vst [vmem:[%s6 + $0x8] sm:$0xff] %v513
  %530 = vst [vmem:[%s6 + $0x10] sm:$0xff] %v514
  %531 = vst [vmem:[%s6 + $0x18] sm:$0xff] %v515
  %532 = vst [vmem:[%s6 + $0x20] sm:$0xff] %v516
  %533 = vst [vmem:[%s6 + $0x28] sm:$0xff] %v517
  %534 = vst [vmem:[%s6 + $0x30] sm:$0xff] %v518
  %535 = vst [vmem:[%s6 + $0x38] sm:$0xff] %v519
  %536 = vst [vmem:[%s6 + $0x40] sm:$0xff] %v520
  %537 = vst [vmem:[%s6 + $0x48] sm:$0xff] %v521
  %538 = vst [vmem:[%s6 + $0x50] sm:$0xff] %v522
  %539 = vst [vmem:[%s6 + $0x58] sm:$0xff] %v523
  %540 = vst [vmem:[%s6 + $0x60] sm:$0xff] %v524
  %541 = vst [vmem:[%s6 + $0x68] sm:$0xff] %v525
  %542 = vst [vmem:[%s6 + $0x70] sm:$0xff] %v526
  %543 = vst [vmem:[%s6 + $0x78] sm:$0xff] %v527
  // Predicated region
  $region26: #{simple_block2d_forward.18} parent=0 // pred_check
    _
  $region27: #{simple_block2d_forward.18} parent=0 // pred_check_branch
    %545 = sbr.rel (0) target = $region29
  $region28: #{simple_block2d_forward.18} parent=0 // pred_region
    _
  $region29: #{simple_block2d_forward.18} parent=0 // pred_fallthru
    _
  // Predicated region
  $region30: #{simple_block2d_forward.18} parent=0 // pred_check
    _
  $region31: #{simple_block2d_forward.18} parent=0 // pred_check_branch
    %547 = sbr.rel (0) target = $region33
  $region32: #{simple_block2d_forward.18} parent=0 // pred_region
    _
  $region33: #{simple_block2d_forward.18} parent=0 // pred_fallthru
    _

// kernel: simple_block2d_forward.19
$region0: #{simple_block2d_forward.19}
  #allocation0 [shape = 'u32[]', space=smem, size = 0x4, offset = 0x4, fixed_abs, tag = 'smem constant byte address 0x4 - core index']
  #allocation1 [shape = 'u32[144,128]{1,0:T(1,128)}', space=vmem, size = 0x12000, scoped, tag = 'internal scratch']
  #allocation2 [shape = 'f32[1,1]{1,0:T(1,128)S(1)}', space=vmem, size = 0x200, scoped, tag = 'scoped memory for simple_block2d_forward.19']
  %s0 = inlined_call_operand.vmem [shape: f32[16,1024], index: 0, kind: input, shape index: {}]
  %s1 = inlined_call_operand.vmem [shape: f32[128,16], index: 1, kind: input, shape index: {}]
  %s2 = inlined_call_operand.vmem [shape: f32[128,1], index: 2, kind: input, shape index: {}]
  %s3 = inlined_call_operand.vmem [shape: f32[1,128], index: 3, kind: input, shape index: {}]
  %s4 = inlined_call_operand.<no memory space> [shape: f32[1,1], index: 4, kind: input, shape index: {}]
  %s5 = inlined_call_operand.vmem [shape: f32[1,1024], index: 5, kind: output, shape index: {}]
  %s6 = sld [smem:[#allocation0]]
  $region76: #{simple_block2d_forward.19} parent=0
    _
  %s8 = ssub.s32 1, %s6
  %s9 = scalar_select 0, %s8, %s6
  %v10 = vstv %s4
  %11 = vst [vmem:[#allocation2] sm:$0x1] %v10
  $region1: #{simple_block2d_forward.19} parent=0
    #allocation3 [shape = 'u8[32768]{0}', space=vmem, size = 0x8000, scoped, tag = 'input window, operand 0']
    loop: start=0, step=1, limit=6
    $region2: #{simple_block2d_forward.19} parent=1 // loop_pre_header
      _
    $region3: #{simple_block2d_forward.19} parent=1 // loop_header
      %s13 = sphi 0, %s17
      %p14 = scmp.ge.s32.totalorder %s13, 6
      %s23 = sphi 0, %s25
      %s26 = sphi 0, %s23
      %s27 = sphi 0, %s26
      %s43 = sphi 0, %s27
      %s47 = sphi 0, %s47
      %s49 = sphi 0, %s47
      %s50 = sphi 0, %s49
      %s64 = sphi 0, %s50
      %s68 = sphi 0, %s68
      %s70 = sphi 0, %s68
      %s71 = sphi 0, %s70
      %s85 = sphi 0, %s71
      %s89 = sphi 0, %s89
      %s91 = sphi 0, %s89
      %s92 = sphi 0, %s91
      %s106 = sphi 0, %s92
      %s110 = sphi 0, %s110
      %s112 = sphi 0, %s110
      %s113 = sphi 0, %s112
      %s127 = sphi 0, %s113
      %s133 = sphi 0, %s135
      %s136 = sphi 0, %s133
      %s137 = sphi 0, %s136
      %s153 = sphi 0, %s137
    $region4: #{simple_block2d_forward.19} parent=1 // loop_header_branch
      %16 = sbr.rel (%p14) target = $region8
    $region5: #{simple_block2d_forward.19} parent=1 // loop_body
      %s18 = ssub.s32 %s13, 1
      %s19 = ssub.s32 %s13, 2
      %s20 = sadd.s32 %s13, 1
      %s21 = ssub.s32 %s13, %s20
      %p22 = scmp.eq.s32.totalorder %s21, 0
      %s24 = sadd.s32 %s23, 1
      %s25 = scalar_select %p22, %s23, %s24
      %p28 = pneg %p22
      %p29 = scmp.eq.s32.totalorder %s13, 3
      %p30 = por %p28, %p29
      %p31 = scmp.ne.s32.totalorder %s23, %s26
      %p32 = scmp.eq.s32.totalorder %s13, 0
      %p33 = por %p31, %p32
      %p34 = scmp.ne.s32.totalorder %s23, %s26
      %p35 = scmp.eq.s32.totalorder %s18, 3
      %p36 = por %p34, %p35
      %p37 = scmp.ne.s32.totalorder %s26, %s27
      %p38 = scmp.eq.s32.totalorder %s18, 0
      %p39 = por %p37, %p38
      %p40 = scmp.ne.s32.totalorder %s26, %s27
      %p41 = scmp.eq.s32.totalorder %s19, 3
      %p42 = por %p40, %p41
      %p44 = scmp.ne.s32.totalorder %s27, %s43
      %p45 = scmp.eq.s32.totalorder %s19, 0
      %p46 = por %p44, %p45
      %s48 = sadd.s32 %s47, 1
      %p51 = scmp.eq.s32.totalorder %s13, 3
      %p52 = scmp.ne.s32.totalorder %s47, %s49
      %p53 = scmp.eq.s32.totalorder %s13, 0
      %p54 = por %p52, %p53
      %p55 = scmp.ne.s32.totalorder %s47, %s49
      %p56 = scmp.eq.s32.totalorder %s18, 3
      %p57 = por %p55, %p56
      %p58 = scmp.ne.s32.totalorder %s49, %s50
      %p59 = scmp.eq.s32.totalorder %s18, 0
      %p60 = por %p58, %p59
      %p61 = scmp.ne.s32.totalorder %s49, %s50
      %p62 = scmp.eq.s32.totalorder %s19, 3
      %p63 = por %p61, %p62
      %p65 = scmp.ne.s32.totalorder %s50, %s64
      %p66 = scmp.eq.s32.totalorder %s19, 0
      %p67 = por %p65, %p66
      %s69 = sadd.s32 %s68, 1
      %p72 = scmp.eq.s32.totalorder %s13, 3
      %p73 = scmp.ne.s32.totalorder %s68, %s70
      %p74 = scmp.eq.s32.totalorder %s13, 0
      %p75 = por %p73, %p74
      %p76 = scmp.ne.s32.totalorder %s68, %s70
      %p77 = scmp.eq.s32.totalorder %s18, 3
      %p78 = por %p76, %p77
      %p79 = scmp.ne.s32.totalorder %s70, %s71
      %p80 = scmp.eq.s32.totalorder %s18, 0
      %p81 = por %p79, %p80
      %p82 = scmp.ne.s32.totalorder %s70, %s71
      %p83 = scmp.eq.s32.totalorder %s19, 3
      %p84 = por %p82, %p83
      %p86 = scmp.ne.s32.totalorder %s71, %s85
      %p87 = scmp.eq.s32.totalorder %s19, 0
      %p88 = por %p86, %p87
      %s90 = sadd.s32 %s89, 1
      %p93 = scmp.eq.s32.totalorder %s13, 3
      %p94 = scmp.ne.s32.totalorder %s89, %s91
      %p95 = scmp.eq.s32.totalorder %s13, 0
      %p96 = por %p94, %p95
      %p97 = scmp.ne.s32.totalorder %s89, %s91
      %p98 = scmp.eq.s32.totalorder %s18, 3
      %p99 = por %p97, %p98
      %p100 = scmp.ne.s32.totalorder %s91, %s92
      %p101 = scmp.eq.s32.totalorder %s18, 0
      %p102 = por %p100, %p101
      %p103 = scmp.ne.s32.totalorder %s91, %s92
      %p104 = scmp.eq.s32.totalorder %s19, 3
      %p105 = por %p103, %p104
      %p107 = scmp.ne.s32.totalorder %s92, %s106
      %p108 = scmp.eq.s32.totalorder %s19, 0
      %p109 = por %p107, %p108
      %s111 = sadd.s32 %s110, 1
      %p114 = scmp.eq.s32.totalorder %s13, 3
      %p115 = scmp.ne.s32.totalorder %s110, %s112
      %p116 = scmp.eq.s32.totalorder %s13, 0
      %p117 = por %p115, %p116
      %p118 = scmp.ne.s32.totalorder %s110, %s112
      %p119 = scmp.eq.s32.totalorder %s18, 3
      %p120 = por %p118, %p119
      %p121 = scmp.ne.s32.totalorder %s112, %s113
      %p122 = scmp.eq.s32.totalorder %s18, 0
      %p123 = por %p121, %p122
      %p124 = scmp.ne.s32.totalorder %s112, %s113
      %p125 = scmp.eq.s32.totalorder %s19, 3
      %p126 = por %p124, %p125
      %p128 = scmp.ne.s32.totalorder %s113, %s127
      %p129 = scmp.eq.s32.totalorder %s19, 0
      %p130 = por %p128, %p129
      %s131 = ssub.s32 %s13, %s20
      %p132 = scmp.eq.s32.totalorder %s131, 0
      %s134 = sadd.s32 %s133, 1
      %s135 = scalar_select %p132, %s133, %s134
      %p138 = pneg %p132
      %p139 = scmp.eq.s32.totalorder %s13, 3
      %p140 = por %p138, %p139
      %p141 = scmp.ne.s32.totalorder %s133, %s136
      %p142 = scmp.eq.s32.totalorder %s13, 0
      %p143 = por %p141, %p142
      %p144 = scmp.ne.s32.totalorder %s133, %s136
      %p145 = scmp.eq.s32.totalorder %s18, 3
      %p146 = por %p144, %p145
      %p147 = scmp.ne.s32.totalorder %s136, %s137
      %p148 = scmp.eq.s32.totalorder %s18, 0
      %p149 = por %p147, %p148
      %p150 = scmp.ne.s32.totalorder %s136, %s137
      %p151 = scmp.eq.s32.totalorder %s19, 3
      %p152 = por %p150, %p151
      %p154 = scmp.ne.s32.totalorder %s137, %s153
      %p155 = scmp.eq.s32.totalorder %s19, 0
      %p156 = por %p154, %p155
      %p157 = scmp.le.s32.totalorder 1, %s13
      %p158 = scmp.lt.s32.totalorder %s13, 5
      %p159 = pnand %p157, %p158
      %p160 = pneg %p159
      // Predicated region
      $region9: #{simple_block2d_forward.19} parent=5 // pred_check
        _
      $region10: #{simple_block2d_forward.19} parent=5 // pred_check_branch
        %162 = sbr.rel (%p159) target = $region12
      $region11: #{simple_block2d_forward.19} parent=5 // pred_region
        %s163 = ssub.s32 %s13, 1
        // Predicated region
        $region13: #{simple_block2d_forward.19} parent=11 // pred_check
          %p164 = pneg %p60
        $region14: #{simple_block2d_forward.19} parent=11 // pred_check_branch
          %166 = sbr.rel (%p164) target = $region16
        $region15: #{simple_block2d_forward.19} parent=11 // pred_region
          _
        $region16: #{simple_block2d_forward.19} parent=11 // pred_fallthru
          _
        // Predicated region
        $region17: #{simple_block2d_forward.19} parent=11 // pred_check
          %p167 = pneg %p81
        $region18: #{simple_block2d_forward.19} parent=11 // pred_check_branch
          %169 = sbr.rel (%p167) target = $region20
        $region19: #{simple_block2d_forward.19} parent=11 // pred_region
          _
        $region20: #{simple_block2d_forward.19} parent=11 // pred_fallthru
          _
        // Predicated region
        $region21: #{simple_block2d_forward.19} parent=11 // pred_check
          %p170 = pneg %p102
        $region22: #{simple_block2d_forward.19} parent=11 // pred_check_branch
          %172 = sbr.rel (%p170) target = $region24
        $region23: #{simple_block2d_forward.19} parent=11 // pred_region
          _
        $region24: #{simple_block2d_forward.19} parent=11 // pred_fallthru
          _
        // Predicated region
        $region25: #{simple_block2d_forward.19} parent=11 // pred_check
          %p173 = pneg %p123
        $region26: #{simple_block2d_forward.19} parent=11 // pred_check_branch
          %175 = sbr.rel (%p173) target = $region28
        $region27: #{simple_block2d_forward.19} parent=11 // pred_region
          _
        $region28: #{simple_block2d_forward.19} parent=11 // pred_fallthru
          _
      $region12: #{simple_block2d_forward.19} parent=5 // pred_fallthru
        _
      %p176 = scmp.lt.s32.totalorder %s13, 4
      // Predicated region
      $region29: #{simple_block2d_forward.19} parent=5 // pred_check
        %p177 = pneg %p176
      $region30: #{simple_block2d_forward.19} parent=5 // pred_check_branch
        %179 = sbr.rel (%p177) target = $region32
      $region31: #{simple_block2d_forward.19} parent=5 // pred_region
        // Predicated region
        $region33: #{simple_block2d_forward.19} parent=31 // pred_check
          %p180 = pneg %p33
        $region34: #{simple_block2d_forward.19} parent=31 // pred_check_branch
          %182 = sbr.rel (%p180) target = $region36
        $region35: #{simple_block2d_forward.19} parent=31 // pred_region
          %s183 = sand.u32 %s23, 1
          %s184 = sand.u32 %s23, 1
          %s185 = smul.addr %s184, 32
          %s186 = scalar_lea.vmem [#allocation3], %s185
          %s187 = smul.u32 2, %s13
          %s188 = smul.addr %s187, 8
          %s189 = scalar_lea.vmem %s0, %s188
          // Predicated region
          $region37: #{simple_block2d_forward.19} parent=35 // pred_check
            _
          $region38: #{simple_block2d_forward.19} parent=35 // pred_check_branch
            %191 = sbr.rel (0) target = $region40
          $region39: #{simple_block2d_forward.19} parent=35 // pred_region
            // Predicated region
            $region41: #{simple_block2d_forward.19} parent=39 // pred_check
              _
            $region42: #{simple_block2d_forward.19} parent=39 // pred_check_branch
              %193 = sbr.rel (0) target = $region44
            $region43: #{simple_block2d_forward.19} parent=39 // pred_region
              loop: start=0, step=1, limit=1
              $region45: #{simple_block2d_forward.19} parent=43 // loop_pre_header
                _
              $region46: #{simple_block2d_forward.19} parent=43 // loop_header
                %s195 = sphi 0, %s199
                %p196 = scmp.ge.s32.totalorder %s195, 1
                %s200 = sphi %s189, %s189
                %s201 = sphi %s186, %s186
              $region47: #{simple_block2d_forward.19} parent=43 // loop_header_branch
                %198 = sbr.rel (%p196) target = $region51
              $region48: #{simple_block2d_forward.19} parent=43 // loop_body
                %v202 = vld [vmem:[%s200] sm:$0xff]
                %203 = vst [vmem:[%s201] sm:$0xff] %v202
                %v204 = vld [vmem:[%s200 + $0x8] sm:$0xff]
                %205 = vst [vmem:[%s201 + $0x8] sm:$0xff] %v204
                %v206 = vld [vmem:[%s200 + $0x40] sm:$0xff]
                %207 = vst [vmem:[%s201 + $0x10] sm:$0xff] %v206
                %v208 = vld [vmem:[%s200 + $0x48] sm:$0xff]
                %209 = vst [vmem:[%s201 + $0x18] sm:$0xff] %v208
              $region49: #{simple_block2d_forward.19} parent=43 // loop_footer
                %s199 = sadd.s32 1, %s195
              $region50: #{simple_block2d_forward.19} parent=43 // loop_footer_branch
                %194 = sbr.rel target = $region46
              $region51: #{simple_block2d_forward.19} parent=43 // loop_exit
                _
            $region44: #{simple_block2d_forward.19} parent=39 // pred_fallthru
              _
            // Predicated region
            $region52: #{simple_block2d_forward.19} parent=39 // pred_check
              _
            $region53: #{simple_block2d_forward.19} parent=39 // pred_check_branch
              %211 = sbr.rel target = $region55
            $region54: #{simple_block2d_forward.19} parent=39 // pred_region
              _
            $region55: #{simple_block2d_forward.19} parent=39 // pred_fallthru
              _
          $region40: #{simple_block2d_forward.19} parent=35 // pred_fallthru
            _
          %212 = vnop
        $region36: #{simple_block2d_forward.19} parent=31 // pred_fallthru
          _
      $region32: #{simple_block2d_forward.19} parent=5 // pred_fallthru
        _
      %p213 = scmp.le.s32.totalorder 1, %s13
      %p214 = scmp.lt.s32.totalorder %s13, 5
      %p215 = pnand %p213, %p214
      %p216 = pneg %p215
      // Predicated region
      $region56: #{simple_block2d_forward.19} parent=5 // pred_check
        _
      $region57: #{simple_block2d_forward.19} parent=5 // pred_check_branch
        %218 = sbr.rel (%p215) target = $region59
      $region58: #{simple_block2d_forward.19} parent=5 // pred_region
        %s219 = ssub.s32 %s13, 1
        %s220 = sand.u32 %s26, 1
        %s221 = sand.u32 %s26, 1
        %s222 = smul.addr %s221, 32
        %s223 = scalar_lea.vmem [#allocation3], %s222
        // Predicated region
        $region60: #{simple_block2d_forward.19} parent=58 // pred_check
          %p224 = pneg %p39
        $region61: #{simple_block2d_forward.19} parent=58 // pred_check_branch
          %226 = sbr.rel (%p224) target = $region63
        $region62: #{simple_block2d_forward.19} parent=58 // pred_region
          _
        $region63: #{simple_block2d_forward.19} parent=58 // pred_fallthru
          _
        %s227 = sand.u32 %s26, 1
        %s228 = sand.u32 %s26, 1
        %s229 = smul.addr %s228, 32
        %s230 = scalar_lea.vmem [#allocation3], %s229
        %p231 = pneg %p39
        %p232 = pneg %p36
        %p233 = pneg %p60
        %p234 = pneg %p57
        %p235 = pneg %p81
        %p236 = pneg %p78
        %p237 = pneg %p102
        %p238 = pneg %p99
        %p239 = pneg %p123
        %p240 = pneg %p120
        %p241 = pneg %p149
        %p242 = pneg %p146
        %s243 = smul.u32 2, %s18
        %p244 = scmp.lt.s32.totalorder %s243, 7
        %s245 = scalar_select %p244, %s243, 7
        %s246 = scalar_lea.vmem %s5, %s245
        %s247 = smul.u32 2, %s18
        %s248 = smul.u32 2, %s18
        %p249 = scmp.lt.s32.totalorder %s248, 7
        %s250 = scalar_select %p249, %s248, 7
        %s251 = scalar_lea.vmem %s5, %s250
        %s252 = smul.u32 2, %s18
        %v253 = vld [vmem:[%s1] sm:$0xff]
        %v254 = vld [vmem:[%s1 + $0x8] sm:$0xff]
        %v255 = vld [vmem:[%s1 + $0x10] sm:$0xff]
        %v256 = vld [vmem:[%s1 + $0x18] sm:$0xff]
        %v257 = vld [vmem:[%s1 + $0x20] sm:$0xff]
        %v258 = vld [vmem:[%s1 + $0x28] sm:$0xff]
        %v259 = vld [vmem:[%s1 + $0x30] sm:$0xff]
        %v260 = vld [vmem:[%s1 + $0x38] sm:$0xff]
        %v261 = vld [vmem:[%s1 + $0x40] sm:$0xff]
        %v262 = vld [vmem:[%s1 + $0x48] sm:$0xff]
        %v263 = vld [vmem:[%s1 + $0x50] sm:$0xff]
        %v264 = vld [vmem:[%s1 + $0x58] sm:$0xff]
        %v265 = vld [vmem:[%s1 + $0x60] sm:$0xff]
        %v266 = vld [vmem:[%s1 + $0x68] sm:$0xff]
        %v267 = vld [vmem:[%s1 + $0x70] sm:$0xff]
        %v268 = vld [vmem:[%s1 + $0x78] sm:$0xff]
        %v269 = vld [vmem:[%s223] sm:$0xff]
        %v270 = vld [vmem:[%s223 + $0x8] sm:$0xff]
        %v271 = vld [vmem:[%s223 + $0x10] sm:$0xff]
        %v272 = vld [vmem:[%s223 + $0x18] sm:$0xff]
        %v273 = vld [vmem:[%s2] sm:$0xff]
        %v274 = vld [vmem:[%s2 + $0x8] sm:$0xff]
        %v275 = vld [vmem:[%s2 + $0x10] sm:$0xff]
        %v276 = vld [vmem:[%s2 + $0x18] sm:$0xff]
        %v277 = vld [vmem:[%s2 + $0x20] sm:$0xff]
        %v278 = vld [vmem:[%s2 + $0x28] sm:$0xff]
        %v279 = vld [vmem:[%s2 + $0x30] sm:$0xff]
        %v280 = vld [vmem:[%s2 + $0x38] sm:$0xff]
        %v281 = vld [vmem:[%s2 + $0x40] sm:$0xff]
        %v282 = vld [vmem:[%s2 + $0x48] sm:$0xff]
        %v283 = vld [vmem:[%s2 + $0x50] sm:$0xff]
        %v284 = vld [vmem:[%s2 + $0x58] sm:$0xff]
        %v285 = vld [vmem:[%s2 + $0x60] sm:$0xff]
        %v286 = vld [vmem:[%s2 + $0x68] sm:$0xff]
        %v287 = vld [vmem:[%s2 + $0x70] sm:$0xff]
        %v288 = vld [vmem:[%s2 + $0x78] sm:$0xff]
        %290 = vset.pattern.permute.xlu0 0
        %291 = vperm.xlu0 %290, %v273
        %v292 = vpop.permute.xlu0 %291
        %295 = vset.pattern.permute.xlu0 0
        %296 = vperm.xlu0 %295, %v274
        %v297 = vpop.permute.xlu0 %296
        %300 = vset.pattern.permute.xlu0 0
        %301 = vperm.xlu0 %300, %v275
        %v302 = vpop.permute.xlu0 %301
        %305 = vset.pattern.permute.xlu0 0
        %306 = vperm.xlu0 %305, %v276
        %v307 = vpop.permute.xlu0 %306
        %310 = vset.pattern.permute.xlu0 0
        %311 = vperm.xlu0 %310, %v277
        %v312 = vpop.permute.xlu0 %311
        %315 = vset.pattern.permute.xlu0 0
        %316 = vperm.xlu0 %315, %v278
        %v317 = vpop.permute.xlu0 %316
        %320 = vset.pattern.permute.xlu0 0
        %321 = vperm.xlu0 %320, %v279
        %v322 = vpop.permute.xlu0 %321
        %325 = vset.pattern.permute.xlu0 0
        %326 = vperm.xlu0 %325, %v280
        %v327 = vpop.permute.xlu0 %326
        %330 = vset.pattern.permute.xlu0 0
        %331 = vperm.xlu0 %330, %v281
        %v332 = vpop.permute.xlu0 %331
        %335 = vset.pattern.permute.xlu0 0
        %336 = vperm.xlu0 %335, %v282
        %v337 = vpop.permute.xlu0 %336
        %340 = vset.pattern.permute.xlu0 0
        %341 = vperm.xlu0 %340, %v283
        %v342 = vpop.permute.xlu0 %341
        %345 = vset.pattern.permute.xlu0 0
        %346 = vperm.xlu0 %345, %v284
        %v347 = vpop.permute.xlu0 %346
        %350 = vset.pattern.permute.xlu0 0
        %351 = vperm.xlu0 %350, %v285
        %v352 = vpop.permute.xlu0 %351
        %355 = vset.pattern.permute.xlu0 0
        %356 = vperm.xlu0 %355, %v286
        %v357 = vpop.permute.xlu0 %356
        %360 = vset.pattern.permute.xlu0 0
        %361 = vperm.xlu0 %360, %v287
        %v362 = vpop.permute.xlu0 %361
        %365 = vset.pattern.permute.xlu0 0
        %366 = vperm.xlu0 %365, %v288
        %v367 = vpop.permute.xlu0 %366
        %vm369 = vcmask 130048
        %v371 = vsel %vm369, %v253, 0
        %v374 = vsel %vm369, %v254, 0
        %v377 = vsel %vm369, %v255, 0
        %v380 = vsel %vm369, %v256, 0
        %v383 = vsel %vm369, %v257, 0
        %v386 = vsel %vm369, %v258, 0
        %v389 = vsel %vm369, %v259, 0
        %v392 = vsel %vm369, %v260, 0
        %v395 = vsel %vm369, %v261, 0
        %v398 = vsel %vm369, %v262, 0
        %v401 = vsel %vm369, %v263, 0
        %v404 = vsel %vm369, %v264, 0
        %v407 = vsel %vm369, %v265, 0
        %v410 = vsel %vm369, %v266, 0
        %v413 = vsel %vm369, %v267, 0
        %v416 = vsel %vm369, %v268, 0
        %418 = vmatprep.subr.mxu0 %v270
        %419 = vmatpush1.msra.mxu0 %v269
        %420 = vmatprep.subr.mxu0 %v272
        %421 = vmatpush1.msra.mxu0 %v271
        %422 = vmatprep.subr.mxu0 0.0
        %423 = vmatpush1.msra.mxu0 0.0
        %424 = vmatprep.subr.mxu0 0.0
        %425 = vmatpush1.msra.mxu0 0.0
        %426 = vmatprep.subr.mxu0 0.0
        %427 = vmatpush1.msra.mxu0 0.0
        %428 = vmatprep.subr.mxu0 0.0
        %429 = vmatpush1.msra.mxu0 0.0
        %430 = vmatprep.subr.mxu0 0.0
        %431 = vmatpush1.msra.mxu0 0.0
        %432 = vmatprep.subr.mxu0 0.0
        %433 = vmatpush1.msra.mxu0 0.0
        %434 = vmatprep.subr.mxu0 0.0
        %435 = vmatpush1.msra.mxu0 0.0
        %436 = vmatprep.subr.mxu0 0.0
        %437 = vmatpush1.msra.mxu0 0.0
        %438 = vmatprep.subr.mxu0 0.0
        %439 = vmatpush1.msra.mxu0 0.0
        %440 = vmatprep.subr.mxu0 0.0
        %441 = vmatpush1.msra.mxu0 0.0
        %442 = vmatprep.subr.mxu0 0.0
        %443 = vmatpush1.msra.mxu0 0.0
        %444 = vmatprep.subr.mxu0 0.0
        %445 = vmatpush1.msra.mxu0 0.0
        %446 = vmatprep.subr.mxu0 0.0
        %447 = vmatpush1.msra.mxu0 0.0
        %448 = vmatprep.subr.mxu0 0.0
        %449 = vmatpush1.msra.mxu0 0.0
        %450 = vmatprep.subr.mxu0 0.0
        %451 = vmatpush1.msra.mxu0 0.0
        %452 = vmatprep.subr.mxu0 0.0
        %453 = vmatpush1.msra.mxu0 0.0
        %454 = vmatprep.subr.mxu0 0.0
        %455 = vmatpush1.msra.mxu0 0.0
        %456 = vmatprep.subr.mxu0 0.0
        %457 = vmatpush1.msra.mxu0 0.0
        %458 = vmatprep.subr.mxu0 0.0
        %459 = vmatpush1.msra.mxu0 0.0
        %460 = vmatprep.subr.mxu0 0.0
        %461 = vmatpush1.msra.mxu0 0.0
        %462 = vmatprep.subr.mxu0 0.0
        %463 = vmatpush1.msra.mxu0 0.0
        %464 = vmatprep.subr.mxu0 0.0
        %465 = vmatpush1.msra.mxu0 0.0
        %466 = vmatprep.subr.mxu0 0.0
        %467 = vmatpush1.msra.mxu0 0.0
        %468 = vmatprep.subr.mxu0 0.0
        %469 = vmatpush1.msra.mxu0 0.0
        %470 = vmatprep.subr.mxu0 0.0
        %471 = vmatpush1.msra.mxu0 0.0
        %472 = vmatprep.subr.mxu0 0.0
        %473 = vmatpush1.msra.mxu0 0.0
        %474 = vmatprep.subr.mxu0 0.0
        %475 = vmatpush1.msra.mxu0 0.0
        %476 = vmatprep.subr.mxu0 0.0
        %477 = vmatpush1.msra.mxu0 0.0
        %478 = vmatprep.subr.mxu0 0.0
        %479 = vmatpush1.msra.mxu0 0.0
        %480 = vmatprep.subr.mxu0 0.0
        %481 = vmatpush1.msra.mxu0 0.0
        %482 = vmatprep.mubr.f32.mxu0 0.0
        %483 = vmatmul.mubr.f32.gmra.mrb[0].mxu0 %v371
        %v484 = vpop.f32.mrb[0].mxu0
        %v485 = vadd.f32 %v292, %v484
        %v486 = vpop.f32.mrb[0].mxu0
        %v487 = vadd.f32 %v292, %v486
        %488 = vmatprep.mubr.f32.mxu0 0.0
        %489 = vmatmul.mubr.f32.gmra.mrb[0].mxu0 %v374
        %v490 = vpop.f32.mrb[0].mxu0
        %v491 = vadd.f32 %v297, %v490
        %v492 = vpop.f32.mrb[0].mxu0
        %v493 = vadd.f32 %v297, %v492
        %494 = vmatprep.mubr.f32.mxu0 0.0
        %495 = vmatmul.mubr.f32.gmra.mrb[0].mxu0 %v377
        %v496 = vpop.f32.mrb[0].mxu0
        %v497 = vadd.f32 %v302, %v496
        %v498 = vpop.f32.mrb[0].mxu0
        %v499 = vadd.f32 %v302, %v498
        %500 = vmatprep.mubr.f32.mxu0 0.0
        %501 = vmatmul.mubr.f32.gmra.mrb[0].mxu0 %v380
        %v502 = vpop.f32.mrb[0].mxu0
        %v503 = vadd.f32 %v307, %v502
        %v504 = vpop.f32.mrb[0].mxu0
        %v505 = vadd.f32 %v307, %v504
        %506 = vmatprep.mubr.f32.mxu0 0.0
        %507 = vmatmul.mubr.f32.gmra.mrb[0].mxu0 %v383
        %v508 = vpop.f32.mrb[0].mxu0
        %v509 = vadd.f32 %v312, %v508
        %v510 = vpop.f32.mrb[0].mxu0
        %v511 = vadd.f32 %v312, %v510
        %512 = vmatprep.mubr.f32.mxu0 0.0
        %513 = vmatmul.mubr.f32.gmra.mrb[0].mxu0 %v386
        %v514 = vpop.f32.mrb[0].mxu0
        %v515 = vadd.f32 %v317, %v514
        %v516 = vpop.f32.mrb[0].mxu0
        %v517 = vadd.f32 %v317, %v516
        %518 = vmatprep.mubr.f32.mxu0 0.0
        %519 = vmatmul.mubr.f32.gmra.mrb[0].mxu0 %v389
        %v520 = vpop.f32.mrb[0].mxu0
        %v521 = vadd.f32 %v322, %v520
        %v522 = vpop.f32.mrb[0].mxu0
        %v523 = vadd.f32 %v322, %v522
        %524 = vmatprep.mubr.f32.mxu0 0.0
        %525 = vmatmul.mubr.f32.gmra.mrb[0].mxu0 %v392
        %v526 = vpop.f32.mrb[0].mxu0
        %v527 = vadd.f32 %v327, %v526
        %v528 = vpop.f32.mrb[0].mxu0
        %v529 = vadd.f32 %v327, %v528
        %530 = vmatprep.mubr.f32.mxu0 0.0
        %531 = vmatmul.mubr.f32.gmra.mrb[0].mxu0 %v395
        %v532 = vpop.f32.mrb[0].mxu0
        %v533 = vadd.f32 %v332, %v532
        %v534 = vpop.f32.mrb[0].mxu0
        %v535 = vadd.f32 %v332, %v534
        %536 = vmatprep.mubr.f32.mxu0 0.0
        %537 = vmatmul.mubr.f32.gmra.mrb[0].mxu0 %v398
        %v538 = vpop.f32.mrb[0].mxu0
        %v539 = vadd.f32 %v337, %v538
        %v540 = vpop.f32.mrb[0].mxu0
        %v541 = vadd.f32 %v337, %v540
        %542 = vmatprep.mubr.f32.mxu0 0.0
        %543 = vmatmul.mubr.f32.gmra.mrb[0].mxu0 %v401
        %v544 = vpop.f32.mrb[0].mxu0
        %v545 = vadd.f32 %v342, %v544
        %v546 = vpop.f32.mrb[0].mxu0
        %v547 = vadd.f32 %v342, %v546
        %548 = vmatprep.mubr.f32.mxu0 0.0
        %549 = vmatmul.mubr.f32.gmra.mrb[0].mxu0 %v404
        %v550 = vpop.f32.mrb[0].mxu0
        %v551 = vadd.f32 %v347, %v550
        %v552 = vpop.f32.mrb[0].mxu0
        %v553 = vadd.f32 %v347, %v552
        %554 = vmatprep.mubr.f32.mxu0 0.0
        %555 = vmatmul.mubr.f32.gmra.mrb[0].mxu0 %v407
        %v556 = vpop.f32.mrb[0].mxu0
        %v557 = vadd.f32 %v352, %v556
        %v558 = vpop.f32.mrb[0].mxu0
        %v559 = vadd.f32 %v352, %v558
        %560 = vmatprep.mubr.f32.mxu0 0.0
        %561 = vmatmul.mubr.f32.gmra.mrb[0].mxu0 %v410
        %v562 = vpop.f32.mrb[0].mxu0
        %v563 = vadd.f32 %v357, %v562
        %v564 = vpop.f32.mrb[0].mxu0
        %v565 = vadd.f32 %v357, %v564
        %566 = vmatprep.mubr.f32.mxu0 0.0
        %567 = vmatmul.mubr.f32.gmra.mrb[0].mxu0 %v413
        %v568 = vpop.f32.mrb[0].mxu0
        %v569 = vadd.f32 %v362, %v568
        %v570 = vpop.f32.mrb[0].mxu0
        %v571 = vadd.f32 %v362, %v570
        %572 = vmatprep.mubr.f32.mxu0 0.0
        %573 = vmatmul.mubr.f32.gmra.mrb[0].mxu0 %v416
        %v574 = vpop.f32.mrb[0].mxu0
        %v575 = vadd.f32 %v367, %v574
        %v576 = vpop.f32.mrb[0].mxu0
        %v577 = vadd.f32 %v367, %v576
        %578 = vdwg.mxu0
        %v579 = vmax.f32 %v485, 0.0
        %v580 = vmax.f32 %v487, 0.0
        %v581 = vmax.f32 %v491, 0.0
        %v582 = vmax.f32 %v493, 0.0
        %v583 = vmax.f32 %v497, 0.0
        %v584 = vmax.f32 %v499, 0.0
        %v585 = vmax.f32 %v503, 0.0
        %v586 = vmax.f32 %v505, 0.0
        %v587 = vmax.f32 %v509, 0.0
        %v588 = vmax.f32 %v511, 0.0
        %v589 = vmax.f32 %v515, 0.0
        %v590 = vmax.f32 %v517, 0.0
        %v591 = vmax.f32 %v521, 0.0
        %v592 = vmax.f32 %v523, 0.0
        %v593 = vmax.f32 %v527, 0.0
        %v594 = vmax.f32 %v529, 0.0
        %v595 = vmax.f32 %v533, 0.0
        %v596 = vmax.f32 %v535, 0.0
        %v597 = vmax.f32 %v539, 0.0
        %v598 = vmax.f32 %v541, 0.0
        %v599 = vmax.f32 %v545, 0.0
        %v600 = vmax.f32 %v547, 0.0
        %v601 = vmax.f32 %v551, 0.0
        %v602 = vmax.f32 %v553, 0.0
        %v603 = vmax.f32 %v557, 0.0
        %v604 = vmax.f32 %v559, 0.0
        %v605 = vmax.f32 %v563, 0.0
        %v606 = vmax.f32 %v565, 0.0
        %v607 = vmax.f32 %v569, 0.0
        %v608 = vmax.f32 %v571, 0.0
        %v609 = vmax.f32 %v575, 0.0
        %v610 = vmax.f32 %v577, 0.0
        %v611 = vld [vmem:[%s3] sm:$0x1]
        %v612 = vld [vmem:[#allocation2] sm:$0x1]
        %614 = vset.pattern.permute.xlu0 0
        %615 = vperm.xlu0 %614, %v612
        %v616 = vpop.permute.xlu0 %615
        %v618 = vlaneseq
        %v619 = vshrl.u32 %v618, 7
        %v620 = vsub.s32 0, %v619
        %v621 = vrot.slane %v616, %v620
        %622 = vmatprep.subr.mxu0 %v580
        %623 = vmatpush1.msra.mxu0 %v579
        %624 = vmatprep.subr.mxu0 %v582
        %625 = vmatpush1.msra.mxu0 %v581
        %626 = vmatprep.subr.mxu0 %v584
        %627 = vmatpush1.msra.mxu0 %v583
        %628 = vmatprep.subr.mxu0 %v586
        %629 = vmatpush1.msra.mxu0 %v585
        %630 = vmatprep.subr.mxu0 %v588
        %631 = vmatpush1.msra.mxu0 %v587
        %632 = vmatprep.subr.mxu0 %v590
        %633 = vmatpush1.msra.mxu0 %v589
        %634 = vmatprep.subr.mxu0 %v592
        %635 = vmatpush1.msra.mxu0 %v591
        %636 = vmatprep.subr.mxu0 %v594
        %637 = vmatpush1.msra.mxu0 %v593
        %638 = vmatprep.subr.mxu0 %v596
        %639 = vmatpush1.msra.mxu0 %v595
        %640 = vmatprep.subr.mxu0 %v598
        %641 = vmatpush1.msra.mxu0 %v597
        %642 = vmatprep.subr.mxu0 %v600
        %643 = vmatpush1.msra.mxu0 %v599
        %644 = vmatprep.subr.mxu0 %v602
        %645 = vmatpush1.msra.mxu0 %v601
        %646 = vmatprep.subr.mxu0 %v604
        %647 = vmatpush1.msra.mxu0 %v603
        %648 = vmatprep.subr.mxu0 %v606
        %649 = vmatpush1.msra.mxu0 %v605
        %650 = vmatprep.subr.mxu0 %v608
        %651 = vmatpush1.msra.mxu0 %v607
        %652 = vmatprep.subr.mxu0 %v610
        %653 = vmatpush1.msra.mxu0 %v609
        %654 = vmatprep.subr.mxu0 0.0
        %655 = vmatpush1.msra.mxu0 0.0
        %656 = vmatprep.subr.mxu0 0.0
        %657 = vmatpush1.msra.mxu0 0.0
        %658 = vmatprep.subr.mxu0 0.0
        %659 = vmatpush1.msra.mxu0 0.0
        %660 = vmatprep.subr.mxu0 0.0
        %661 = vmatpush1.msra.mxu0 0.0
        %662 = vmatprep.subr.mxu0 0.0
        %663 = vmatpush1.msra.mxu0 0.0
        %664 = vmatprep.subr.mxu0 0.0
        %665 = vmatpush1.msra.mxu0 0.0
        %666 = vmatprep.subr.mxu0 0.0
        %667 = vmatpush1.msra.mxu0 0.0
        %668 = vmatprep.subr.mxu0 0.0
        %669 = vmatpush1.msra.mxu0 0.0
        %670 = vmatprep.subr.mxu0 0.0
        %671 = vmatpush1.msra.mxu0 0.0
        %672 = vmatprep.subr.mxu0 0.0
        %673 = vmatpush1.msra.mxu0 0.0
        %674 = vmatprep.subr.mxu0 0.0
        %675 = vmatpush1.msra.mxu0 0.0
        %676 = vmatprep.subr.mxu0 0.0
        %677 = vmatpush1.msra.mxu0 0.0
        %678 = vmatprep.subr.mxu0 0.0
        %679 = vmatpush1.msra.mxu0 0.0
        %680 = vmatprep.subr.mxu0 0.0
        %681 = vmatpush1.msra.mxu0 0.0
        %682 = vmatprep.subr.mxu0 0.0
        %683 = vmatpush1.msra.mxu0 0.0
        %684 = vmatprep.subr.mxu0 0.0
        %685 = vmatpush1.msra.mxu0 0.0
        %686 = vmatprep.mubr.f32.mxu0 0.0
        %687 = vmatmul.mubr.f32.gmra.mrb[0].mxu0 %v611
        %v688 = vpop.f32.mrb[0].mxu0
        %v689 = vadd.f32 %v621, %v688
        %v690 = vpop.f32.mrb[0].mxu0
        %v691 = vadd.f32 %v621, %v690
        %692 = vdwg.mxu0
        %v695 = vcombine.low %v689, %v691
        %v697 = vunpack.c.l.s4 1966171168
        %v698 = vunpack.c.0.s8 %v697
        %v699 = vlaneseq
        %v700 = vshrl.u32 %v699, 7
        %v701 = vsub.s32 %v698, %v700
        %v702 = vrot.slane %v695, %v701
        %v704 = vunpack.c.l.s4 1966171168
        %v705 = vunpack.c.0.s8 %v704
        %v706 = vlaneseq
        %v707 = vshrl.u32 %v706, 7
        %v708 = vsub.s32 %v705, %v707
        %v709 = vrot.slane %v702, %v708
        %v711 = vlaneseq
        %vm712 = vcmp.ge.s32.totalorder %v711, 0
        %vm713 = vcmp.lt.s32.totalorder %v711, 256
        %vm714 = vmand %vm712, %vm713
        %715 = vst.msk [vmem:[%s251] sm:$0x3] %vm714, %v709
        %s716 = smul.u32 2, %s18
        %p717 = scmp.lt.s32.totalorder %s716, 7
        %s718 = scalar_select %p717, %s716, 7
        %s719 = scalar_lea.vmem %s5, %s718
        // Predicated region
        $region64: #{simple_block2d_forward.19} parent=58 // pred_check
          %p720 = pneg %p146
        $region65: #{simple_block2d_forward.19} parent=58 // pred_check_branch
          %722 = sbr.rel (%p720) target = $region67
        $region66: #{simple_block2d_forward.19} parent=58 // pred_region
          %s723 = smul.u32 2, %s18
        $region67: #{simple_block2d_forward.19} parent=58 // pred_fallthru
          _
      $region59: #{simple_block2d_forward.19} parent=5 // pred_fallthru
        _
      %p724 = scmp.le.s32.totalorder 2, %s13
      // Predicated region
      $region68: #{simple_block2d_forward.19} parent=5 // pred_check
        %p725 = pneg %p724
      $region69: #{simple_block2d_forward.19} parent=5 // pred_check_branch
        %727 = sbr.rel (%p725) target = $region71
      $region70: #{simple_block2d_forward.19} parent=5 // pred_region
        %s728 = ssub.s32 %s13, 2
        // Predicated region
        $region72: #{simple_block2d_forward.19} parent=70 // pred_check
          %p729 = pneg %p152
        $region73: #{simple_block2d_forward.19} parent=70 // pred_check_branch
          %731 = sbr.rel (%p729) target = $region75
        $region74: #{simple_block2d_forward.19} parent=70 // pred_region
          %s732 = smul.u32 2, %s19
          %p733 = scmp.lt.s32.totalorder %s732, 7
          %s734 = scalar_select %p733, %s732, 7
          %s735 = scalar_lea.vmem %s5, %s734
        $region75: #{simple_block2d_forward.19} parent=70 // pred_fallthru
          _
      $region71: #{simple_block2d_forward.19} parent=5 // pred_fallthru
        _
    $region6: #{simple_block2d_forward.19} parent=1 // loop_footer
      %s17 = sadd.s32 1, %s13
    $region7: #{simple_block2d_forward.19} parent=1 // loop_footer_branch
      %12 = sbr.rel target = $region3
    $region8: #{simple_block2d_forward.19} parent=1 // loop_exit
      _

// kernel: squeeze.49
$region0: #{squeeze.49}
  %s0 = inlined_call_operand.vmem [shape: f32[1024], index: 0, kind: input, shape index: {}]
  %s1 = inlined_call_operand.hbm [shape: f32[2,8,8,8,1], index: 1, kind: output, shape index: {}]
  $region1: #{squeeze.49} parent=0
    #allocation0 [shape = 'u8[65536]{0}', space=vmem, size = 0x10000, scoped, tag = 'operand span for operand 1']
    #allocation1 [shape = 's32[1]{0}', space=sflag, size = 0x4, scoped, tag = 'scoped memory for squeeze.49']
    %2 = vsyncpa [#allocation1], 0
    %v3 = vld [vmem:[%s0] sm:$0xff]
    %vm4 = vcmask 64512
    %5 = vst.msk [vmem:[#allocation0] ss:$16 sm:$0x3] %vm4, %v3
    %6 = vst.msk [vmem:[#allocation0] ss:$16 sm:$0xc] %vm4, %v3
    %7 = vst.msk [vmem:[#allocation0] ss:$16 sm:$0x30] %vm4, %v3
    %8 = vst.msk [vmem:[#allocation0] ss:$16 sm:$0xc0] %vm4, %v3
    %v9 = vld [vmem:[%s0] sm:$0xff]
    %10 = vrot.lane.b32.xlu0 %v9, 120
    %v11 = vpop.permute.xlu0 %10
    %vm12 = vcmask 64512
    %s13 = scalar_lea.vmem [#allocation0], 1
    %14 = vst.msk [vmem:[%s13] ss:$16 sm:$0x3] %vm12, %v11
    %s15 = scalar_lea.vmem [#allocation0], 1
    %16 = vst.msk [vmem:[%s15] ss:$16 sm:$0xc] %vm12, %v11
    %s17 = scalar_lea.vmem [#allocation0], 1
    %18 = vst.msk [vmem:[%s17] ss:$16 sm:$0x30] %vm12, %v11
    %s19 = scalar_lea.vmem [#allocation0], 1
    %20 = vst.msk [vmem:[%s19] ss:$16 sm:$0xc0] %vm12, %v11
    %v21 = vld [vmem:[%s0] sm:$0xff]
    %22 = vrot.lane.b32.xlu0 %v21, 112
    %v23 = vpop.permute.xlu0 %22
    %vm24 = vcmask 64512
    %s25 = scalar_lea.vmem [#allocation0], 2
    %26 = vst.msk [vmem:[%s25] ss:$16 sm:$0x3] %vm24, %v23
    %s27 = scalar_lea.vmem [#allocation0], 2
    %28 = vst.msk [vmem:[%s27] ss:$16 sm:$0xc] %vm24, %v23
    %s29 = scalar_lea.vmem [#allocation0], 2
    %30 = vst.msk [vmem:[%s29] ss:$16 sm:$0x30] %vm24, %v23
    %s31 = scalar_lea.vmem [#allocation0], 2
    %32 = vst.msk [vmem:[%s31] ss:$16 sm:$0xc0] %vm24, %v23
    %v33 = vld [vmem:[%s0] sm:$0xff]
    %34 = vrot.lane.b32.xlu0 %v33, 104
    %v35 = vpop.permute.xlu0 %34
    %vm36 = vcmask 64512
    %s37 = scalar_lea.vmem [#allocation0], 3
    %38 = vst.msk [vmem:[%s37] ss:$16 sm:$0x3] %vm36, %v35
    %s39 = scalar_lea.vmem [#allocation0], 3
    %40 = vst.msk [vmem:[%s39] ss:$16 sm:$0xc] %vm36, %v35
    %s41 = scalar_lea.vmem [#allocation0], 3
    %42 = vst.msk [vmem:[%s41] ss:$16 sm:$0x30] %vm36, %v35
    %s43 = scalar_lea.vmem [#allocation0], 3
    %44 = vst.msk [vmem:[%s43] ss:$16 sm:$0xc0] %vm36, %v35
    %v45 = vld [vmem:[%s0] sm:$0xff]
    %46 = vrot.lane.b32.xlu0 %v45, 96
    %v47 = vpop.permute.xlu0 %46
    %vm48 = vcmask 64512
    %s49 = scalar_lea.vmem [#allocation0], 4
    %50 = vst.msk [vmem:[%s49] ss:$16 sm:$0x3] %vm48, %v47
    %s51 = scalar_lea.vmem [#allocation0], 4
    %52 = vst.msk [vmem:[%s51] ss:$16 sm:$0xc] %vm48, %v47
    %s53 = scalar_lea.vmem [#allocation0], 4
    %54 = vst.msk [vmem:[%s53] ss:$16 sm:$0x30] %vm48, %v47
    %s55 = scalar_lea.vmem [#allocation0], 4
    %56 = vst.msk [vmem:[%s55] ss:$16 sm:$0xc0] %vm48, %v47
    %v57 = vld [vmem:[%s0] sm:$0xff]
    %58 = vrot.lane.b32.xlu0 %v57, 88
    %v59 = vpop.permute.xlu0 %58
    %vm60 = vcmask 64512
    %s61 = scalar_lea.vmem [#allocation0], 5
    %62 = vst.msk [vmem:[%s61] ss:$16 sm:$0x3] %vm60, %v59
    %s63 = scalar_lea.vmem [#allocation0], 5
    %64 = vst.msk [vmem:[%s63] ss:$16 sm:$0xc] %vm60, %v59
    %s65 = scalar_lea.vmem [#allocation0], 5
    %66 = vst.msk [vmem:[%s65] ss:$16 sm:$0x30] %vm60, %v59
    %s67 = scalar_lea.vmem [#allocation0], 5
    %68 = vst.msk [vmem:[%s67] ss:$16 sm:$0xc0] %vm60, %v59
    %v69 = vld [vmem:[%s0] sm:$0xff]
    %70 = vrot.lane.b32.xlu0 %v69, 80
    %v71 = vpop.permute.xlu0 %70
    %vm72 = vcmask 64512
    %s73 = scalar_lea.vmem [#allocation0], 6
    %74 = vst.msk [vmem:[%s73] ss:$16 sm:$0x3] %vm72, %v71
    %s75 = scalar_lea.vmem [#allocation0], 6
    %76 = vst.msk [vmem:[%s75] ss:$16 sm:$0xc] %vm72, %v71
    %s77 = scalar_lea.vmem [#allocation0], 6
    %78 = vst.msk [vmem:[%s77] ss:$16 sm:$0x30] %vm72, %v71
    %s79 = scalar_lea.vmem [#allocation0], 6
    %80 = vst.msk [vmem:[%s79] ss:$16 sm:$0xc0] %vm72, %v71
    %v81 = vld [vmem:[%s0] sm:$0xff]
    %82 = vrot.lane.b32.xlu0 %v81, 72
    %v83 = vpop.permute.xlu0 %82
    %vm84 = vcmask 64512
    %s85 = scalar_lea.vmem [#allocation0], 7
    %86 = vst.msk [vmem:[%s85] ss:$16 sm:$0x3] %vm84, %v83
    %s87 = scalar_lea.vmem [#allocation0], 7
    %88 = vst.msk [vmem:[%s87] ss:$16 sm:$0xc] %vm84, %v83
    %s89 = scalar_lea.vmem [#allocation0], 7
    %90 = vst.msk [vmem:[%s89] ss:$16 sm:$0x30] %vm84, %v83
    %s91 = scalar_lea.vmem [#allocation0], 7
    %92 = vst.msk [vmem:[%s91] ss:$16 sm:$0xc0] %vm84, %v83
    %v93 = vld [vmem:[%s0] sm:$0xff]
    %94 = vrot.lane.b32.xlu0 %v93, 64
    %v95 = vpop.permute.xlu0 %94
    %vm96 = vcmask 64512
    %s97 = scalar_lea.vmem [#allocation0], 8
    %98 = vst.msk [vmem:[%s97] ss:$16 sm:$0x3] %vm96, %v95
    %s99 = scalar_lea.vmem [#allocation0], 8
    %100 = vst.msk [vmem:[%s99] ss:$16 sm:$0xc] %vm96, %v95
    %s101 = scalar_lea.vmem [#allocation0], 8
    %102 = vst.msk [vmem:[%s101] ss:$16 sm:$0x30] %vm96, %v95
    %s103 = scalar_lea.vmem [#allocation0], 8
    %104 = vst.msk [vmem:[%s103] ss:$16 sm:$0xc0] %vm96, %v95
    %v105 = vld [vmem:[%s0] sm:$0xff]
    %106 = vrot.lane.b32.xlu0 %v105, 56
    %v107 = vpop.permute.xlu0 %106
    %vm108 = vcmask 64512
    %s109 = scalar_lea.vmem [#allocation0], 9
    %110 = vst.msk [vmem:[%s109] ss:$16 sm:$0x3] %vm108, %v107
    %s111 = scalar_lea.vmem [#allocation0], 9
    %112 = vst.msk [vmem:[%s111] ss:$16 sm:$0xc] %vm108, %v107
    %s113 = scalar_lea.vmem [#allocation0], 9
    %114 = vst.msk [vmem:[%s113] ss:$16 sm:$0x30] %vm108, %v107
    %s115 = scalar_lea.vmem [#allocation0], 9
    %116 = vst.msk [vmem:[%s115] ss:$16 sm:$0xc0] %vm108, %v107
    %v117 = vld [vmem:[%s0] sm:$0xff]
    %118 = vrot.lane.b32.xlu0 %v117, 48
    %v119 = vpop.permute.xlu0 %118
    %vm120 = vcmask 64512
    %s121 = scalar_lea.vmem [#allocation0], 10
    %122 = vst.msk [vmem:[%s121] ss:$16 sm:$0x3] %vm120, %v119
    %s123 = scalar_lea.vmem [#allocation0], 10
    %124 = vst.msk [vmem:[%s123] ss:$16 sm:$0xc] %vm120, %v119
    %s125 = scalar_lea.vmem [#allocation0], 10
    %126 = vst.msk [vmem:[%s125] ss:$16 sm:$0x30] %vm120, %v119
    %s127 = scalar_lea.vmem [#allocation0], 10
    %128 = vst.msk [vmem:[%s127] ss:$16 sm:$0xc0] %vm120, %v119
    %v129 = vld [vmem:[%s0] sm:$0xff]
    %130 = vrot.lane.b32.xlu0 %v129, 40
    %v131 = vpop.permute.xlu0 %130
    %vm132 = vcmask 64512
    %s133 = scalar_lea.vmem [#allocation0], 11
    %134 = vst.msk [vmem:[%s133] ss:$16 sm:$0x3] %vm132, %v131
    %s135 = scalar_lea.vmem [#allocation0], 11
    %136 = vst.msk [vmem:[%s135] ss:$16 sm:$0xc] %vm132, %v131
    %s137 = scalar_lea.vmem [#allocation0], 11
    %138 = vst.msk [vmem:[%s137] ss:$16 sm:$0x30] %vm132, %v131
    %s139 = scalar_lea.vmem [#allocation0], 11
    %140 = vst.msk [vmem:[%s139] ss:$16 sm:$0xc0] %vm132, %v131
    %v141 = vld [vmem:[%s0] sm:$0xff]
    %142 = vrot.lane.b32.xlu0 %v141, 32
    %v143 = vpop.permute.xlu0 %142
    %vm144 = vcmask 64512
    %s145 = scalar_lea.vmem [#allocation0], 12
    %146 = vst.msk [vmem:[%s145] ss:$16 sm:$0x3] %vm144, %v143
    %s147 = scalar_lea.vmem [#allocation0], 12
    %148 = vst.msk [vmem:[%s147] ss:$16 sm:$0xc] %vm144, %v143
    %s149 = scalar_lea.vmem [#allocation0], 12
    %150 = vst.msk [vmem:[%s149] ss:$16 sm:$0x30] %vm144, %v143
    %s151 = scalar_lea.vmem [#allocation0], 12
    %152 = vst.msk [vmem:[%s151] ss:$16 sm:$0xc0] %vm144, %v143
    %v153 = vld [vmem:[%s0] sm:$0xff]
    %154 = vrot.lane.b32.xlu0 %v153, 24
    %v155 = vpop.permute.xlu0 %154
    %vm156 = vcmask 64512
    %s157 = scalar_lea.vmem [#allocation0], 13
    %158 = vst.msk [vmem:[%s157] ss:$16 sm:$0x3] %vm156, %v155
    %s159 = scalar_lea.vmem [#allocation0], 13
    %160 = vst.msk [vmem:[%s159] ss:$16 sm:$0xc] %vm156, %v155
    %s161 = scalar_lea.vmem [#allocation0], 13
    %162 = vst.msk [vmem:[%s161] ss:$16 sm:$0x30] %vm156, %v155
    %s163 = scalar_lea.vmem [#allocation0], 13
    %164 = vst.msk [vmem:[%s163] ss:$16 sm:$0xc0] %vm156, %v155
    %v165 = vld [vmem:[%s0] sm:$0xff]
    %166 = vrot.lane.b32.xlu0 %v165, 16
    %v167 = vpop.permute.xlu0 %166
    %vm168 = vcmask 64512
    %s169 = scalar_lea.vmem [#allocation0], 14
    %170 = vst.msk [vmem:[%s169] ss:$16 sm:$0x3] %vm168, %v167
    %s171 = scalar_lea.vmem [#allocation0], 14
    %172 = vst.msk [vmem:[%s171] ss:$16 sm:$0xc] %vm168, %v167
    %s173 = scalar_lea.vmem [#allocation0], 14
    %174 = vst.msk [vmem:[%s173] ss:$16 sm:$0x30] %vm168, %v167
    %s175 = scalar_lea.vmem [#allocation0], 14
    %176 = vst.msk [vmem:[%s175] ss:$16 sm:$0xc0] %vm168, %v167
    %v177 = vld [vmem:[%s0] sm:$0xff]
    %178 = vrot.lane.b32.xlu0 %v177, 8
    %v179 = vpop.permute.xlu0 %178
    %vm180 = vcmask 64512
    %s181 = scalar_lea.vmem [#allocation0], 15
    %182 = vst.msk [vmem:[%s181] ss:$16 sm:$0x3] %vm180, %v179
    %s183 = scalar_lea.vmem [#allocation0], 15
    %184 = vst.msk [vmem:[%s183] ss:$16 sm:$0xc] %vm180, %v179
    %s185 = scalar_lea.vmem [#allocation0], 15
    %186 = vst.msk [vmem:[%s185] ss:$16 sm:$0x30] %vm180, %v179
    %s187 = scalar_lea.vmem [#allocation0], 15
    %188 = vst.msk [vmem:[%s187] ss:$16 sm:$0xc0] %vm180, %v179
    %s190 = ssub.s32 2048, 2048
    %191 = vsyncadd [#allocation1], %s190
    %s193 = sshll.u32 [#allocation0], 4
    %s194 = int_to_ptr.vmem [resolvable:$true] %s193
    %196 = dma.vmem_to_hbm [thread:$0]  %s194, 2048, %s1, [#allocation1]
    %197 = dma.done [#allocation1], 2048
    %198 = vsyncpa [#allocation1], 1

</llo_original>
